<compile_context>
chip_gen: v5e
topology: v5e:2x2
jax: 0.10.0
libtpu: 0.0.40
codegen_flags: <defaults>
</compile_context>

<pallas_src>
import functools

import jax
import jax.numpy as jnp
from jax import lax
from jax.experimental import pallas as pl
from jax.experimental.pallas import tpu as pltpu


def _birnn_kernel(T, B, H, num_layers, x_ref, *refs):
    """Fused multi-layer bidirectional LSTM.

    x_ref: (T*B, Din)        rows [t*B : (t+1)*B] hold timestep t
    per layer l (inputs):
      wih_cat_l: (Din_l, 8H)  [W_ih_fwd^T | W_ih_bwd^T]
      b_cat_l:   (1, 8H)      [b_ih_f + b_hh_f | b_ih_b + b_hh_b]
      whh_blk_l: (2H, 8H)     block_diag(W_hh_fwd^T, W_hh_bwd^T)
    out_ref: (T*B, 2H)        fwd hidden in cols [:H], bwd hidden (time-aligned) in [H:]
    scratch: gx_sc (T*B, 8H) input-projection buffer, then 0..2 ping-pong (T*B, 2H) buffers
    """
    H4 = 4 * H
    w_refs = refs[:3 * num_layers]
    out_ref = refs[3 * num_layers]
    gx_sc = refs[3 * num_layers + 1]
    bufs = refs[3 * num_layers + 2:]

    def run_layer(in_ref, wih_ref, b_ref, whh_ref, dst_ref):
        # Hoisted input projection: all timesteps, both directions, one matmul.
        gx_sc[...] = (
            jnp.dot(in_ref[...], wih_ref[...], preferred_element_type=jnp.float32)
            + b_ref[...]
        )

        def step(t, carry):
            h_cat, c_f, c_b = carry                        # (B,2H), (B,H), (B,H)
            # One MXU matmul per step for both directions (block-diagonal W_hh).
            gh = jnp.dot(h_cat, whh_ref[...], preferred_element_type=jnp.float32)  # (B,8H)
            gxf = gx_sc[pl.ds(t * B, B), :]                # forward reads timestep t
            gxb = gx_sc[pl.ds((T - 1 - t) * B, B), :]      # backward reads T-1-t
            gates_f = gh[:, :H4] + gxf[:, :H4]             # (B, 4H)
            gates_b = gh[:, H4:] + gxb[:, H4:]             # (B, 4H)

            # Full-vreg transcendentals, then lane slices (PyTorch gate order i,f,g,o).
            sf = jax.nn.sigmoid(gates_f)
            tf_ = jnp.tanh(gates_f)
            c_f_n = sf[:, H:2 * H] * c_f + sf[:, :H] * tf_[:, 2 * H:3 * H]
            h_f_n = sf[:, 3 * H:] * jnp.tanh(c_f_n)

            sb = jax.nn.sigmoid(gates_b)
            tb_ = jnp.tanh(gates_b)
            c_b_n = sb[:, H:2 * H] * c_b + sb[:, :H] * tb_[:, 2 * H:3 * H]
            h_b_n = sb[:, 3 * H:] * jnp.tanh(c_b_n)

            # Write both directions directly into the shared (T*B, 2H) slab (VMEM-resident).
            dst_ref[pl.ds(t * B, B), :H] = h_f_n.astype(dst_ref.dtype)
            dst_ref[pl.ds((T - 1 - t) * B, B), H:] = h_b_n.astype(dst_ref.dtype)

            return (jnp.concatenate([h_f_n, h_b_n], axis=-1), c_f_n, c_b_n)

        init = (jnp.zeros((B, 2 * H), jnp.float32),
                jnp.zeros((B, H), jnp.float32),
                jnp.zeros((B, H), jnp.float32))
        lax.fori_loop(0, T, step, init, unroll=True)

    cur = x_ref
    for l in range(num_layers):
        wih_ref, b_ref, whh_ref = w_refs[3 * l:3 * l + 3]
        dst = out_ref if l == num_layers - 1 else bufs[l % len(bufs)]
        run_layer(cur, wih_ref, b_ref, whh_ref, dst)
        cur = dst


def _prep_layer(pf, pb):
    """Pack one layer's fwd/bwd weights into the kernel's fused operands."""
    H = pf["w_hh"].shape[1]
    wih_cat = jnp.concatenate([pf["w_ih"].T, pb["w_ih"].T], axis=1)          # (Din, 8H)
    b_cat = jnp.concatenate([pf["b_ih"] + pf["b_hh"],
                             pb["b_ih"] + pb["b_hh"]]).reshape(1, 8 * H)     # (1, 8H)
    z = jnp.zeros((H, 4 * H), jnp.float32)
    whh_blk = jnp.concatenate(
        [jnp.concatenate([pf["w_hh"].T, z], axis=1),
         jnp.concatenate([z, pb["w_hh"].T], axis=1)], axis=0)                # (2H, 8H)
    return wih_cat, b_cat, whh_blk


def birnn_forward(x, params):
    """BiRNN.forward: x (T, B, input_size) -> (T, B, 2*hidden_size)."""
    T, B, Din = x.shape
    H = params[0]["fwd"]["w_hh"].shape[1]
    num_layers = len(params)

    flat_w = []
    in_specs = [pl.BlockSpec((T * B, Din), lambda i: (0, 0))]
    for lp in params:
        wih_cat, b_cat, whh_blk = _prep_layer(lp["fwd"], lp["bwd"])
        flat_w += [wih_cat, b_cat, whh_blk]
        in_specs += [
            pl.BlockSpec(wih_cat.shape, lambda i: (0, 0)),
            pl.BlockSpec(b_cat.shape, lambda i: (0, 0)),
            pl.BlockSpec(whh_blk.shape, lambda i: (0, 0)),
        ]

    n_bufs = min(num_layers - 1, 2)                      # ping-pong layer buffers
    scratch = [pltpu.VMEM((T * B, 8 * H), jnp.float32)]  # hoisted input-projection buffer
    scratch += [pltpu.VMEM((T * B, 2 * H), jnp.float32) for _ in range(n_bufs)]

    kernel = functools.partial(_birnn_kernel, T, B, H, num_layers)
    out2d = pl.pallas_call(
        kernel,
        out_shape=jax.ShapeDtypeStruct((T * B, 2 * H), jnp.float32),
        grid_spec=pltpu.PrefetchScalarGridSpec(
            num_scalar_prefetch=0,
            grid=(1,),                                   # single invocation; time loop is in-kernel
            in_specs=in_specs,
            out_specs=pl.BlockSpec((T * B, 2 * H), lambda i: (0, 0)),
            scratch_shapes=scratch,
        ),
        compiler_params=pltpu.CompilerParams(
            dimension_semantics=("arbitrary",),          # recurrence must stay sequential
        ),
    )(x.reshape(T * B, Din), *flat_w)
    return out2d.reshape(T, B, 2 * H)


def init_birnn_params(key, input_size, hidden_size, num_layers):
    """PyTorch-style init: U(-1/sqrt(H), 1/sqrt(H)) for every LSTM parameter."""
    stdv = 1.0 / (hidden_size ** 0.5)
    params = []
    for layer in range(num_layers):
        din = input_size if layer == 0 else 2 * hidden_size
        layer_params = {}
        for direction in ("fwd", "bwd"):
            key, k1, k2, k3, k4 = jax.random.split(key, 5)
            layer_params[direction] = dict(
                w_ih=jax.random.uniform(k1, (4 * hidden_size, din),
                                        jnp.float32, -stdv, stdv),
                w_hh=jax.random.uniform(k2, (4 * hidden_size, hidden_size),
                                        jnp.float32, -stdv, stdv),
                b_ih=jax.random.uniform(k3, (4 * hidden_size,),
                                        jnp.float32, -stdv, stdv),
                b_hh=jax.random.uniform(k4, (4 * hidden_size,),
                                        jnp.float32, -stdv, stdv),
            )
        params.append(layer_params)
    return params


# ---------------- pure-JAX reference (for correctness check) ----------------
def _lstm_ref_single(x, w_ih, w_hh, b_ih, b_hh):
    B = x.shape[1]
    H = w_hh.shape[1]

    def step(carry, x_t):
        h, c = carry
        g = x_t @ w_ih.T + h @ w_hh.T + b_ih + b_hh
        i, f, gg, o = jnp.split(g, 4, axis=-1)
        c = jax.nn.sigmoid(f) * c + jax.nn.sigmoid(i) * jnp.tanh(gg)
        h = jax.nn.sigmoid(o) * jnp.tanh(c)
        return (h, c), h

    init = (jnp.zeros((B, H), jnp.float32), jnp.zeros((B, H), jnp.float32))
    _, hs = lax.scan(step, init, x)
    return hs


def birnn_ref(x, params):
    out = x
    for lp in params:
        of = _lstm_ref_single(out, **lp["fwd"])
        ob = _lstm_ref_single(out[::-1], **lp["bwd"])[::-1]
        out = jnp.concatenate([of, ob], axis=-1)
    return out


if __name__ == "__main__":
    # BiRNN(input_size=16, hidden_size=32, num_layers=2, output_size=10, module='LSTM')
    # NOTE: output_size is unused in the PyTorch module's forward pass.
    T, B = 8, 2
    input_size, hidden_size, num_layers = 16, 32, 2

    key = jax.random.PRNGKey(0)
    key, xk = jax.random.split(key)
    x = jax.random.normal(xk, (T, B, input_size), dtype=jnp.float32)
    params = init_birnn_params(key, input_size, hidden_size, num_layers)

    fwd = jax.jit(functools.partial(birnn_forward, params=params))
    out = fwd(x)
    jax.block_until_ready(out)

    assert out.shape == (T, B, 2 * hidden_size), out.shape
    assert bool(jnp.all(jnp.isfinite(out)))

    ref = birnn_ref(x, params)
    assert bool(jnp.allclose(out, ref, atol=1e-3, rtol=1e-3)), \
        float(jnp.max(jnp.abs(out - ref)))

    print("KERNEL_OK")
</pallas_src>

<mosaic_0001>
module attributes {stable_mosaic.version = 11 : i64} {
  func.func @_birnn_kernel(%arg0: i32, %arg1: memref<16x16xf32, #tpu.memory_space<vmem>>, %arg2: memref<16x256xf32, #tpu.memory_space<vmem>>, %arg3: memref<1x256xf32, #tpu.memory_space<vmem>>, %arg4: memref<64x256xf32, #tpu.memory_space<vmem>>, %arg5: memref<64x256xf32, #tpu.memory_space<vmem>>, %arg6: memref<1x256xf32, #tpu.memory_space<vmem>>, %arg7: memref<64x256xf32, #tpu.memory_space<vmem>>, %arg8: memref<16x64xf32, #tpu.memory_space<vmem>>, %arg9: memref<16x256xf32, #tpu.memory_space<vmem>>, %arg10: memref<16x64xf32, #tpu.memory_space<vmem>>) attributes {dimension_semantics = [#tpu.dimension_semantics<arbitrary>], iteration_bounds = array<i64: 1>, scalar_prefetch = 0 : i64, scratch_operands = 2 : i64, tpu.core_type = #tpu.core_type<tc>, window_params = [{pipeline_mode = #tpu.pipeline_mode<synchronous>, transform_indices = @transform_0, window_bounds = array<i64: 16, 16>}, {pipeline_mode = #tpu.pipeline_mode<synchronous>, transform_indices = @transform_1, window_bounds = array<i64: 16, 256>}, {pipeline_mode = #tpu.pipeline_mode<synchronous>, transform_indices = @transform_2, window_bounds = array<i64: 1, 256>}, {pipeline_mode = #tpu.pipeline_mode<synchronous>, transform_indices = @transform_3, window_bounds = array<i64: 64, 256>}, {pipeline_mode = #tpu.pipeline_mode<synchronous>, transform_indices = @transform_4, window_bounds = array<i64: 64, 256>}, {pipeline_mode = #tpu.pipeline_mode<synchronous>, transform_indices = @transform_5, window_bounds = array<i64: 1, 256>}, {pipeline_mode = #tpu.pipeline_mode<synchronous>, transform_indices = @transform_6, window_bounds = array<i64: 64, 256>}, {pipeline_mode = #tpu.pipeline_mode<synchronous>, transform_indices = @transform_7, window_bounds = array<i64: 16, 64>}]} {
    %c0 = arith.constant 0 : index
    %c0_0 = arith.constant 0 : index
    %0 = vector.load %arg1[%c0, %c0_0] : memref<16x16xf32, #tpu.memory_space<vmem>>, vector<16x16xf32>
    %c0_1 = arith.constant 0 : index
    %c0_2 = arith.constant 0 : index
    %1 = vector.load %arg2[%c0_1, %c0_2] : memref<16x256xf32, #tpu.memory_space<vmem>>, vector<16x256xf32>
    %cst = arith.constant dense<0.000000e+00> : vector<16x256xf32>
    %2 = tpu.matmul %0, %1, %cst {dimension_numbers = #tpu.dot_dimension_numbers<[1], [0], [0], [1], [0, 0, 1, 1], [], []>} : vector<16x16xf32>, vector<16x256xf32>, vector<16x256xf32> -> vector<16x256xf32>
    %c0_3 = arith.constant 0 : index
    %c0_4 = arith.constant 0 : index
    %3 = vector.load %arg3[%c0_3, %c0_4] : memref<1x256xf32, #tpu.memory_space<vmem>>, vector<1x256xf32>
    %4 = vector.broadcast %3 : vector<1x256xf32> to vector<16x256xf32>
    %5 = arith.addf %2, %4 : vector<16x256xf32>
    %c0_5 = arith.constant 0 : index
    %c0_6 = arith.constant 0 : index
    %6 = vector.load %arg9[%c0_5, %c0_6] : memref<16x256xf32, #tpu.memory_space<vmem>>, vector<16x256xf32>
    tpu.vector_store %arg9[%c0_5, %c0_6], %5 {strides = array<i32>} : memref<16x256xf32, #tpu.memory_space<vmem>>, vector<16x256xf32>,
    %cst_7 = arith.constant 0.000000e+00 : f32
    %7 = vector.broadcast %cst_7 : f32 to vector<2x64xf32>
    %cst_8 = arith.constant 0.000000e+00 : f32
    %8 = vector.broadcast %cst_8 : f32 to vector<2x32xf32>
    %cst_9 = arith.constant 0.000000e+00 : f32
    %9 = vector.broadcast %cst_9 : f32 to vector<2x32xf32>
    %c0_i32 = arith.constant 0 : i32
    %c0_10 = arith.constant 0 : index
    %c0_11 = arith.constant 0 : index
    %10 = vector.load %arg4[%c0_10, %c0_11] : memref<64x256xf32, #tpu.memory_space<vmem>>, vector<64x256xf32>
    %cst_12 = arith.constant dense<0.000000e+00> : vector<2x256xf32>
    %11 = tpu.matmul %7, %10, %cst_12 {dimension_numbers = #tpu.dot_dimension_numbers<[1], [0], [0], [1], [0, 0, 1, 1], [], []>} : vector<2x64xf32>, vector<64x256xf32>, vector<2x256xf32> -> vector<2x256xf32>
    %c2_i32 = arith.constant 2 : i32
    %12 = arith.muli %c0_i32, %c2_i32 : i32
    %13 = arith.index_cast %12 : i32 to index
    %c0_13 = arith.constant 0 : index
    %14 = vector.load %arg9[%13, %c0_13] : memref<16x256xf32, #tpu.memory_space<vmem>>, vector<2x256xf32>
    %c7_i32 = arith.constant 7 : i32
    %15 = arith.subi %c7_i32, %c0_i32 : i32
    %c2_i32_14 = arith.constant 2 : i32
    %16 = arith.muli %15, %c2_i32_14 : i32
    %17 = arith.index_cast %16 : i32 to index
    %c0_15 = arith.constant 0 : index
    %18 = vector.load %arg9[%17, %c0_15] : memref<16x256xf32, #tpu.memory_space<vmem>>, vector<2x256xf32>
    %19 = vector.extract_strided_slice %11 {offsets = [0, 0], sizes = [2, 128], strides = [1, 1]} : vector<2x256xf32> to vector<2x128xf32>
    %20 = vector.extract_strided_slice %14 {offsets = [0, 0], sizes = [2, 128], strides = [1, 1]} : vector<2x256xf32> to vector<2x128xf32>
    %21 = arith.addf %19, %20 : vector<2x128xf32>
    %22 = vector.extract_strided_slice %11 {offsets = [0, 128], sizes = [2, 128], strides = [1, 1]} : vector<2x256xf32> to vector<2x128xf32>
    %23 = vector.extract_strided_slice %18 {offsets = [0, 128], sizes = [2, 128], strides = [1, 1]} : vector<2x256xf32> to vector<2x128xf32>
    %24 = arith.addf %22, %23 : vector<2x128xf32>
    %25 = arith.negf %21 : vector<2x128xf32>
    %26 = math.exp %25 : vector<2x128xf32>
    %cst_16 = arith.constant 1.000000e+00 : f32
    %27 = vector.broadcast %cst_16 : f32 to vector<2x128xf32>
    %28 = arith.addf %27, %26 : vector<2x128xf32>
    %29 = arith.divf %27, %28 : vector<2x128xf32>
    %30 = math.tanh %21 : vector<2x128xf32>
    %31 = vector.extract_strided_slice %29 {offsets = [0, 32], sizes = [2, 32], strides = [1, 1]} : vector<2x128xf32> to vector<2x32xf32>
    %32 = arith.mulf %31, %8 : vector<2x32xf32>
    %33 = vector.extract_strided_slice %29 {offsets = [0, 0], sizes = [2, 32], strides = [1, 1]} : vector<2x128xf32> to vector<2x32xf32>
    %34 = vector.extract_strided_slice %30 {offsets = [0, 64], sizes = [2, 32], strides = [1, 1]} : vector<2x128xf32> to vector<2x32xf32>
    %35 = arith.mulf %33, %34 : vector<2x32xf32>
    %36 = arith.addf %32, %35 : vector<2x32xf32>
    %37 = vector.extract_strided_slice %29 {offsets = [0, 96], sizes = [2, 32], strides = [1, 1]} : vector<2x128xf32> to vector<2x32xf32>
    %38 = math.tanh %36 : vector<2x32xf32>
    %39 = arith.mulf %37, %38 : vector<2x32xf32>
    %40 = arith.negf %24 : vector<2x128xf32>
    %41 = math.exp %40 : vector<2x128xf32>
    %cst_17 = arith.constant 1.000000e+00 : f32
    %42 = vector.broadcast %cst_17 : f32 to vector<2x128xf32>
    %43 = arith.addf %42, %41 : vector<2x128xf32>
    %44 = arith.divf %42, %43 : vector<2x128xf32>
    %45 = math.tanh %24 : vector<2x128xf32>
    %46 = vector.extract_strided_slice %44 {offsets = [0, 32], sizes = [2, 32], strides = [1, 1]} : vector<2x128xf32> to vector<2x32xf32>
    %47 = arith.mulf %46, %9 : vector<2x32xf32>
    %48 = vector.extract_strided_slice %44 {offsets = [0, 0], sizes = [2, 32], strides = [1, 1]} : vector<2x128xf32> to vector<2x32xf32>
    %49 = vector.extract_strided_slice %45 {offsets = [0, 64], sizes = [2, 32], strides = [1, 1]} : vector<2x128xf32> to vector<2x32xf32>
    %50 = arith.mulf %48, %49 : vector<2x32xf32>
    %51 = arith.addf %47, %50 : vector<2x32xf32>
    %52 = vector.extract_strided_slice %44 {offsets = [0, 96], sizes = [2, 32], strides = [1, 1]} : vector<2x128xf32> to vector<2x32xf32>
    %53 = math.tanh %51 : vector<2x32xf32>
    %54 = arith.mulf %52, %53 : vector<2x32xf32>
    %c2_i32_18 = arith.constant 2 : i32
    %55 = arith.muli %c0_i32, %c2_i32_18 : i32
    %56 = arith.index_cast %55 : i32 to index
    %c0_19 = arith.constant 0 : index
    %57 = vector.load %arg10[%56, %c0_19] : memref<16x64xf32, #tpu.memory_space<vmem>>, vector<2x32xf32>
    tpu.vector_store %arg10[%56, %c0_19], %39 {strides = array<i32>} : memref<16x64xf32, #tpu.memory_space<vmem>>, vector<2x32xf32>,
    %c7_i32_20 = arith.constant 7 : i32
    %58 = arith.subi %c7_i32_20, %c0_i32 : i32
    %c2_i32_21 = arith.constant 2 : i32
    %59 = arith.muli %58, %c2_i32_21 : i32
    %60 = arith.index_cast %59 : i32 to index
    %c32 = arith.constant 32 : index
    %61 = vector.load %arg10[%60, %c32] : memref<16x64xf32, #tpu.memory_space<vmem>>, vector<2x32xf32>
    tpu.vector_store %arg10[%60, %c32], %54 {strides = array<i32>} : memref<16x64xf32, #tpu.memory_space<vmem>>, vector<2x32xf32>,
    %62 = tpu.concatenate %39, %54 in 1 : vector<2x32xf32>, vector<2x32xf32> -> vector<2x64xf32>
    %c1_i32 = arith.constant 1 : i32
    %c0_22 = arith.constant 0 : index
    %c0_23 = arith.constant 0 : index
    %63 = vector.load %arg4[%c0_22, %c0_23] : memref<64x256xf32, #tpu.memory_space<vmem>>, vector<64x256xf32>
    %cst_24 = arith.constant dense<0.000000e+00> : vector<2x256xf32>
    %64 = tpu.matmul %62, %63, %cst_24 {dimension_numbers = #tpu.dot_dimension_numbers<[1], [0], [0], [1], [0, 0, 1, 1], [], []>} : vector<2x64xf32>, vector<64x256xf32>, vector<2x256xf32> -> vector<2x256xf32>
    %c2_i32_25 = arith.constant 2 : i32
    %65 = arith.muli %c1_i32, %c2_i32_25 : i32
    %66 = arith.index_cast %65 : i32 to index
    %c0_26 = arith.constant 0 : index
    %67 = vector.load %arg9[%66, %c0_26] : memref<16x256xf32, #tpu.memory_space<vmem>>, vector<2x256xf32>
    %c7_i32_27 = arith.constant 7 : i32
    %68 = arith.subi %c7_i32_27, %c1_i32 : i32
    %c2_i32_28 = arith.constant 2 : i32
    %69 = arith.muli %68, %c2_i32_28 : i32
    %70 = arith.index_cast %69 : i32 to index
    %c0_29 = arith.constant 0 : index
    %71 = vector.load %arg9[%70, %c0_29] : memref<16x256xf32, #tpu.memory_space<vmem>>, vector<2x256xf32>
    %72 = vector.extract_strided_slice %64 {offsets = [0, 0], sizes = [2, 128], strides = [1, 1]} : vector<2x256xf32> to vector<2x128xf32>
    %73 = vector.extract_strided_slice %67 {offsets = [0, 0], sizes = [2, 128], strides = [1, 1]} : vector<2x256xf32> to vector<2x128xf32>
    %74 = arith.addf %72, %73 : vector<2x128xf32>
    %75 = vector.extract_strided_slice %64 {offsets = [0, 128], sizes = [2, 128], strides = [1, 1]} : vector<2x256xf32> to vector<2x128xf32>
    %76 = vector.extract_strided_slice %71 {offsets = [0, 128], sizes = [2, 128], strides = [1, 1]} : vector<2x256xf32> to vector<2x128xf32>
    %77 = arith.addf %75, %76 : vector<2x128xf32>
    %78 = arith.negf %74 : vector<2x128xf32>
    %79 = math.exp %78 : vector<2x128xf32>
    %cst_30 = arith.constant 1.000000e+00 : f32
    %80 = vector.broadcast %cst_30 : f32 to vector<2x128xf32>
    %81 = arith.addf %80, %79 : vector<2x128xf32>
    %82 = arith.divf %80, %81 : vector<2x128xf32>
    %83 = math.tanh %74 : vector<2x128xf32>
    %84 = vector.extract_strided_slice %82 {offsets = [0, 32], sizes = [2, 32], strides = [1, 1]} : vector<2x128xf32> to vector<2x32xf32>
    %85 = arith.mulf %84, %36 : vector<2x32xf32>
    %86 = vector.extract_strided_slice %82 {offsets = [0, 0], sizes = [2, 32], strides = [1, 1]} : vector<2x128xf32> to vector<2x32xf32>
    %87 = vector.extract_strided_slice %83 {offsets = [0, 64], sizes = [2, 32], strides = [1, 1]} : vector<2x128xf32> to vector<2x32xf32>
    %88 = arith.mulf %86, %87 : vector<2x32xf32>
    %89 = arith.addf %85, %88 : vector<2x32xf32>
    %90 = vector.extract_strided_slice %82 {offsets = [0, 96], sizes = [2, 32], strides = [1, 1]} : vector<2x128xf32> to vector<2x32xf32>
    %91 = math.tanh %89 : vector<2x32xf32>
    %92 = arith.mulf %90, %91 : vector<2x32xf32>
    %93 = arith.negf %77 : vector<2x128xf32>
    %94 = math.exp %93 : vector<2x128xf32>
    %cst_31 = arith.constant 1.000000e+00 : f32
    %95 = vector.broadcast %cst_31 : f32 to vector<2x128xf32>
    %96 = arith.addf %95, %94 : vector<2x128xf32>
    %97 = arith.divf %95, %96 : vector<2x128xf32>
    %98 = math.tanh %77 : vector<2x128xf32>
    %99 = vector.extract_strided_slice %97 {offsets = [0, 32], sizes = [2, 32], strides = [1, 1]} : vector<2x128xf32> to vector<2x32xf32>
    %100 = arith.mulf %99, %51 : vector<2x32xf32>
    %101 = vector.extract_strided_slice %97 {offsets = [0, 0], sizes = [2, 32], strides = [1, 1]} : vector<2x128xf32> to vector<2x32xf32>
    %102 = vector.extract_strided_slice %98 {offsets = [0, 64], sizes = [2, 32], strides = [1, 1]} : vector<2x128xf32> to vector<2x32xf32>
    %103 = arith.mulf %101, %102 : vector<2x32xf32>
    %104 = arith.addf %100, %103 : vector<2x32xf32>
    %105 = vector.extract_strided_slice %97 {offsets = [0, 96], sizes = [2, 32], strides = [1, 1]} : vector<2x128xf32> to vector<2x32xf32>
    %106 = math.tanh %104 : vector<2x32xf32>
    %107 = arith.mulf %105, %106 : vector<2x32xf32>
    %c2_i32_32 = arith.constant 2 : i32
    %108 = arith.muli %c1_i32, %c2_i32_32 : i32
    %109 = arith.index_cast %108 : i32 to index
    %c0_33 = arith.constant 0 : index
    %110 = vector.load %arg10[%109, %c0_33] : memref<16x64xf32, #tpu.memory_space<vmem>>, vector<2x32xf32>
    tpu.vector_store %arg10[%109, %c0_33], %92 {strides = array<i32>} : memref<16x64xf32, #tpu.memory_space<vmem>>, vector<2x32xf32>,
    %c7_i32_34 = arith.constant 7 : i32
    %111 = arith.subi %c7_i32_34, %c1_i32 : i32
    %c2_i32_35 = arith.constant 2 : i32
    %112 = arith.muli %111, %c2_i32_35 : i32
    %113 = arith.index_cast %112 : i32 to index
    %c32_36 = arith.constant 32 : index
    %114 = vector.load %arg10[%113, %c32_36] : memref<16x64xf32, #tpu.memory_space<vmem>>, vector<2x32xf32>
    tpu.vector_store %arg10[%113, %c32_36], %107 {strides = array<i32>} : memref<16x64xf32, #tpu.memory_space<vmem>>, vector<2x32xf32>,
    %115 = tpu.concatenate %92, %107 in 1 : vector<2x32xf32>, vector<2x32xf32> -> vector<2x64xf32>
    %c2_i32_37 = arith.constant 2 : i32
    %c0_38 = arith.constant 0 : index
    %c0_39 = arith.constant 0 : index
    %116 = vector.load %arg4[%c0_38, %c0_39] : memref<64x256xf32, #tpu.memory_space<vmem>>, vector<64x256xf32>
    %cst_40 = arith.constant dense<0.000000e+00> : vector<2x256xf32>
    %117 = tpu.matmul %115, %116, %cst_40 {dimension_numbers = #tpu.dot_dimension_numbers<[1], [0], [0], [1], [0, 0, 1, 1], [], []>} : vector<2x64xf32>, vector<64x256xf32>, vector<2x256xf32> -> vector<2x256xf32>
    %c2_i32_41 = arith.constant 2 : i32
    %118 = arith.muli %c2_i32_37, %c2_i32_41 : i32
    %119 = arith.index_cast %118 : i32 to index
    %c0_42 = arith.constant 0 : index
    %120 = vector.load %arg9[%119, %c0_42] : memref<16x256xf32, #tpu.memory_space<vmem>>, vector<2x256xf32>
    %c7_i32_43 = arith.constant 7 : i32
    %121 = arith.subi %c7_i32_43, %c2_i32_37 : i32
    %c2_i32_44 = arith.constant 2 : i32
    %122 = arith.muli %121, %c2_i32_44 : i32
    %123 = arith.index_cast %122 : i32 to index
    %c0_45 = arith.constant 0 : index
    %124 = vector.load %arg9[%123, %c0_45] : memref<16x256xf32, #tpu.memory_space<vmem>>, vector<2x256xf32>
    %125 = vector.extract_strided_slice %117 {offsets = [0, 0], sizes = [2, 128], strides = [1, 1]} : vector<2x256xf32> to vector<2x128xf32>
    %126 = vector.extract_strided_slice %120 {offsets = [0, 0], sizes = [2, 128], strides = [1, 1]} : vector<2x256xf32> to vector<2x128xf32>
    %127 = arith.addf %125, %126 : vector<2x128xf32>
    %128 = vector.extract_strided_slice %117 {offsets = [0, 128], sizes = [2, 128], strides = [1, 1]} : vector<2x256xf32> to vector<2x128xf32>
    %129 = vector.extract_strided_slice %124 {offsets = [0, 128], sizes = [2, 128], strides = [1, 1]} : vector<2x256xf32> to vector<2x128xf32>
    %130 = arith.addf %128, %129 : vector<2x128xf32>
    %131 = arith.negf %127 : vector<2x128xf32>
    %132 = math.exp %131 : vector<2x128xf32>
    %cst_46 = arith.constant 1.000000e+00 : f32
    %133 = vector.broadcast %cst_46 : f32 to vector<2x128xf32>
    %134 = arith.addf %133, %132 : vector<2x128xf32>
    %135 = arith.divf %133, %134 : vector<2x128xf32>
    %136 = math.tanh %127 : vector<2x128xf32>
    %137 = vector.extract_strided_slice %135 {offsets = [0, 32], sizes = [2, 32], strides = [1, 1]} : vector<2x128xf32> to vector<2x32xf32>
    %138 = arith.mulf %137, %89 : vector<2x32xf32>
    %139 = vector.extract_strided_slice %135 {offsets = [0, 0], sizes = [2, 32], strides = [1, 1]} : vector<2x128xf32> to vector<2x32xf32>
    %140 = vector.extract_strided_slice %136 {offsets = [0, 64], sizes = [2, 32], strides = [1, 1]} : vector<2x128xf32> to vector<2x32xf32>
    %141 = arith.mulf %139, %140 : vector<2x32xf32>
    %142 = arith.addf %138, %141 : vector<2x32xf32>
    %143 = vector.extract_strided_slice %135 {offsets = [0, 96], sizes = [2, 32], strides = [1, 1]} : vector<2x128xf32> to vector<2x32xf32>
    %144 = math.tanh %142 : vector<2x32xf32>
    %145 = arith.mulf %143, %144 : vector<2x32xf32>
    %146 = arith.negf %130 : vector<2x128xf32>
    %147 = math.exp %146 : vector<2x128xf32>
    %cst_47 = arith.constant 1.000000e+00 : f32
    %148 = vector.broadcast %cst_47 : f32 to vector<2x128xf32>
    %149 = arith.addf %148, %147 : vector<2x128xf32>
    %150 = arith.divf %148, %149 : vector<2x128xf32>
    %151 = math.tanh %130 : vector<2x128xf32>
    %152 = vector.extract_strided_slice %150 {offsets = [0, 32], sizes = [2, 32], strides = [1, 1]} : vector<2x128xf32> to vector<2x32xf32>
    %153 = arith.mulf %152, %104 : vector<2x32xf32>
    %154 = vector.extract_strided_slice %150 {offsets = [0, 0], sizes = [2, 32], strides = [1, 1]} : vector<2x128xf32> to vector<2x32xf32>
    %155 = vector.extract_strided_slice %151 {offsets = [0, 64], sizes = [2, 32], strides = [1, 1]} : vector<2x128xf32> to vector<2x32xf32>
    %156 = arith.mulf %154, %155 : vector<2x32xf32>
    %157 = arith.addf %153, %156 : vector<2x32xf32>
    %158 = vector.extract_strided_slice %150 {offsets = [0, 96], sizes = [2, 32], strides = [1, 1]} : vector<2x128xf32> to vector<2x32xf32>
    %159 = math.tanh %157 : vector<2x32xf32>
    %160 = arith.mulf %158, %159 : vector<2x32xf32>
    %c2_i32_48 = arith.constant 2 : i32
    %161 = arith.muli %c2_i32_37, %c2_i32_48 : i32
    %162 = arith.index_cast %161 : i32 to index
    %c0_49 = arith.constant 0 : index
    %163 = vector.load %arg10[%162, %c0_49] : memref<16x64xf32, #tpu.memory_space<vmem>>, vector<2x32xf32>
    tpu.vector_store %arg10[%162, %c0_49], %145 {strides = array<i32>} : memref<16x64xf32, #tpu.memory_space<vmem>>, vector<2x32xf32>,
    %c7_i32_50 = arith.constant 7 : i32
    %164 = arith.subi %c7_i32_50, %c2_i32_37 : i32
    %c2_i32_51 = arith.constant 2 : i32
    %165 = arith.muli %164, %c2_i32_51 : i32
    %166 = arith.index_cast %165 : i32 to index
    %c32_52 = arith.constant 32 : index
    %167 = vector.load %arg10[%166, %c32_52] : memref<16x64xf32, #tpu.memory_space<vmem>>, vector<2x32xf32>
    tpu.vector_store %arg10[%166, %c32_52], %160 {strides = array<i32>} : memref<16x64xf32, #tpu.memory_space<vmem>>, vector<2x32xf32>,
    %168 = tpu.concatenate %145, %160 in 1 : vector<2x32xf32>, vector<2x32xf32> -> vector<2x64xf32>
    %c3_i32 = arith.constant 3 : i32
    %c0_53 = arith.constant 0 : index
    %c0_54 = arith.constant 0 : index
    %169 = vector.load %arg4[%c0_53, %c0_54] : memref<64x256xf32, #tpu.memory_space<vmem>>, vector<64x256xf32>
    %cst_55 = arith.constant dense<0.000000e+00> : vector<2x256xf32>
    %170 = tpu.matmul %168, %169, %cst_55 {dimension_numbers = #tpu.dot_dimension_numbers<[1], [0], [0], [1], [0, 0, 1, 1], [], []>} : vector<2x64xf32>, vector<64x256xf32>, vector<2x256xf32> -> vector<2x256xf32>
    %c2_i32_56 = arith.constant 2 : i32
    %171 = arith.muli %c3_i32, %c2_i32_56 : i32
    %172 = arith.index_cast %171 : i32 to index
    %c0_57 = arith.constant 0 : index
    %173 = vector.load %arg9[%172, %c0_57] : memref<16x256xf32, #tpu.memory_space<vmem>>, vector<2x256xf32>
    %c7_i32_58 = arith.constant 7 : i32
    %174 = arith.subi %c7_i32_58, %c3_i32 : i32
    %c2_i32_59 = arith.constant 2 : i32
    %175 = arith.muli %174, %c2_i32_59 : i32
    %176 = arith.index_cast %175 : i32 to index
    %c0_60 = arith.constant 0 : index
    %177 = vector.load %arg9[%176, %c0_60] : memref<16x256xf32, #tpu.memory_space<vmem>>, vector<2x256xf32>
    %178 = vector.extract_strided_slice %170 {offsets = [0, 0], sizes = [2, 128], strides = [1, 1]} : vector<2x256xf32> to vector<2x128xf32>
    %179 = vector.extract_strided_slice %173 {offsets = [0, 0], sizes = [2, 128], strides = [1, 1]} : vector<2x256xf32> to vector<2x128xf32>
    %180 = arith.addf %178, %179 : vector<2x128xf32>
    %181 = vector.extract_strided_slice %170 {offsets = [0, 128], sizes = [2, 128], strides = [1, 1]} : vector<2x256xf32> to vector<2x128xf32>
    %182 = vector.extract_strided_slice %177 {offsets = [0, 128], sizes = [2, 128], strides = [1, 1]} : vector<2x256xf32> to vector<2x128xf32>
    %183 = arith.addf %181, %182 : vector<2x128xf32>
    %184 = arith.negf %180 : vector<2x128xf32>
    %185 = math.exp %184 : vector<2x128xf32>
    %cst_61 = arith.constant 1.000000e+00 : f32
    %186 = vector.broadcast %cst_61 : f32 to vector<2x128xf32>
    %187 = arith.addf %186, %185 : vector<2x128xf32>
    %188 = arith.divf %186, %187 : vector<2x128xf32>
    %189 = math.tanh %180 : vector<2x128xf32>
    %190 = vector.extract_strided_slice %188 {offsets = [0, 32], sizes = [2, 32], strides = [1, 1]} : vector<2x128xf32> to vector<2x32xf32>
    %191 = arith.mulf %190, %142 : vector<2x32xf32>
    %192 = vector.extract_strided_slice %188 {offsets = [0, 0], sizes = [2, 32], strides = [1, 1]} : vector<2x128xf32> to vector<2x32xf32>
    %193 = vector.extract_strided_slice %189 {offsets = [0, 64], sizes = [2, 32], strides = [1, 1]} : vector<2x128xf32> to vector<2x32xf32>
    %194 = arith.mulf %192, %193 : vector<2x32xf32>
    %195 = arith.addf %191, %194 : vector<2x32xf32>
    %196 = vector.extract_strided_slice %188 {offsets = [0, 96], sizes = [2, 32], strides = [1, 1]} : vector<2x128xf32> to vector<2x32xf32>
    %197 = math.tanh %195 : vector<2x32xf32>
    %198 = arith.mulf %196, %197 : vector<2x32xf32>
    %199 = arith.negf %183 : vector<2x128xf32>
    %200 = math.exp %199 : vector<2x128xf32>
    %cst_62 = arith.constant 1.000000e+00 : f32
    %201 = vector.broadcast %cst_62 : f32 to vector<2x128xf32>
    %202 = arith.addf %201, %200 : vector<2x128xf32>
    %203 = arith.divf %201, %202 : vector<2x128xf32>
    %204 = math.tanh %183 : vector<2x128xf32>
    %205 = vector.extract_strided_slice %203 {offsets = [0, 32], sizes = [2, 32], strides = [1, 1]} : vector<2x128xf32> to vector<2x32xf32>
    %206 = arith.mulf %205, %157 : vector<2x32xf32>
    %207 = vector.extract_strided_slice %203 {offsets = [0, 0], sizes = [2, 32], strides = [1, 1]} : vector<2x128xf32> to vector<2x32xf32>
    %208 = vector.extract_strided_slice %204 {offsets = [0, 64], sizes = [2, 32], strides = [1, 1]} : vector<2x128xf32> to vector<2x32xf32>
    %209 = arith.mulf %207, %208 : vector<2x32xf32>
    %210 = arith.addf %206, %209 : vector<2x32xf32>
    %211 = vector.extract_strided_slice %203 {offsets = [0, 96], sizes = [2, 32], strides = [1, 1]} : vector<2x128xf32> to vector<2x32xf32>
    %212 = math.tanh %210 : vector<2x32xf32>
    %213 = arith.mulf %211, %212 : vector<2x32xf32>
    %c2_i32_63 = arith.constant 2 : i32
    %214 = arith.muli %c3_i32, %c2_i32_63 : i32
    %215 = arith.index_cast %214 : i32 to index
    %c0_64 = arith.constant 0 : index
    %216 = vector.load %arg10[%215, %c0_64] : memref<16x64xf32, #tpu.memory_space<vmem>>, vector<2x32xf32>
    tpu.vector_store %arg10[%215, %c0_64], %198 {strides = array<i32>} : memref<16x64xf32, #tpu.memory_space<vmem>>, vector<2x32xf32>,
    %c7_i32_65 = arith.constant 7 : i32
    %217 = arith.subi %c7_i32_65, %c3_i32 : i32
    %c2_i32_66 = arith.constant 2 : i32
    %218 = arith.muli %217, %c2_i32_66 : i32
    %219 = arith.index_cast %218 : i32 to index
    %c32_67 = arith.constant 32 : index
    %220 = vector.load %arg10[%219, %c32_67] : memref<16x64xf32, #tpu.memory_space<vmem>>, vector<2x32xf32>
    tpu.vector_store %arg10[%219, %c32_67], %213 {strides = array<i32>} : memref<16x64xf32, #tpu.memory_space<vmem>>, vector<2x32xf32>,
    %221 = tpu.concatenate %198, %213 in 1 : vector<2x32xf32>, vector<2x32xf32> -> vector<2x64xf32>
    %c4_i32 = arith.constant 4 : i32
    %c0_68 = arith.constant 0 : index
    %c0_69 = arith.constant 0 : index
    %222 = vector.load %arg4[%c0_68, %c0_69] : memref<64x256xf32, #tpu.memory_space<vmem>>, vector<64x256xf32>
    %cst_70 = arith.constant dense<0.000000e+00> : vector<2x256xf32>
    %223 = tpu.matmul %221, %222, %cst_70 {dimension_numbers = #tpu.dot_dimension_numbers<[1], [0], [0], [1], [0, 0, 1, 1], [], []>} : vector<2x64xf32>, vector<64x256xf32>, vector<2x256xf32> -> vector<2x256xf32>
    %c2_i32_71 = arith.constant 2 : i32
    %224 = arith.muli %c4_i32, %c2_i32_71 : i32
    %225 = arith.index_cast %224 : i32 to index
    %c0_72 = arith.constant 0 : index
    %226 = vector.load %arg9[%225, %c0_72] : memref<16x256xf32, #tpu.memory_space<vmem>>, vector<2x256xf32>
    %c7_i32_73 = arith.constant 7 : i32
    %227 = arith.subi %c7_i32_73, %c4_i32 : i32
    %c2_i32_74 = arith.constant 2 : i32
    %228 = arith.muli %227, %c2_i32_74 : i32
    %229 = arith.index_cast %228 : i32 to index
    %c0_75 = arith.constant 0 : index
    %230 = vector.load %arg9[%229, %c0_75] : memref<16x256xf32, #tpu.memory_space<vmem>>, vector<2x256xf32>
    %231 = vector.extract_strided_slice %223 {offsets = [0, 0], sizes = [2, 128], strides = [1, 1]} : vector<2x256xf32> to vector<2x128xf32>
    %232 = vector.extract_strided_slice %226 {offsets = [0, 0], sizes = [2, 128], strides = [1, 1]} : vector<2x256xf32> to vector<2x128xf32>
    %233 = arith.addf %231, %232 : vector<2x128xf32>
    %234 = vector.extract_strided_slice %223 {offsets = [0, 128], sizes = [2, 128], strides = [1, 1]} : vector<2x256xf32> to vector<2x128xf32>
    %235 = vector.extract_strided_slice %230 {offsets = [0, 128], sizes = [2, 128], strides = [1, 1]} : vector<2x256xf32> to vector<2x128xf32>
    %236 = arith.addf %234, %235 : vector<2x128xf32>
    %237 = arith.negf %233 : vector<2x128xf32>
    %238 = math.exp %237 : vector<2x128xf32>
    %cst_76 = arith.constant 1.000000e+00 : f32
    %239 = vector.broadcast %cst_76 : f32 to vector<2x128xf32>
    %240 = arith.addf %239, %238 : vector<2x128xf32>
    %241 = arith.divf %239, %240 : vector<2x128xf32>
    %242 = math.tanh %233 : vector<2x128xf32>
    %243 = vector.extract_strided_slice %241 {offsets = [0, 32], sizes = [2, 32], strides = [1, 1]} : vector<2x128xf32> to vector<2x32xf32>
    %244 = arith.mulf %243, %195 : vector<2x32xf32>
    %245 = vector.extract_strided_slice %241 {offsets = [0, 0], sizes = [2, 32], strides = [1, 1]} : vector<2x128xf32> to vector<2x32xf32>
    %246 = vector.extract_strided_slice %242 {offsets = [0, 64], sizes = [2, 32], strides = [1, 1]} : vector<2x128xf32> to vector<2x32xf32>
    %247 = arith.mulf %245, %246 : vector<2x32xf32>
    %248 = arith.addf %244, %247 : vector<2x32xf32>
    %249 = vector.extract_strided_slice %241 {offsets = [0, 96], sizes = [2, 32], strides = [1, 1]} : vector<2x128xf32> to vector<2x32xf32>
    %250 = math.tanh %248 : vector<2x32xf32>
    %251 = arith.mulf %249, %250 : vector<2x32xf32>
    %252 = arith.negf %236 : vector<2x128xf32>
    %253 = math.exp %252 : vector<2x128xf32>
    %cst_77 = arith.constant 1.000000e+00 : f32
    %254 = vector.broadcast %cst_77 : f32 to vector<2x128xf32>
    %255 = arith.addf %254, %253 : vector<2x128xf32>
    %256 = arith.divf %254, %255 : vector<2x128xf32>
    %257 = math.tanh %236 : vector<2x128xf32>
    %258 = vector.extract_strided_slice %256 {offsets = [0, 32], sizes = [2, 32], strides = [1, 1]} : vector<2x128xf32> to vector<2x32xf32>
    %259 = arith.mulf %258, %210 : vector<2x32xf32>
    %260 = vector.extract_strided_slice %256 {offsets = [0, 0], sizes = [2, 32], strides = [1, 1]} : vector<2x128xf32> to vector<2x32xf32>
    %261 = vector.extract_strided_slice %257 {offsets = [0, 64], sizes = [2, 32], strides = [1, 1]} : vector<2x128xf32> to vector<2x32xf32>
    %262 = arith.mulf %260, %261 : vector<2x32xf32>
    %263 = arith.addf %259, %262 : vector<2x32xf32>
    %264 = vector.extract_strided_slice %256 {offsets = [0, 96], sizes = [2, 32], strides = [1, 1]} : vector<2x128xf32> to vector<2x32xf32>
    %265 = math.tanh %263 : vector<2x32xf32>
    %266 = arith.mulf %264, %265 : vector<2x32xf32>
    %c2_i32_78 = arith.constant 2 : i32
    %267 = arith.muli %c4_i32, %c2_i32_78 : i32
    %268 = arith.index_cast %267 : i32 to index
    %c0_79 = arith.constant 0 : index
    %269 = vector.load %arg10[%268, %c0_79] : memref<16x64xf32, #tpu.memory_space<vmem>>, vector<2x32xf32>
    tpu.vector_store %arg10[%268, %c0_79], %251 {strides = array<i32>} : memref<16x64xf32, #tpu.memory_space<vmem>>, vector<2x32xf32>,
    %c7_i32_80 = arith.constant 7 : i32
    %270 = arith.subi %c7_i32_80, %c4_i32 : i32
    %c2_i32_81 = arith.constant 2 : i32
    %271 = arith.muli %270, %c2_i32_81 : i32
    %272 = arith.index_cast %271 : i32 to index
    %c32_82 = arith.constant 32 : index
    %273 = vector.load %arg10[%272, %c32_82] : memref<16x64xf32, #tpu.memory_space<vmem>>, vector<2x32xf32>
    tpu.vector_store %arg10[%272, %c32_82], %266 {strides = array<i32>} : memref<16x64xf32, #tpu.memory_space<vmem>>, vector<2x32xf32>,
    %274 = tpu.concatenate %251, %266 in 1 : vector<2x32xf32>, vector<2x32xf32> -> vector<2x64xf32>
    %c5_i32 = arith.constant 5 : i32
    %c0_83 = arith.constant 0 : index
    %c0_84 = arith.constant 0 : index
    %275 = vector.load %arg4[%c0_83, %c0_84] : memref<64x256xf32, #tpu.memory_space<vmem>>, vector<64x256xf32>
    %cst_85 = arith.constant dense<0.000000e+00> : vector<2x256xf32>
    %276 = tpu.matmul %274, %275, %cst_85 {dimension_numbers = #tpu.dot_dimension_numbers<[1], [0], [0], [1], [0, 0, 1, 1], [], []>} : vector<2x64xf32>, vector<64x256xf32>, vector<2x256xf32> -> vector<2x256xf32>
    %c2_i32_86 = arith.constant 2 : i32
    %277 = arith.muli %c5_i32, %c2_i32_86 : i32
    %278 = arith.index_cast %277 : i32 to index
    %c0_87 = arith.constant 0 : index
    %279 = vector.load %arg9[%278, %c0_87] : memref<16x256xf32, #tpu.memory_space<vmem>>, vector<2x256xf32>
    %c7_i32_88 = arith.constant 7 : i32
    %280 = arith.subi %c7_i32_88, %c5_i32 : i32
    %c2_i32_89 = arith.constant 2 : i32
    %281 = arith.muli %280, %c2_i32_89 : i32
    %282 = arith.index_cast %281 : i32 to index
    %c0_90 = arith.constant 0 : index
    %283 = vector.load %arg9[%282, %c0_90] : memref<16x256xf32, #tpu.memory_space<vmem>>, vector<2x256xf32>
    %284 = vector.extract_strided_slice %276 {offsets = [0, 0], sizes = [2, 128], strides = [1, 1]} : vector<2x256xf32> to vector<2x128xf32>
    %285 = vector.extract_strided_slice %279 {offsets = [0, 0], sizes = [2, 128], strides = [1, 1]} : vector<2x256xf32> to vector<2x128xf32>
    %286 = arith.addf %284, %285 : vector<2x128xf32>
    %287 = vector.extract_strided_slice %276 {offsets = [0, 128], sizes = [2, 128], strides = [1, 1]} : vector<2x256xf32> to vector<2x128xf32>
    %288 = vector.extract_strided_slice %283 {offsets = [0, 128], sizes = [2, 128], strides = [1, 1]} : vector<2x256xf32> to vector<2x128xf32>
    %289 = arith.addf %287, %288 : vector<2x128xf32>
    %290 = arith.negf %286 : vector<2x128xf32>
    %291 = math.exp %290 : vector<2x128xf32>
    %cst_91 = arith.constant 1.000000e+00 : f32
    %292 = vector.broadcast %cst_91 : f32 to vector<2x128xf32>
    %293 = arith.addf %292, %291 : vector<2x128xf32>
    %294 = arith.divf %292, %293 : vector<2x128xf32>
    %295 = math.tanh %286 : vector<2x128xf32>
    %296 = vector.extract_strided_slice %294 {offsets = [0, 32], sizes = [2, 32], strides = [1, 1]} : vector<2x128xf32> to vector<2x32xf32>
    %297 = arith.mulf %296, %248 : vector<2x32xf32>
    %298 = vector.extract_strided_slice %294 {offsets = [0, 0], sizes = [2, 32], strides = [1, 1]} : vector<2x128xf32> to vector<2x32xf32>
    %299 = vector.extract_strided_slice %295 {offsets = [0, 64], sizes = [2, 32], strides = [1, 1]} : vector<2x128xf32> to vector<2x32xf32>
    %300 = arith.mulf %298, %299 : vector<2x32xf32>
    %301 = arith.addf %297, %300 : vector<2x32xf32>
    %302 = vector.extract_strided_slice %294 {offsets = [0, 96], sizes = [2, 32], strides = [1, 1]} : vector<2x128xf32> to vector<2x32xf32>
    %303 = math.tanh %301 : vector<2x32xf32>
    %304 = arith.mulf %302, %303 : vector<2x32xf32>
    %305 = arith.negf %289 : vector<2x128xf32>
    %306 = math.exp %305 : vector<2x128xf32>
    %cst_92 = arith.constant 1.000000e+00 : f32
    %307 = vector.broadcast %cst_92 : f32 to vector<2x128xf32>
    %308 = arith.addf %307, %306 : vector<2x128xf32>
    %309 = arith.divf %307, %308 : vector<2x128xf32>
    %310 = math.tanh %289 : vector<2x128xf32>
    %311 = vector.extract_strided_slice %309 {offsets = [0, 32], sizes = [2, 32], strides = [1, 1]} : vector<2x128xf32> to vector<2x32xf32>
    %312 = arith.mulf %311, %263 : vector<2x32xf32>
    %313 = vector.extract_strided_slice %309 {offsets = [0, 0], sizes = [2, 32], strides = [1, 1]} : vector<2x128xf32> to vector<2x32xf32>
    %314 = vector.extract_strided_slice %310 {offsets = [0, 64], sizes = [2, 32], strides = [1, 1]} : vector<2x128xf32> to vector<2x32xf32>
    %315 = arith.mulf %313, %314 : vector<2x32xf32>
    %316 = arith.addf %312, %315 : vector<2x32xf32>
    %317 = vector.extract_strided_slice %309 {offsets = [0, 96], sizes = [2, 32], strides = [1, 1]} : vector<2x128xf32> to vector<2x32xf32>
    %318 = math.tanh %316 : vector<2x32xf32>
    %319 = arith.mulf %317, %318 : vector<2x32xf32>
    %c2_i32_93 = arith.constant 2 : i32
    %320 = arith.muli %c5_i32, %c2_i32_93 : i32
    %321 = arith.index_cast %320 : i32 to index
    %c0_94 = arith.constant 0 : index
    %322 = vector.load %arg10[%321, %c0_94] : memref<16x64xf32, #tpu.memory_space<vmem>>, vector<2x32xf32>
    tpu.vector_store %arg10[%321, %c0_94], %304 {strides = array<i32>} : memref<16x64xf32, #tpu.memory_space<vmem>>, vector<2x32xf32>,
    %c7_i32_95 = arith.constant 7 : i32
    %323 = arith.subi %c7_i32_95, %c5_i32 : i32
    %c2_i32_96 = arith.constant 2 : i32
    %324 = arith.muli %323, %c2_i32_96 : i32
    %325 = arith.index_cast %324 : i32 to index
    %c32_97 = arith.constant 32 : index
    %326 = vector.load %arg10[%325, %c32_97] : memref<16x64xf32, #tpu.memory_space<vmem>>, vector<2x32xf32>
    tpu.vector_store %arg10[%325, %c32_97], %319 {strides = array<i32>} : memref<16x64xf32, #tpu.memory_space<vmem>>, vector<2x32xf32>,
    %327 = tpu.concatenate %304, %319 in 1 : vector<2x32xf32>, vector<2x32xf32> -> vector<2x64xf32>
    %c6_i32 = arith.constant 6 : i32
    %c0_98 = arith.constant 0 : index
    %c0_99 = arith.constant 0 : index
    %328 = vector.load %arg4[%c0_98, %c0_99] : memref<64x256xf32, #tpu.memory_space<vmem>>, vector<64x256xf32>
    %cst_100 = arith.constant dense<0.000000e+00> : vector<2x256xf32>
    %329 = tpu.matmul %327, %328, %cst_100 {dimension_numbers = #tpu.dot_dimension_numbers<[1], [0], [0], [1], [0, 0, 1, 1], [], []>} : vector<2x64xf32>, vector<64x256xf32>, vector<2x256xf32> -> vector<2x256xf32>
    %c2_i32_101 = arith.constant 2 : i32
    %330 = arith.muli %c6_i32, %c2_i32_101 : i32
    %331 = arith.index_cast %330 : i32 to index
    %c0_102 = arith.constant 0 : index
    %332 = vector.load %arg9[%331, %c0_102] : memref<16x256xf32, #tpu.memory_space<vmem>>, vector<2x256xf32>
    %c7_i32_103 = arith.constant 7 : i32
    %333 = arith.subi %c7_i32_103, %c6_i32 : i32
    %c2_i32_104 = arith.constant 2 : i32
    %334 = arith.muli %333, %c2_i32_104 : i32
    %335 = arith.index_cast %334 : i32 to index
    %c0_105 = arith.constant 0 : index
    %336 = vector.load %arg9[%335, %c0_105] : memref<16x256xf32, #tpu.memory_space<vmem>>, vector<2x256xf32>
    %337 = vector.extract_strided_slice %329 {offsets = [0, 0], sizes = [2, 128], strides = [1, 1]} : vector<2x256xf32> to vector<2x128xf32>
    %338 = vector.extract_strided_slice %332 {offsets = [0, 0], sizes = [2, 128], strides = [1, 1]} : vector<2x256xf32> to vector<2x128xf32>
    %339 = arith.addf %337, %338 : vector<2x128xf32>
    %340 = vector.extract_strided_slice %329 {offsets = [0, 128], sizes = [2, 128], strides = [1, 1]} : vector<2x256xf32> to vector<2x128xf32>
    %341 = vector.extract_strided_slice %336 {offsets = [0, 128], sizes = [2, 128], strides = [1, 1]} : vector<2x256xf32> to vector<2x128xf32>
    %342 = arith.addf %340, %341 : vector<2x128xf32>
    %343 = arith.negf %339 : vector<2x128xf32>
    %344 = math.exp %343 : vector<2x128xf32>
    %cst_106 = arith.constant 1.000000e+00 : f32
    %345 = vector.broadcast %cst_106 : f32 to vector<2x128xf32>
    %346 = arith.addf %345, %344 : vector<2x128xf32>
    %347 = arith.divf %345, %346 : vector<2x128xf32>
    %348 = math.tanh %339 : vector<2x128xf32>
    %349 = vector.extract_strided_slice %347 {offsets = [0, 32], sizes = [2, 32], strides = [1, 1]} : vector<2x128xf32> to vector<2x32xf32>
    %350 = arith.mulf %349, %301 : vector<2x32xf32>
    %351 = vector.extract_strided_slice %347 {offsets = [0, 0], sizes = [2, 32], strides = [1, 1]} : vector<2x128xf32> to vector<2x32xf32>
    %352 = vector.extract_strided_slice %348 {offsets = [0, 64], sizes = [2, 32], strides = [1, 1]} : vector<2x128xf32> to vector<2x32xf32>
    %353 = arith.mulf %351, %352 : vector<2x32xf32>
    %354 = arith.addf %350, %353 : vector<2x32xf32>
    %355 = vector.extract_strided_slice %347 {offsets = [0, 96], sizes = [2, 32], strides = [1, 1]} : vector<2x128xf32> to vector<2x32xf32>
    %356 = math.tanh %354 : vector<2x32xf32>
    %357 = arith.mulf %355, %356 : vector<2x32xf32>
    %358 = arith.negf %342 : vector<2x128xf32>
    %359 = math.exp %358 : vector<2x128xf32>
    %cst_107 = arith.constant 1.000000e+00 : f32
    %360 = vector.broadcast %cst_107 : f32 to vector<2x128xf32>
    %361 = arith.addf %360, %359 : vector<2x128xf32>
    %362 = arith.divf %360, %361 : vector<2x128xf32>
    %363 = math.tanh %342 : vector<2x128xf32>
    %364 = vector.extract_strided_slice %362 {offsets = [0, 32], sizes = [2, 32], strides = [1, 1]} : vector<2x128xf32> to vector<2x32xf32>
    %365 = arith.mulf %364, %316 : vector<2x32xf32>
    %366 = vector.extract_strided_slice %362 {offsets = [0, 0], sizes = [2, 32], strides = [1, 1]} : vector<2x128xf32> to vector<2x32xf32>
    %367 = vector.extract_strided_slice %363 {offsets = [0, 64], sizes = [2, 32], strides = [1, 1]} : vector<2x128xf32> to vector<2x32xf32>
    %368 = arith.mulf %366, %367 : vector<2x32xf32>
    %369 = arith.addf %365, %368 : vector<2x32xf32>
    %370 = vector.extract_strided_slice %362 {offsets = [0, 96], sizes = [2, 32], strides = [1, 1]} : vector<2x128xf32> to vector<2x32xf32>
    %371 = math.tanh %369 : vector<2x32xf32>
    %372 = arith.mulf %370, %371 : vector<2x32xf32>
    %c2_i32_108 = arith.constant 2 : i32
    %373 = arith.muli %c6_i32, %c2_i32_108 : i32
    %374 = arith.index_cast %373 : i32 to index
    %c0_109 = arith.constant 0 : index
    %375 = vector.load %arg10[%374, %c0_109] : memref<16x64xf32, #tpu.memory_space<vmem>>, vector<2x32xf32>
    tpu.vector_store %arg10[%374, %c0_109], %357 {strides = array<i32>} : memref<16x64xf32, #tpu.memory_space<vmem>>, vector<2x32xf32>,
    %c7_i32_110 = arith.constant 7 : i32
    %376 = arith.subi %c7_i32_110, %c6_i32 : i32
    %c2_i32_111 = arith.constant 2 : i32
    %377 = arith.muli %376, %c2_i32_111 : i32
    %378 = arith.index_cast %377 : i32 to index
    %c32_112 = arith.constant 32 : index
    %379 = vector.load %arg10[%378, %c32_112] : memref<16x64xf32, #tpu.memory_space<vmem>>, vector<2x32xf32>
    tpu.vector_store %arg10[%378, %c32_112], %372 {strides = array<i32>} : memref<16x64xf32, #tpu.memory_space<vmem>>, vector<2x32xf32>,
    %380 = tpu.concatenate %357, %372 in 1 : vector<2x32xf32>, vector<2x32xf32> -> vector<2x64xf32>
    %c7_i32_113 = arith.constant 7 : i32
    %c0_114 = arith.constant 0 : index
    %c0_115 = arith.constant 0 : index
    %381 = vector.load %arg4[%c0_114, %c0_115] : memref<64x256xf32, #tpu.memory_space<vmem>>, vector<64x256xf32>
    %cst_116 = arith.constant dense<0.000000e+00> : vector<2x256xf32>
    %382 = tpu.matmul %380, %381, %cst_116 {dimension_numbers = #tpu.dot_dimension_numbers<[1], [0], [0], [1], [0, 0, 1, 1], [], []>} : vector<2x64xf32>, vector<64x256xf32>, vector<2x256xf32> -> vector<2x256xf32>
    %c2_i32_117 = arith.constant 2 : i32
    %383 = arith.muli %c7_i32_113, %c2_i32_117 : i32
    %384 = arith.index_cast %383 : i32 to index
    %c0_118 = arith.constant 0 : index
    %385 = vector.load %arg9[%384, %c0_118] : memref<16x256xf32, #tpu.memory_space<vmem>>, vector<2x256xf32>
    %c7_i32_119 = arith.constant 7 : i32
    %386 = arith.subi %c7_i32_119, %c7_i32_113 : i32
    %c2_i32_120 = arith.constant 2 : i32
    %387 = arith.muli %386, %c2_i32_120 : i32
    %388 = arith.index_cast %387 : i32 to index
    %c0_121 = arith.constant 0 : index
    %389 = vector.load %arg9[%388, %c0_121] : memref<16x256xf32, #tpu.memory_space<vmem>>, vector<2x256xf32>
    %390 = vector.extract_strided_slice %382 {offsets = [0, 0], sizes = [2, 128], strides = [1, 1]} : vector<2x256xf32> to vector<2x128xf32>
    %391 = vector.extract_strided_slice %385 {offsets = [0, 0], sizes = [2, 128], strides = [1, 1]} : vector<2x256xf32> to vector<2x128xf32>
    %392 = arith.addf %390, %391 : vector<2x128xf32>
    %393 = vector.extract_strided_slice %382 {offsets = [0, 128], sizes = [2, 128], strides = [1, 1]} : vector<2x256xf32> to vector<2x128xf32>
    %394 = vector.extract_strided_slice %389 {offsets = [0, 128], sizes = [2, 128], strides = [1, 1]} : vector<2x256xf32> to vector<2x128xf32>
    %395 = arith.addf %393, %394 : vector<2x128xf32>
    %396 = arith.negf %392 : vector<2x128xf32>
    %397 = math.exp %396 : vector<2x128xf32>
    %cst_122 = arith.constant 1.000000e+00 : f32
    %398 = vector.broadcast %cst_122 : f32 to vector<2x128xf32>
    %399 = arith.addf %398, %397 : vector<2x128xf32>
    %400 = arith.divf %398, %399 : vector<2x128xf32>
    %401 = math.tanh %392 : vector<2x128xf32>
    %402 = vector.extract_strided_slice %400 {offsets = [0, 32], sizes = [2, 32], strides = [1, 1]} : vector<2x128xf32> to vector<2x32xf32>
    %403 = arith.mulf %402, %354 : vector<2x32xf32>
    %404 = vector.extract_strided_slice %400 {offsets = [0, 0], sizes = [2, 32], strides = [1, 1]} : vector<2x128xf32> to vector<2x32xf32>
    %405 = vector.extract_strided_slice %401 {offsets = [0, 64], sizes = [2, 32], strides = [1, 1]} : vector<2x128xf32> to vector<2x32xf32>
    %406 = arith.mulf %404, %405 : vector<2x32xf32>
    %407 = arith.addf %403, %406 : vector<2x32xf32>
    %408 = vector.extract_strided_slice %400 {offsets = [0, 96], sizes = [2, 32], strides = [1, 1]} : vector<2x128xf32> to vector<2x32xf32>
    %409 = math.tanh %407 : vector<2x32xf32>
    %410 = arith.mulf %408, %409 : vector<2x32xf32>
    %411 = arith.negf %395 : vector<2x128xf32>
    %412 = math.exp %411 : vector<2x128xf32>
    %cst_123 = arith.constant 1.000000e+00 : f32
    %413 = vector.broadcast %cst_123 : f32 to vector<2x128xf32>
    %414 = arith.addf %413, %412 : vector<2x128xf32>
    %415 = arith.divf %413, %414 : vector<2x128xf32>
    %416 = math.tanh %395 : vector<2x128xf32>
    %417 = vector.extract_strided_slice %415 {offsets = [0, 32], sizes = [2, 32], strides = [1, 1]} : vector<2x128xf32> to vector<2x32xf32>
    %418 = arith.mulf %417, %369 : vector<2x32xf32>
    %419 = vector.extract_strided_slice %415 {offsets = [0, 0], sizes = [2, 32], strides = [1, 1]} : vector<2x128xf32> to vector<2x32xf32>
    %420 = vector.extract_strided_slice %416 {offsets = [0, 64], sizes = [2, 32], strides = [1, 1]} : vector<2x128xf32> to vector<2x32xf32>
    %421 = arith.mulf %419, %420 : vector<2x32xf32>
    %422 = arith.addf %418, %421 : vector<2x32xf32>
    %423 = vector.extract_strided_slice %415 {offsets = [0, 96], sizes = [2, 32], strides = [1, 1]} : vector<2x128xf32> to vector<2x32xf32>
    %424 = math.tanh %422 : vector<2x32xf32>
    %425 = arith.mulf %423, %424 : vector<2x32xf32>
    %c2_i32_124 = arith.constant 2 : i32
    %426 = arith.muli %c7_i32_113, %c2_i32_124 : i32
    %427 = arith.index_cast %426 : i32 to index
    %c0_125 = arith.constant 0 : index
    %428 = vector.load %arg10[%427, %c0_125] : memref<16x64xf32, #tpu.memory_space<vmem>>, vector<2x32xf32>
    tpu.vector_store %arg10[%427, %c0_125], %410 {strides = array<i32>} : memref<16x64xf32, #tpu.memory_space<vmem>>, vector<2x32xf32>,
    %c7_i32_126 = arith.constant 7 : i32
    %429 = arith.subi %c7_i32_126, %c7_i32_113 : i32
    %c2_i32_127 = arith.constant 2 : i32
    %430 = arith.muli %429, %c2_i32_127 : i32
    %431 = arith.index_cast %430 : i32 to index
    %c32_128 = arith.constant 32 : index
    %432 = vector.load %arg10[%431, %c32_128] : memref<16x64xf32, #tpu.memory_space<vmem>>, vector<2x32xf32>
    tpu.vector_store %arg10[%431, %c32_128], %425 {strides = array<i32>} : memref<16x64xf32, #tpu.memory_space<vmem>>, vector<2x32xf32>,
    %433 = tpu.concatenate %410, %425 in 1 : vector<2x32xf32>, vector<2x32xf32> -> vector<2x64xf32>
    %c8_i32 = arith.constant 8 : i32
    %c0_129 = arith.constant 0 : index
    %c0_130 = arith.constant 0 : index
    %434 = vector.load %arg10[%c0_129, %c0_130] : memref<16x64xf32, #tpu.memory_space<vmem>>, vector<16x64xf32>
    %c0_131 = arith.constant 0 : index
    %c0_132 = arith.constant 0 : index
    %435 = vector.load %arg5[%c0_131, %c0_132] : memref<64x256xf32, #tpu.memory_space<vmem>>, vector<64x256xf32>
    %cst_133 = arith.constant dense<0.000000e+00> : vector<16x256xf32>
    %436 = tpu.matmul %434, %435, %cst_133 {dimension_numbers = #tpu.dot_dimension_numbers<[1], [0], [0], [1], [0, 0, 1, 1], [], []>} : vector<16x64xf32>, vector<64x256xf32>, vector<16x256xf32> -> vector<16x256xf32>
    %c0_134 = arith.constant 0 : index
    %c0_135 = arith.constant 0 : index
    %437 = vector.load %arg6[%c0_134, %c0_135] : memref<1x256xf32, #tpu.memory_space<vmem>>, vector<1x256xf32>
    %438 = vector.broadcast %437 : vector<1x256xf32> to vector<16x256xf32>
    %439 = arith.addf %436, %438 : vector<16x256xf32>
    %c0_136 = arith.constant 0 : index
    %c0_137 = arith.constant 0 : index
    %440 = vector.load %arg9[%c0_136, %c0_137] : memref<16x256xf32, #tpu.memory_space<vmem>>, vector<16x256xf32>
    tpu.vector_store %arg9[%c0_136, %c0_137], %439 {strides = array<i32>} : memref<16x256xf32, #tpu.memory_space<vmem>>, vector<16x256xf32>,
    %cst_138 = arith.constant 0.000000e+00 : f32
    %441 = vector.broadcast %cst_138 : f32 to vector<2x64xf32>
    %cst_139 = arith.constant 0.000000e+00 : f32
    %442 = vector.broadcast %cst_139 : f32 to vector<2x32xf32>
    %cst_140 = arith.constant 0.000000e+00 : f32
    %443 = vector.broadcast %cst_140 : f32 to vector<2x32xf32>
    %c0_i32_141 = arith.constant 0 : i32
    %c0_142 = arith.constant 0 : index
    %c0_143 = arith.constant 0 : index
    %444 = vector.load %arg7[%c0_142, %c0_143] : memref<64x256xf32, #tpu.memory_space<vmem>>, vector<64x256xf32>
    %cst_144 = arith.constant dense<0.000000e+00> : vector<2x256xf32>
    %445 = tpu.matmul %441, %444, %cst_144 {dimension_numbers = #tpu.dot_dimension_numbers<[1], [0], [0], [1], [0, 0, 1, 1], [], []>} : vector<2x64xf32>, vector<64x256xf32>, vector<2x256xf32> -> vector<2x256xf32>
    %c2_i32_145 = arith.constant 2 : i32
    %446 = arith.muli %c0_i32_141, %c2_i32_145 : i32
    %447 = arith.index_cast %446 : i32 to index
    %c0_146 = arith.constant 0 : index
    %448 = vector.load %arg9[%447, %c0_146] : memref<16x256xf32, #tpu.memory_space<vmem>>, vector<2x256xf32>
    %c7_i32_147 = arith.constant 7 : i32
    %449 = arith.subi %c7_i32_147, %c0_i32_141 : i32
    %c2_i32_148 = arith.constant 2 : i32
    %450 = arith.muli %449, %c2_i32_148 : i32
    %451 = arith.index_cast %450 : i32 to index
    %c0_149 = arith.constant 0 : index
    %452 = vector.load %arg9[%451, %c0_149] : memref<16x256xf32, #tpu.memory_space<vmem>>, vector<2x256xf32>
    %453 = vector.extract_strided_slice %445 {offsets = [0, 0], sizes = [2, 128], strides = [1, 1]} : vector<2x256xf32> to vector<2x128xf32>
    %454 = vector.extract_strided_slice %448 {offsets = [0, 0], sizes = [2, 128], strides = [1, 1]} : vector<2x256xf32> to vector<2x128xf32>
    %455 = arith.addf %453, %454 : vector<2x128xf32>
    %456 = vector.extract_strided_slice %445 {offsets = [0, 128], sizes = [2, 128], strides = [1, 1]} : vector<2x256xf32> to vector<2x128xf32>
    %457 = vector.extract_strided_slice %452 {offsets = [0, 128], sizes = [2, 128], strides = [1, 1]} : vector<2x256xf32> to vector<2x128xf32>
    %458 = arith.addf %456, %457 : vector<2x128xf32>
    %459 = arith.negf %455 : vector<2x128xf32>
    %460 = math.exp %459 : vector<2x128xf32>
    %cst_150 = arith.constant 1.000000e+00 : f32
    %461 = vector.broadcast %cst_150 : f32 to vector<2x128xf32>
    %462 = arith.addf %461, %460 : vector<2x128xf32>
    %463 = arith.divf %461, %462 : vector<2x128xf32>
    %464 = math.tanh %455 : vector<2x128xf32>
    %465 = vector.extract_strided_slice %463 {offsets = [0, 32], sizes = [2, 32], strides = [1, 1]} : vector<2x128xf32> to vector<2x32xf32>
    %466 = arith.mulf %465, %442 : vector<2x32xf32>
    %467 = vector.extract_strided_slice %463 {offsets = [0, 0], sizes = [2, 32], strides = [1, 1]} : vector<2x128xf32> to vector<2x32xf32>
    %468 = vector.extract_strided_slice %464 {offsets = [0, 64], sizes = [2, 32], strides = [1, 1]} : vector<2x128xf32> to vector<2x32xf32>
    %469 = arith.mulf %467, %468 : vector<2x32xf32>
    %470 = arith.addf %466, %469 : vector<2x32xf32>
    %471 = vector.extract_strided_slice %463 {offsets = [0, 96], sizes = [2, 32], strides = [1, 1]} : vector<2x128xf32> to vector<2x32xf32>
    %472 = math.tanh %470 : vector<2x32xf32>
    %473 = arith.mulf %471, %472 : vector<2x32xf32>
    %474 = arith.negf %458 : vector<2x128xf32>
    %475 = math.exp %474 : vector<2x128xf32>
    %cst_151 = arith.constant 1.000000e+00 : f32
    %476 = vector.broadcast %cst_151 : f32 to vector<2x128xf32>
    %477 = arith.addf %476, %475 : vector<2x128xf32>
    %478 = arith.divf %476, %477 : vector<2x128xf32>
    %479 = math.tanh %458 : vector<2x128xf32>
    %480 = vector.extract_strided_slice %478 {offsets = [0, 32], sizes = [2, 32], strides = [1, 1]} : vector<2x128xf32> to vector<2x32xf32>
    %481 = arith.mulf %480, %443 : vector<2x32xf32>
    %482 = vector.extract_strided_slice %478 {offsets = [0, 0], sizes = [2, 32], strides = [1, 1]} : vector<2x128xf32> to vector<2x32xf32>
    %483 = vector.extract_strided_slice %479 {offsets = [0, 64], sizes = [2, 32], strides = [1, 1]} : vector<2x128xf32> to vector<2x32xf32>
    %484 = arith.mulf %482, %483 : vector<2x32xf32>
    %485 = arith.addf %481, %484 : vector<2x32xf32>
    %486 = vector.extract_strided_slice %478 {offsets = [0, 96], sizes = [2, 32], strides = [1, 1]} : vector<2x128xf32> to vector<2x32xf32>
    %487 = math.tanh %485 : vector<2x32xf32>
    %488 = arith.mulf %486, %487 : vector<2x32xf32>
    %c2_i32_152 = arith.constant 2 : i32
    %489 = arith.muli %c0_i32_141, %c2_i32_152 : i32
    %490 = arith.index_cast %489 : i32 to index
    %c0_153 = arith.constant 0 : index
    %491 = vector.load %arg8[%490, %c0_153] : memref<16x64xf32, #tpu.memory_space<vmem>>, vector<2x32xf32>
    tpu.vector_store %arg8[%490, %c0_153], %473 {strides = array<i32>} : memref<16x64xf32, #tpu.memory_space<vmem>>, vector<2x32xf32>,
    %c7_i32_154 = arith.constant 7 : i32
    %492 = arith.subi %c7_i32_154, %c0_i32_141 : i32
    %c2_i32_155 = arith.constant 2 : i32
    %493 = arith.muli %492, %c2_i32_155 : i32
    %494 = arith.index_cast %493 : i32 to index
    %c32_156 = arith.constant 32 : index
    %495 = vector.load %arg8[%494, %c32_156] : memref<16x64xf32, #tpu.memory_space<vmem>>, vector<2x32xf32>
    tpu.vector_store %arg8[%494, %c32_156], %488 {strides = array<i32>} : memref<16x64xf32, #tpu.memory_space<vmem>>, vector<2x32xf32>,
    %496 = tpu.concatenate %473, %488 in 1 : vector<2x32xf32>, vector<2x32xf32> -> vector<2x64xf32>
    %c1_i32_157 = arith.constant 1 : i32
    %c0_158 = arith.constant 0 : index
    %c0_159 = arith.constant 0 : index
    %497 = vector.load %arg7[%c0_158, %c0_159] : memref<64x256xf32, #tpu.memory_space<vmem>>, vector<64x256xf32>
    %cst_160 = arith.constant dense<0.000000e+00> : vector<2x256xf32>
    %498 = tpu.matmul %496, %497, %cst_160 {dimension_numbers = #tpu.dot_dimension_numbers<[1], [0], [0], [1], [0, 0, 1, 1], [], []>} : vector<2x64xf32>, vector<64x256xf32>, vector<2x256xf32> -> vector<2x256xf32>
    %c2_i32_161 = arith.constant 2 : i32
    %499 = arith.muli %c1_i32_157, %c2_i32_161 : i32
    %500 = arith.index_cast %499 : i32 to index
    %c0_162 = arith.constant 0 : index
    %501 = vector.load %arg9[%500, %c0_162] : memref<16x256xf32, #tpu.memory_space<vmem>>, vector<2x256xf32>
    %c7_i32_163 = arith.constant 7 : i32
    %502 = arith.subi %c7_i32_163, %c1_i32_157 : i32
    %c2_i32_164 = arith.constant 2 : i32
    %503 = arith.muli %502, %c2_i32_164 : i32
    %504 = arith.index_cast %503 : i32 to index
    %c0_165 = arith.constant 0 : index
    %505 = vector.load %arg9[%504, %c0_165] : memref<16x256xf32, #tpu.memory_space<vmem>>, vector<2x256xf32>
    %506 = vector.extract_strided_slice %498 {offsets = [0, 0], sizes = [2, 128], strides = [1, 1]} : vector<2x256xf32> to vector<2x128xf32>
    %507 = vector.extract_strided_slice %501 {offsets = [0, 0], sizes = [2, 128], strides = [1, 1]} : vector<2x256xf32> to vector<2x128xf32>
    %508 = arith.addf %506, %507 : vector<2x128xf32>
    %509 = vector.extract_strided_slice %498 {offsets = [0, 128], sizes = [2, 128], strides = [1, 1]} : vector<2x256xf32> to vector<2x128xf32>
    %510 = vector.extract_strided_slice %505 {offsets = [0, 128], sizes = [2, 128], strides = [1, 1]} : vector<2x256xf32> to vector<2x128xf32>
    %511 = arith.addf %509, %510 : vector<2x128xf32>
    %512 = arith.negf %508 : vector<2x128xf32>
    %513 = math.exp %512 : vector<2x128xf32>
    %cst_166 = arith.constant 1.000000e+00 : f32
    %514 = vector.broadcast %cst_166 : f32 to vector<2x128xf32>
    %515 = arith.addf %514, %513 : vector<2x128xf32>
    %516 = arith.divf %514, %515 : vector<2x128xf32>
    %517 = math.tanh %508 : vector<2x128xf32>
    %518 = vector.extract_strided_slice %516 {offsets = [0, 32], sizes = [2, 32], strides = [1, 1]} : vector<2x128xf32> to vector<2x32xf32>
    %519 = arith.mulf %518, %470 : vector<2x32xf32>
    %520 = vector.extract_strided_slice %516 {offsets = [0, 0], sizes = [2, 32], strides = [1, 1]} : vector<2x128xf32> to vector<2x32xf32>
    %521 = vector.extract_strided_slice %517 {offsets = [0, 64], sizes = [2, 32], strides = [1, 1]} : vector<2x128xf32> to vector<2x32xf32>
    %522 = arith.mulf %520, %521 : vector<2x32xf32>
    %523 = arith.addf %519, %522 : vector<2x32xf32>
    %524 = vector.extract_strided_slice %516 {offsets = [0, 96], sizes = [2, 32], strides = [1, 1]} : vector<2x128xf32> to vector<2x32xf32>
    %525 = math.tanh %523 : vector<2x32xf32>
    %526 = arith.mulf %524, %525 : vector<2x32xf32>
    %527 = arith.negf %511 : vector<2x128xf32>
    %528 = math.exp %527 : vector<2x128xf32>
    %cst_167 = arith.constant 1.000000e+00 : f32
    %529 = vector.broadcast %cst_167 : f32 to vector<2x128xf32>
    %530 = arith.addf %529, %528 : vector<2x128xf32>
    %531 = arith.divf %529, %530 : vector<2x128xf32>
    %532 = math.tanh %511 : vector<2x128xf32>
    %533 = vector.extract_strided_slice %531 {offsets = [0, 32], sizes = [2, 32], strides = [1, 1]} : vector<2x128xf32> to vector<2x32xf32>
    %534 = arith.mulf %533, %485 : vector<2x32xf32>
    %535 = vector.extract_strided_slice %531 {offsets = [0, 0], sizes = [2, 32], strides = [1, 1]} : vector<2x128xf32> to vector<2x32xf32>
    %536 = vector.extract_strided_slice %532 {offsets = [0, 64], sizes = [2, 32], strides = [1, 1]} : vector<2x128xf32> to vector<2x32xf32>
    %537 = arith.mulf %535, %536 : vector<2x32xf32>
    %538 = arith.addf %534, %537 : vector<2x32xf32>
    %539 = vector.extract_strided_slice %531 {offsets = [0, 96], sizes = [2, 32], strides = [1, 1]} : vector<2x128xf32> to vector<2x32xf32>
    %540 = math.tanh %538 : vector<2x32xf32>
    %541 = arith.mulf %539, %540 : vector<2x32xf32>
    %c2_i32_168 = arith.constant 2 : i32
    %542 = arith.muli %c1_i32_157, %c2_i32_168 : i32
    %543 = arith.index_cast %542 : i32 to index
    %c0_169 = arith.constant 0 : index
    %544 = vector.load %arg8[%543, %c0_169] : memref<16x64xf32, #tpu.memory_space<vmem>>, vector<2x32xf32>
    tpu.vector_store %arg8[%543, %c0_169], %526 {strides = array<i32>} : memref<16x64xf32, #tpu.memory_space<vmem>>, vector<2x32xf32>,
    %c7_i32_170 = arith.constant 7 : i32
    %545 = arith.subi %c7_i32_170, %c1_i32_157 : i32
    %c2_i32_171 = arith.constant 2 : i32
    %546 = arith.muli %545, %c2_i32_171 : i32
    %547 = arith.index_cast %546 : i32 to index
    %c32_172 = arith.constant 32 : index
    %548 = vector.load %arg8[%547, %c32_172] : memref<16x64xf32, #tpu.memory_space<vmem>>, vector<2x32xf32>
    tpu.vector_store %arg8[%547, %c32_172], %541 {strides = array<i32>} : memref<16x64xf32, #tpu.memory_space<vmem>>, vector<2x32xf32>,
    %549 = tpu.concatenate %526, %541 in 1 : vector<2x32xf32>, vector<2x32xf32> -> vector<2x64xf32>
    %c2_i32_173 = arith.constant 2 : i32
    %c0_174 = arith.constant 0 : index
    %c0_175 = arith.constant 0 : index
    %550 = vector.load %arg7[%c0_174, %c0_175] : memref<64x256xf32, #tpu.memory_space<vmem>>, vector<64x256xf32>
    %cst_176 = arith.constant dense<0.000000e+00> : vector<2x256xf32>
    %551 = tpu.matmul %549, %550, %cst_176 {dimension_numbers = #tpu.dot_dimension_numbers<[1], [0], [0], [1], [0, 0, 1, 1], [], []>} : vector<2x64xf32>, vector<64x256xf32>, vector<2x256xf32> -> vector<2x256xf32>
    %c2_i32_177 = arith.constant 2 : i32
    %552 = arith.muli %c2_i32_173, %c2_i32_177 : i32
    %553 = arith.index_cast %552 : i32 to index
    %c0_178 = arith.constant 0 : index
    %554 = vector.load %arg9[%553, %c0_178] : memref<16x256xf32, #tpu.memory_space<vmem>>, vector<2x256xf32>
    %c7_i32_179 = arith.constant 7 : i32
    %555 = arith.subi %c7_i32_179, %c2_i32_173 : i32
    %c2_i32_180 = arith.constant 2 : i32
    %556 = arith.muli %555, %c2_i32_180 : i32
    %557 = arith.index_cast %556 : i32 to index
    %c0_181 = arith.constant 0 : index
    %558 = vector.load %arg9[%557, %c0_181] : memref<16x256xf32, #tpu.memory_space<vmem>>, vector<2x256xf32>
    %559 = vector.extract_strided_slice %551 {offsets = [0, 0], sizes = [2, 128], strides = [1, 1]} : vector<2x256xf32> to vector<2x128xf32>
    %560 = vector.extract_strided_slice %554 {offsets = [0, 0], sizes = [2, 128], strides = [1, 1]} : vector<2x256xf32> to vector<2x128xf32>
    %561 = arith.addf %559, %560 : vector<2x128xf32>
    %562 = vector.extract_strided_slice %551 {offsets = [0, 128], sizes = [2, 128], strides = [1, 1]} : vector<2x256xf32> to vector<2x128xf32>
    %563 = vector.extract_strided_slice %558 {offsets = [0, 128], sizes = [2, 128], strides = [1, 1]} : vector<2x256xf32> to vector<2x128xf32>
    %564 = arith.addf %562, %563 : vector<2x128xf32>
    %565 = arith.negf %561 : vector<2x128xf32>
    %566 = math.exp %565 : vector<2x128xf32>
    %cst_182 = arith.constant 1.000000e+00 : f32
    %567 = vector.broadcast %cst_182 : f32 to vector<2x128xf32>
    %568 = arith.addf %567, %566 : vector<2x128xf32>
    %569 = arith.divf %567, %568 : vector<2x128xf32>
    %570 = math.tanh %561 : vector<2x128xf32>
    %571 = vector.extract_strided_slice %569 {offsets = [0, 32], sizes = [2, 32], strides = [1, 1]} : vector<2x128xf32> to vector<2x32xf32>
    %572 = arith.mulf %571, %523 : vector<2x32xf32>
    %573 = vector.extract_strided_slice %569 {offsets = [0, 0], sizes = [2, 32], strides = [1, 1]} : vector<2x128xf32> to vector<2x32xf32>
    %574 = vector.extract_strided_slice %570 {offsets = [0, 64], sizes = [2, 32], strides = [1, 1]} : vector<2x128xf32> to vector<2x32xf32>
    %575 = arith.mulf %573, %574 : vector<2x32xf32>
    %576 = arith.addf %572, %575 : vector<2x32xf32>
    %577 = vector.extract_strided_slice %569 {offsets = [0, 96], sizes = [2, 32], strides = [1, 1]} : vector<2x128xf32> to vector<2x32xf32>
    %578 = math.tanh %576 : vector<2x32xf32>
    %579 = arith.mulf %577, %578 : vector<2x32xf32>
    %580 = arith.negf %564 : vector<2x128xf32>
    %581 = math.exp %580 : vector<2x128xf32>
    %cst_183 = arith.constant 1.000000e+00 : f32
    %582 = vector.broadcast %cst_183 : f32 to vector<2x128xf32>
    %583 = arith.addf %582, %581 : vector<2x128xf32>
    %584 = arith.divf %582, %583 : vector<2x128xf32>
    %585 = math.tanh %564 : vector<2x128xf32>
    %586 = vector.extract_strided_slice %584 {offsets = [0, 32], sizes = [2, 32], strides = [1, 1]} : vector<2x128xf32> to vector<2x32xf32>
    %587 = arith.mulf %586, %538 : vector<2x32xf32>
    %588 = vector.extract_strided_slice %584 {offsets = [0, 0], sizes = [2, 32], strides = [1, 1]} : vector<2x128xf32> to vector<2x32xf32>
    %589 = vector.extract_strided_slice %585 {offsets = [0, 64], sizes = [2, 32], strides = [1, 1]} : vector<2x128xf32> to vector<2x32xf32>
    %590 = arith.mulf %588, %589 : vector<2x32xf32>
    %591 = arith.addf %587, %590 : vector<2x32xf32>
    %592 = vector.extract_strided_slice %584 {offsets = [0, 96], sizes = [2, 32], strides = [1, 1]} : vector<2x128xf32> to vector<2x32xf32>
    %593 = math.tanh %591 : vector<2x32xf32>
    %594 = arith.mulf %592, %593 : vector<2x32xf32>
    %c2_i32_184 = arith.constant 2 : i32
    %595 = arith.muli %c2_i32_173, %c2_i32_184 : i32
    %596 = arith.index_cast %595 : i32 to index
    %c0_185 = arith.constant 0 : index
    %597 = vector.load %arg8[%596, %c0_185] : memref<16x64xf32, #tpu.memory_space<vmem>>, vector<2x32xf32>
    tpu.vector_store %arg8[%596, %c0_185], %579 {strides = array<i32>} : memref<16x64xf32, #tpu.memory_space<vmem>>, vector<2x32xf32>,
    %c7_i32_186 = arith.constant 7 : i32
    %598 = arith.subi %c7_i32_186, %c2_i32_173 : i32
    %c2_i32_187 = arith.constant 2 : i32
    %599 = arith.muli %598, %c2_i32_187 : i32
    %600 = arith.index_cast %599 : i32 to index
    %c32_188 = arith.constant 32 : index
    %601 = vector.load %arg8[%600, %c32_188] : memref<16x64xf32, #tpu.memory_space<vmem>>, vector<2x32xf32>
    tpu.vector_store %arg8[%600, %c32_188], %594 {strides = array<i32>} : memref<16x64xf32, #tpu.memory_space<vmem>>, vector<2x32xf32>,
    %602 = tpu.concatenate %579, %594 in 1 : vector<2x32xf32>, vector<2x32xf32> -> vector<2x64xf32>
    %c3_i32_189 = arith.constant 3 : i32
    %c0_190 = arith.constant 0 : index
    %c0_191 = arith.constant 0 : index
    %603 = vector.load %arg7[%c0_190, %c0_191] : memref<64x256xf32, #tpu.memory_space<vmem>>, vector<64x256xf32>
    %cst_192 = arith.constant dense<0.000000e+00> : vector<2x256xf32>
    %604 = tpu.matmul %602, %603, %cst_192 {dimension_numbers = #tpu.dot_dimension_numbers<[1], [0], [0], [1], [0, 0, 1, 1], [], []>} : vector<2x64xf32>, vector<64x256xf32>, vector<2x256xf32> -> vector<2x256xf32>
    %c2_i32_193 = arith.constant 2 : i32
    %605 = arith.muli %c3_i32_189, %c2_i32_193 : i32
    %606 = arith.index_cast %605 : i32 to index
    %c0_194 = arith.constant 0 : index
    %607 = vector.load %arg9[%606, %c0_194] : memref<16x256xf32, #tpu.memory_space<vmem>>, vector<2x256xf32>
    %c7_i32_195 = arith.constant 7 : i32
    %608 = arith.subi %c7_i32_195, %c3_i32_189 : i32
    %c2_i32_196 = arith.constant 2 : i32
    %609 = arith.muli %608, %c2_i32_196 : i32
    %610 = arith.index_cast %609 : i32 to index
    %c0_197 = arith.constant 0 : index
    %611 = vector.load %arg9[%610, %c0_197] : memref<16x256xf32, #tpu.memory_space<vmem>>, vector<2x256xf32>
    %612 = vector.extract_strided_slice %604 {offsets = [0, 0], sizes = [2, 128], strides = [1, 1]} : vector<2x256xf32> to vector<2x128xf32>
    %613 = vector.extract_strided_slice %607 {offsets = [0, 0], sizes = [2, 128], strides = [1, 1]} : vector<2x256xf32> to vector<2x128xf32>
    %614 = arith.addf %612, %613 : vector<2x128xf32>
    %615 = vector.extract_strided_slice %604 {offsets = [0, 128], sizes = [2, 128], strides = [1, 1]} : vector<2x256xf32> to vector<2x128xf32>
    %616 = vector.extract_strided_slice %611 {offsets = [0, 128], sizes = [2, 128], strides = [1, 1]} : vector<2x256xf32> to vector<2x128xf32>
    %617 = arith.addf %615, %616 : vector<2x128xf32>
    %618 = arith.negf %614 : vector<2x128xf32>
    %619 = math.exp %618 : vector<2x128xf32>
    %cst_198 = arith.constant 1.000000e+00 : f32
    %620 = vector.broadcast %cst_198 : f32 to vector<2x128xf32>
    %621 = arith.addf %620, %619 : vector<2x128xf32>
    %622 = arith.divf %620, %621 : vector<2x128xf32>
    %623 = math.tanh %614 : vector<2x128xf32>
    %624 = vector.extract_strided_slice %622 {offsets = [0, 32], sizes = [2, 32], strides = [1, 1]} : vector<2x128xf32> to vector<2x32xf32>
    %625 = arith.mulf %624, %576 : vector<2x32xf32>
    %626 = vector.extract_strided_slice %622 {offsets = [0, 0], sizes = [2, 32], strides = [1, 1]} : vector<2x128xf32> to vector<2x32xf32>
    %627 = vector.extract_strided_slice %623 {offsets = [0, 64], sizes = [2, 32], strides = [1, 1]} : vector<2x128xf32> to vector<2x32xf32>
    %628 = arith.mulf %626, %627 : vector<2x32xf32>
    %629 = arith.addf %625, %628 : vector<2x32xf32>
    %630 = vector.extract_strided_slice %622 {offsets = [0, 96], sizes = [2, 32], strides = [1, 1]} : vector<2x128xf32> to vector<2x32xf32>
    %631 = math.tanh %629 : vector<2x32xf32>
    %632 = arith.mulf %630, %631 : vector<2x32xf32>
    %633 = arith.negf %617 : vector<2x128xf32>
    %634 = math.exp %633 : vector<2x128xf32>
    %cst_199 = arith.constant 1.000000e+00 : f32
    %635 = vector.broadcast %cst_199 : f32 to vector<2x128xf32>
    %636 = arith.addf %635, %634 : vector<2x128xf32>
    %637 = arith.divf %635, %636 : vector<2x128xf32>
    %638 = math.tanh %617 : vector<2x128xf32>
    %639 = vector.extract_strided_slice %637 {offsets = [0, 32], sizes = [2, 32], strides = [1, 1]} : vector<2x128xf32> to vector<2x32xf32>
    %640 = arith.mulf %639, %591 : vector<2x32xf32>
    %641 = vector.extract_strided_slice %637 {offsets = [0, 0], sizes = [2, 32], strides = [1, 1]} : vector<2x128xf32> to vector<2x32xf32>
    %642 = vector.extract_strided_slice %638 {offsets = [0, 64], sizes = [2, 32], strides = [1, 1]} : vector<2x128xf32> to vector<2x32xf32>
    %643 = arith.mulf %641, %642 : vector<2x32xf32>
    %644 = arith.addf %640, %643 : vector<2x32xf32>
    %645 = vector.extract_strided_slice %637 {offsets = [0, 96], sizes = [2, 32], strides = [1, 1]} : vector<2x128xf32> to vector<2x32xf32>
    %646 = math.tanh %644 : vector<2x32xf32>
    %647 = arith.mulf %645, %646 : vector<2x32xf32>
    %c2_i32_200 = arith.constant 2 : i32
    %648 = arith.muli %c3_i32_189, %c2_i32_200 : i32
    %649 = arith.index_cast %648 : i32 to index
    %c0_201 = arith.constant 0 : index
    %650 = vector.load %arg8[%649, %c0_201] : memref<16x64xf32, #tpu.memory_space<vmem>>, vector<2x32xf32>
    tpu.vector_store %arg8[%649, %c0_201], %632 {strides = array<i32>} : memref<16x64xf32, #tpu.memory_space<vmem>>, vector<2x32xf32>,
    %c7_i32_202 = arith.constant 7 : i32
    %651 = arith.subi %c7_i32_202, %c3_i32_189 : i32
    %c2_i32_203 = arith.constant 2 : i32
    %652 = arith.muli %651, %c2_i32_203 : i32
    %653 = arith.index_cast %652 : i32 to index
    %c32_204 = arith.constant 32 : index
    %654 = vector.load %arg8[%653, %c32_204] : memref<16x64xf32, #tpu.memory_space<vmem>>, vector<2x32xf32>
    tpu.vector_store %arg8[%653, %c32_204], %647 {strides = array<i32>} : memref<16x64xf32, #tpu.memory_space<vmem>>, vector<2x32xf32>,
    %655 = tpu.concatenate %632, %647 in 1 : vector<2x32xf32>, vector<2x32xf32> -> vector<2x64xf32>
    %c4_i32_205 = arith.constant 4 : i32
    %c0_206 = arith.constant 0 : index
    %c0_207 = arith.constant 0 : index
    %656 = vector.load %arg7[%c0_206, %c0_207] : memref<64x256xf32, #tpu.memory_space<vmem>>, vector<64x256xf32>
    %cst_208 = arith.constant dense<0.000000e+00> : vector<2x256xf32>
    %657 = tpu.matmul %655, %656, %cst_208 {dimension_numbers = #tpu.dot_dimension_numbers<[1], [0], [0], [1], [0, 0, 1, 1], [], []>} : vector<2x64xf32>, vector<64x256xf32>, vector<2x256xf32> -> vector<2x256xf32>
    %c2_i32_209 = arith.constant 2 : i32
    %658 = arith.muli %c4_i32_205, %c2_i32_209 : i32
    %659 = arith.index_cast %658 : i32 to index
    %c0_210 = arith.constant 0 : index
    %660 = vector.load %arg9[%659, %c0_210] : memref<16x256xf32, #tpu.memory_space<vmem>>, vector<2x256xf32>
    %c7_i32_211 = arith.constant 7 : i32
    %661 = arith.subi %c7_i32_211, %c4_i32_205 : i32
    %c2_i32_212 = arith.constant 2 : i32
    %662 = arith.muli %661, %c2_i32_212 : i32
    %663 = arith.index_cast %662 : i32 to index
    %c0_213 = arith.constant 0 : index
    %664 = vector.load %arg9[%663, %c0_213] : memref<16x256xf32, #tpu.memory_space<vmem>>, vector<2x256xf32>
    %665 = vector.extract_strided_slice %657 {offsets = [0, 0], sizes = [2, 128], strides = [1, 1]} : vector<2x256xf32> to vector<2x128xf32>
    %666 = vector.extract_strided_slice %660 {offsets = [0, 0], sizes = [2, 128], strides = [1, 1]} : vector<2x256xf32> to vector<2x128xf32>
    %667 = arith.addf %665, %666 : vector<2x128xf32>
    %668 = vector.extract_strided_slice %657 {offsets = [0, 128], sizes = [2, 128], strides = [1, 1]} : vector<2x256xf32> to vector<2x128xf32>
    %669 = vector.extract_strided_slice %664 {offsets = [0, 128], sizes = [2, 128], strides = [1, 1]} : vector<2x256xf32> to vector<2x128xf32>
    %670 = arith.addf %668, %669 : vector<2x128xf32>
    %671 = arith.negf %667 : vector<2x128xf32>
    %672 = math.exp %671 : vector<2x128xf32>
    %cst_214 = arith.constant 1.000000e+00 : f32
    %673 = vector.broadcast %cst_214 : f32 to vector<2x128xf32>
    %674 = arith.addf %673, %672 : vector<2x128xf32>
    %675 = arith.divf %673, %674 : vector<2x128xf32>
    %676 = math.tanh %667 : vector<2x128xf32>
    %677 = vector.extract_strided_slice %675 {offsets = [0, 32], sizes = [2, 32], strides = [1, 1]} : vector<2x128xf32> to vector<2x32xf32>
    %678 = arith.mulf %677, %629 : vector<2x32xf32>
    %679 = vector.extract_strided_slice %675 {offsets = [0, 0], sizes = [2, 32], strides = [1, 1]} : vector<2x128xf32> to vector<2x32xf32>
    %680 = vector.extract_strided_slice %676 {offsets = [0, 64], sizes = [2, 32], strides = [1, 1]} : vector<2x128xf32> to vector<2x32xf32>
    %681 = arith.mulf %679, %680 : vector<2x32xf32>
    %682 = arith.addf %678, %681 : vector<2x32xf32>
    %683 = vector.extract_strided_slice %675 {offsets = [0, 96], sizes = [2, 32], strides = [1, 1]} : vector<2x128xf32> to vector<2x32xf32>
    %684 = math.tanh %682 : vector<2x32xf32>
    %685 = arith.mulf %683, %684 : vector<2x32xf32>
    %686 = arith.negf %670 : vector<2x128xf32>
    %687 = math.exp %686 : vector<2x128xf32>
    %cst_215 = arith.constant 1.000000e+00 : f32
    %688 = vector.broadcast %cst_215 : f32 to vector<2x128xf32>
    %689 = arith.addf %688, %687 : vector<2x128xf32>
    %690 = arith.divf %688, %689 : vector<2x128xf32>
    %691 = math.tanh %670 : vector<2x128xf32>
    %692 = vector.extract_strided_slice %690 {offsets = [0, 32], sizes = [2, 32], strides = [1, 1]} : vector<2x128xf32> to vector<2x32xf32>
    %693 = arith.mulf %692, %644 : vector<2x32xf32>
    %694 = vector.extract_strided_slice %690 {offsets = [0, 0], sizes = [2, 32], strides = [1, 1]} : vector<2x128xf32> to vector<2x32xf32>
    %695 = vector.extract_strided_slice %691 {offsets = [0, 64], sizes = [2, 32], strides = [1, 1]} : vector<2x128xf32> to vector<2x32xf32>
    %696 = arith.mulf %694, %695 : vector<2x32xf32>
    %697 = arith.addf %693, %696 : vector<2x32xf32>
    %698 = vector.extract_strided_slice %690 {offsets = [0, 96], sizes = [2, 32], strides = [1, 1]} : vector<2x128xf32> to vector<2x32xf32>
    %699 = math.tanh %697 : vector<2x32xf32>
    %700 = arith.mulf %698, %699 : vector<2x32xf32>
    %c2_i32_216 = arith.constant 2 : i32
    %701 = arith.muli %c4_i32_205, %c2_i32_216 : i32
    %702 = arith.index_cast %701 : i32 to index
    %c0_217 = arith.constant 0 : index
    %703 = vector.load %arg8[%702, %c0_217] : memref<16x64xf32, #tpu.memory_space<vmem>>, vector<2x32xf32>
    tpu.vector_store %arg8[%702, %c0_217], %685 {strides = array<i32>} : memref<16x64xf32, #tpu.memory_space<vmem>>, vector<2x32xf32>,
    %c7_i32_218 = arith.constant 7 : i32
    %704 = arith.subi %c7_i32_218, %c4_i32_205 : i32
    %c2_i32_219 = arith.constant 2 : i32
    %705 = arith.muli %704, %c2_i32_219 : i32
    %706 = arith.index_cast %705 : i32 to index
    %c32_220 = arith.constant 32 : index
    %707 = vector.load %arg8[%706, %c32_220] : memref<16x64xf32, #tpu.memory_space<vmem>>, vector<2x32xf32>
    tpu.vector_store %arg8[%706, %c32_220], %700 {strides = array<i32>} : memref<16x64xf32, #tpu.memory_space<vmem>>, vector<2x32xf32>,
    %708 = tpu.concatenate %685, %700 in 1 : vector<2x32xf32>, vector<2x32xf32> -> vector<2x64xf32>
    %c5_i32_221 = arith.constant 5 : i32
    %c0_222 = arith.constant 0 : index
    %c0_223 = arith.constant 0 : index
    %709 = vector.load %arg7[%c0_222, %c0_223] : memref<64x256xf32, #tpu.memory_space<vmem>>, vector<64x256xf32>
    %cst_224 = arith.constant dense<0.000000e+00> : vector<2x256xf32>
    %710 = tpu.matmul %708, %709, %cst_224 {dimension_numbers = #tpu.dot_dimension_numbers<[1], [0], [0], [1], [0, 0, 1, 1], [], []>} : vector<2x64xf32>, vector<64x256xf32>, vector<2x256xf32> -> vector<2x256xf32>
    %c2_i32_225 = arith.constant 2 : i32
    %711 = arith.muli %c5_i32_221, %c2_i32_225 : i32
    %712 = arith.index_cast %711 : i32 to index
    %c0_226 = arith.constant 0 : index
    %713 = vector.load %arg9[%712, %c0_226] : memref<16x256xf32, #tpu.memory_space<vmem>>, vector<2x256xf32>
    %c7_i32_227 = arith.constant 7 : i32
    %714 = arith.subi %c7_i32_227, %c5_i32_221 : i32
    %c2_i32_228 = arith.constant 2 : i32
    %715 = arith.muli %714, %c2_i32_228 : i32
    %716 = arith.index_cast %715 : i32 to index
    %c0_229 = arith.constant 0 : index
    %717 = vector.load %arg9[%716, %c0_229] : memref<16x256xf32, #tpu.memory_space<vmem>>, vector<2x256xf32>
    %718 = vector.extract_strided_slice %710 {offsets = [0, 0], sizes = [2, 128], strides = [1, 1]} : vector<2x256xf32> to vector<2x128xf32>
    %719 = vector.extract_strided_slice %713 {offsets = [0, 0], sizes = [2, 128], strides = [1, 1]} : vector<2x256xf32> to vector<2x128xf32>
    %720 = arith.addf %718, %719 : vector<2x128xf32>
    %721 = vector.extract_strided_slice %710 {offsets = [0, 128], sizes = [2, 128], strides = [1, 1]} : vector<2x256xf32> to vector<2x128xf32>
    %722 = vector.extract_strided_slice %717 {offsets = [0, 128], sizes = [2, 128], strides = [1, 1]} : vector<2x256xf32> to vector<2x128xf32>
    %723 = arith.addf %721, %722 : vector<2x128xf32>
    %724 = arith.negf %720 : vector<2x128xf32>
    %725 = math.exp %724 : vector<2x128xf32>
    %cst_230 = arith.constant 1.000000e+00 : f32
    %726 = vector.broadcast %cst_230 : f32 to vector<2x128xf32>
    %727 = arith.addf %726, %725 : vector<2x128xf32>
    %728 = arith.divf %726, %727 : vector<2x128xf32>
    %729 = math.tanh %720 : vector<2x128xf32>
    %730 = vector.extract_strided_slice %728 {offsets = [0, 32], sizes = [2, 32], strides = [1, 1]} : vector<2x128xf32> to vector<2x32xf32>
    %731 = arith.mulf %730, %682 : vector<2x32xf32>
    %732 = vector.extract_strided_slice %728 {offsets = [0, 0], sizes = [2, 32], strides = [1, 1]} : vector<2x128xf32> to vector<2x32xf32>
    %733 = vector.extract_strided_slice %729 {offsets = [0, 64], sizes = [2, 32], strides = [1, 1]} : vector<2x128xf32> to vector<2x32xf32>
    %734 = arith.mulf %732, %733 : vector<2x32xf32>
    %735 = arith.addf %731, %734 : vector<2x32xf32>
    %736 = vector.extract_strided_slice %728 {offsets = [0, 96], sizes = [2, 32], strides = [1, 1]} : vector<2x128xf32> to vector<2x32xf32>
    %737 = math.tanh %735 : vector<2x32xf32>
    %738 = arith.mulf %736, %737 : vector<2x32xf32>
    %739 = arith.negf %723 : vector<2x128xf32>
    %740 = math.exp %739 : vector<2x128xf32>
    %cst_231 = arith.constant 1.000000e+00 : f32
    %741 = vector.broadcast %cst_231 : f32 to vector<2x128xf32>
    %742 = arith.addf %741, %740 : vector<2x128xf32>
    %743 = arith.divf %741, %742 : vector<2x128xf32>
    %744 = math.tanh %723 : vector<2x128xf32>
    %745 = vector.extract_strided_slice %743 {offsets = [0, 32], sizes = [2, 32], strides = [1, 1]} : vector<2x128xf32> to vector<2x32xf32>
    %746 = arith.mulf %745, %697 : vector<2x32xf32>
    %747 = vector.extract_strided_slice %743 {offsets = [0, 0], sizes = [2, 32], strides = [1, 1]} : vector<2x128xf32> to vector<2x32xf32>
    %748 = vector.extract_strided_slice %744 {offsets = [0, 64], sizes = [2, 32], strides = [1, 1]} : vector<2x128xf32> to vector<2x32xf32>
    %749 = arith.mulf %747, %748 : vector<2x32xf32>
    %750 = arith.addf %746, %749 : vector<2x32xf32>
    %751 = vector.extract_strided_slice %743 {offsets = [0, 96], sizes = [2, 32], strides = [1, 1]} : vector<2x128xf32> to vector<2x32xf32>
    %752 = math.tanh %750 : vector<2x32xf32>
    %753 = arith.mulf %751, %752 : vector<2x32xf32>
    %c2_i32_232 = arith.constant 2 : i32
    %754 = arith.muli %c5_i32_221, %c2_i32_232 : i32
    %755 = arith.index_cast %754 : i32 to index
    %c0_233 = arith.constant 0 : index
    %756 = vector.load %arg8[%755, %c0_233] : memref<16x64xf32, #tpu.memory_space<vmem>>, vector<2x32xf32>
    tpu.vector_store %arg8[%755, %c0_233], %738 {strides = array<i32>} : memref<16x64xf32, #tpu.memory_space<vmem>>, vector<2x32xf32>,
    %c7_i32_234 = arith.constant 7 : i32
    %757 = arith.subi %c7_i32_234, %c5_i32_221 : i32
    %c2_i32_235 = arith.constant 2 : i32
    %758 = arith.muli %757, %c2_i32_235 : i32
    %759 = arith.index_cast %758 : i32 to index
    %c32_236 = arith.constant 32 : index
    %760 = vector.load %arg8[%759, %c32_236] : memref<16x64xf32, #tpu.memory_space<vmem>>, vector<2x32xf32>
    tpu.vector_store %arg8[%759, %c32_236], %753 {strides = array<i32>} : memref<16x64xf32, #tpu.memory_space<vmem>>, vector<2x32xf32>,
    %761 = tpu.concatenate %738, %753 in 1 : vector<2x32xf32>, vector<2x32xf32> -> vector<2x64xf32>
    %c6_i32_237 = arith.constant 6 : i32
    %c0_238 = arith.constant 0 : index
    %c0_239 = arith.constant 0 : index
    %762 = vector.load %arg7[%c0_238, %c0_239] : memref<64x256xf32, #tpu.memory_space<vmem>>, vector<64x256xf32>
    %cst_240 = arith.constant dense<0.000000e+00> : vector<2x256xf32>
    %763 = tpu.matmul %761, %762, %cst_240 {dimension_numbers = #tpu.dot_dimension_numbers<[1], [0], [0], [1], [0, 0, 1, 1], [], []>} : vector<2x64xf32>, vector<64x256xf32>, vector<2x256xf32> -> vector<2x256xf32>
    %c2_i32_241 = arith.constant 2 : i32
    %764 = arith.muli %c6_i32_237, %c2_i32_241 : i32
    %765 = arith.index_cast %764 : i32 to index
    %c0_242 = arith.constant 0 : index
    %766 = vector.load %arg9[%765, %c0_242] : memref<16x256xf32, #tpu.memory_space<vmem>>, vector<2x256xf32>
    %c7_i32_243 = arith.constant 7 : i32
    %767 = arith.subi %c7_i32_243, %c6_i32_237 : i32
    %c2_i32_244 = arith.constant 2 : i32
    %768 = arith.muli %767, %c2_i32_244 : i32
    %769 = arith.index_cast %768 : i32 to index
    %c0_245 = arith.constant 0 : index
    %770 = vector.load %arg9[%769, %c0_245] : memref<16x256xf32, #tpu.memory_space<vmem>>, vector<2x256xf32>
    %771 = vector.extract_strided_slice %763 {offsets = [0, 0], sizes = [2, 128], strides = [1, 1]} : vector<2x256xf32> to vector<2x128xf32>
    %772 = vector.extract_strided_slice %766 {offsets = [0, 0], sizes = [2, 128], strides = [1, 1]} : vector<2x256xf32> to vector<2x128xf32>
    %773 = arith.addf %771, %772 : vector<2x128xf32>
    %774 = vector.extract_strided_slice %763 {offsets = [0, 128], sizes = [2, 128], strides = [1, 1]} : vector<2x256xf32> to vector<2x128xf32>
    %775 = vector.extract_strided_slice %770 {offsets = [0, 128], sizes = [2, 128], strides = [1, 1]} : vector<2x256xf32> to vector<2x128xf32>
    %776 = arith.addf %774, %775 : vector<2x128xf32>
    %777 = arith.negf %773 : vector<2x128xf32>
    %778 = math.exp %777 : vector<2x128xf32>
    %cst_246 = arith.constant 1.000000e+00 : f32
    %779 = vector.broadcast %cst_246 : f32 to vector<2x128xf32>
    %780 = arith.addf %779, %778 : vector<2x128xf32>
    %781 = arith.divf %779, %780 : vector<2x128xf32>
    %782 = math.tanh %773 : vector<2x128xf32>
    %783 = vector.extract_strided_slice %781 {offsets = [0, 32], sizes = [2, 32], strides = [1, 1]} : vector<2x128xf32> to vector<2x32xf32>
    %784 = arith.mulf %783, %735 : vector<2x32xf32>
    %785 = vector.extract_strided_slice %781 {offsets = [0, 0], sizes = [2, 32], strides = [1, 1]} : vector<2x128xf32> to vector<2x32xf32>
    %786 = vector.extract_strided_slice %782 {offsets = [0, 64], sizes = [2, 32], strides = [1, 1]} : vector<2x128xf32> to vector<2x32xf32>
    %787 = arith.mulf %785, %786 : vector<2x32xf32>
    %788 = arith.addf %784, %787 : vector<2x32xf32>
    %789 = vector.extract_strided_slice %781 {offsets = [0, 96], sizes = [2, 32], strides = [1, 1]} : vector<2x128xf32> to vector<2x32xf32>
    %790 = math.tanh %788 : vector<2x32xf32>
    %791 = arith.mulf %789, %790 : vector<2x32xf32>
    %792 = arith.negf %776 : vector<2x128xf32>
    %793 = math.exp %792 : vector<2x128xf32>
    %cst_247 = arith.constant 1.000000e+00 : f32
    %794 = vector.broadcast %cst_247 : f32 to vector<2x128xf32>
    %795 = arith.addf %794, %793 : vector<2x128xf32>
    %796 = arith.divf %794, %795 : vector<2x128xf32>
    %797 = math.tanh %776 : vector<2x128xf32>
    %798 = vector.extract_strided_slice %796 {offsets = [0, 32], sizes = [2, 32], strides = [1, 1]} : vector<2x128xf32> to vector<2x32xf32>
    %799 = arith.mulf %798, %750 : vector<2x32xf32>
    %800 = vector.extract_strided_slice %796 {offsets = [0, 0], sizes = [2, 32], strides = [1, 1]} : vector<2x128xf32> to vector<2x32xf32>
    %801 = vector.extract_strided_slice %797 {offsets = [0, 64], sizes = [2, 32], strides = [1, 1]} : vector<2x128xf32> to vector<2x32xf32>
    %802 = arith.mulf %800, %801 : vector<2x32xf32>
    %803 = arith.addf %799, %802 : vector<2x32xf32>
    %804 = vector.extract_strided_slice %796 {offsets = [0, 96], sizes = [2, 32], strides = [1, 1]} : vector<2x128xf32> to vector<2x32xf32>
    %805 = math.tanh %803 : vector<2x32xf32>
    %806 = arith.mulf %804, %805 : vector<2x32xf32>
    %c2_i32_248 = arith.constant 2 : i32
    %807 = arith.muli %c6_i32_237, %c2_i32_248 : i32
    %808 = arith.index_cast %807 : i32 to index
    %c0_249 = arith.constant 0 : index
    %809 = vector.load %arg8[%808, %c0_249] : memref<16x64xf32, #tpu.memory_space<vmem>>, vector<2x32xf32>
    tpu.vector_store %arg8[%808, %c0_249], %791 {strides = array<i32>} : memref<16x64xf32, #tpu.memory_space<vmem>>, vector<2x32xf32>,
    %c7_i32_250 = arith.constant 7 : i32
    %810 = arith.subi %c7_i32_250, %c6_i32_237 : i32
    %c2_i32_251 = arith.constant 2 : i32
    %811 = arith.muli %810, %c2_i32_251 : i32
    %812 = arith.index_cast %811 : i32 to index
    %c32_252 = arith.constant 32 : index
    %813 = vector.load %arg8[%812, %c32_252] : memref<16x64xf32, #tpu.memory_space<vmem>>, vector<2x32xf32>
    tpu.vector_store %arg8[%812, %c32_252], %806 {strides = array<i32>} : memref<16x64xf32, #tpu.memory_space<vmem>>, vector<2x32xf32>,
    %814 = tpu.concatenate %791, %806 in 1 : vector<2x32xf32>, vector<2x32xf32> -> vector<2x64xf32>
    %c7_i32_253 = arith.constant 7 : i32
    %c0_254 = arith.constant 0 : index
    %c0_255 = arith.constant 0 : index
    %815 = vector.load %arg7[%c0_254, %c0_255] : memref<64x256xf32, #tpu.memory_space<vmem>>, vector<64x256xf32>
    %cst_256 = arith.constant dense<0.000000e+00> : vector<2x256xf32>
    %816 = tpu.matmul %814, %815, %cst_256 {dimension_numbers = #tpu.dot_dimension_numbers<[1], [0], [0], [1], [0, 0, 1, 1], [], []>} : vector<2x64xf32>, vector<64x256xf32>, vector<2x256xf32> -> vector<2x256xf32>
    %c2_i32_257 = arith.constant 2 : i32
    %817 = arith.muli %c7_i32_253, %c2_i32_257 : i32
    %818 = arith.index_cast %817 : i32 to index
    %c0_258 = arith.constant 0 : index
    %819 = vector.load %arg9[%818, %c0_258] : memref<16x256xf32, #tpu.memory_space<vmem>>, vector<2x256xf32>
    %c7_i32_259 = arith.constant 7 : i32
    %820 = arith.subi %c7_i32_259, %c7_i32_253 : i32
    %c2_i32_260 = arith.constant 2 : i32
    %821 = arith.muli %820, %c2_i32_260 : i32
    %822 = arith.index_cast %821 : i32 to index
    %c0_261 = arith.constant 0 : index
    %823 = vector.load %arg9[%822, %c0_261] : memref<16x256xf32, #tpu.memory_space<vmem>>, vector<2x256xf32>
    %824 = vector.extract_strided_slice %816 {offsets = [0, 0], sizes = [2, 128], strides = [1, 1]} : vector<2x256xf32> to vector<2x128xf32>
    %825 = vector.extract_strided_slice %819 {offsets = [0, 0], sizes = [2, 128], strides = [1, 1]} : vector<2x256xf32> to vector<2x128xf32>
    %826 = arith.addf %824, %825 : vector<2x128xf32>
    %827 = vector.extract_strided_slice %816 {offsets = [0, 128], sizes = [2, 128], strides = [1, 1]} : vector<2x256xf32> to vector<2x128xf32>
    %828 = vector.extract_strided_slice %823 {offsets = [0, 128], sizes = [2, 128], strides = [1, 1]} : vector<2x256xf32> to vector<2x128xf32>
    %829 = arith.addf %827, %828 : vector<2x128xf32>
    %830 = arith.negf %826 : vector<2x128xf32>
    %831 = math.exp %830 : vector<2x128xf32>
    %cst_262 = arith.constant 1.000000e+00 : f32
    %832 = vector.broadcast %cst_262 : f32 to vector<2x128xf32>
    %833 = arith.addf %832, %831 : vector<2x128xf32>
    %834 = arith.divf %832, %833 : vector<2x128xf32>
    %835 = math.tanh %826 : vector<2x128xf32>
    %836 = vector.extract_strided_slice %834 {offsets = [0, 32], sizes = [2, 32], strides = [1, 1]} : vector<2x128xf32> to vector<2x32xf32>
    %837 = arith.mulf %836, %788 : vector<2x32xf32>
    %838 = vector.extract_strided_slice %834 {offsets = [0, 0], sizes = [2, 32], strides = [1, 1]} : vector<2x128xf32> to vector<2x32xf32>
    %839 = vector.extract_strided_slice %835 {offsets = [0, 64], sizes = [2, 32], strides = [1, 1]} : vector<2x128xf32> to vector<2x32xf32>
    %840 = arith.mulf %838, %839 : vector<2x32xf32>
    %841 = arith.addf %837, %840 : vector<2x32xf32>
    %842 = vector.extract_strided_slice %834 {offsets = [0, 96], sizes = [2, 32], strides = [1, 1]} : vector<2x128xf32> to vector<2x32xf32>
    %843 = math.tanh %841 : vector<2x32xf32>
    %844 = arith.mulf %842, %843 : vector<2x32xf32>
    %845 = arith.negf %829 : vector<2x128xf32>
    %846 = math.exp %845 : vector<2x128xf32>
    %cst_263 = arith.constant 1.000000e+00 : f32
    %847 = vector.broadcast %cst_263 : f32 to vector<2x128xf32>
    %848 = arith.addf %847, %846 : vector<2x128xf32>
    %849 = arith.divf %847, %848 : vector<2x128xf32>
    %850 = math.tanh %829 : vector<2x128xf32>
    %851 = vector.extract_strided_slice %849 {offsets = [0, 32], sizes = [2, 32], strides = [1, 1]} : vector<2x128xf32> to vector<2x32xf32>
    %852 = arith.mulf %851, %803 : vector<2x32xf32>
    %853 = vector.extract_strided_slice %849 {offsets = [0, 0], sizes = [2, 32], strides = [1, 1]} : vector<2x128xf32> to vector<2x32xf32>
    %854 = vector.extract_strided_slice %850 {offsets = [0, 64], sizes = [2, 32], strides = [1, 1]} : vector<2x128xf32> to vector<2x32xf32>
    %855 = arith.mulf %853, %854 : vector<2x32xf32>
    %856 = arith.addf %852, %855 : vector<2x32xf32>
    %857 = vector.extract_strided_slice %849 {offsets = [0, 96], sizes = [2, 32], strides = [1, 1]} : vector<2x128xf32> to vector<2x32xf32>
    %858 = math.tanh %856 : vector<2x32xf32>
    %859 = arith.mulf %857, %858 : vector<2x32xf32>
    %c2_i32_264 = arith.constant 2 : i32
    %860 = arith.muli %c7_i32_253, %c2_i32_264 : i32
    %861 = arith.index_cast %860 : i32 to index
    %c0_265 = arith.constant 0 : index
    %862 = vector.load %arg8[%861, %c0_265] : memref<16x64xf32, #tpu.memory_space<vmem>>, vector<2x32xf32>
    tpu.vector_store %arg8[%861, %c0_265], %844 {strides = array<i32>} : memref<16x64xf32, #tpu.memory_space<vmem>>, vector<2x32xf32>,
    %c7_i32_266 = arith.constant 7 : i32
    %863 = arith.subi %c7_i32_266, %c7_i32_253 : i32
    %c2_i32_267 = arith.constant 2 : i32
    %864 = arith.muli %863, %c2_i32_267 : i32
    %865 = arith.index_cast %864 : i32 to index
    %c32_268 = arith.constant 32 : index
    %866 = vector.load %arg8[%865, %c32_268] : memref<16x64xf32, #tpu.memory_space<vmem>>, vector<2x32xf32>
    tpu.vector_store %arg8[%865, %c32_268], %859 {strides = array<i32>} : memref<16x64xf32, #tpu.memory_space<vmem>>, vector<2x32xf32>,
    %867 = tpu.concatenate %844, %859 in 1 : vector<2x32xf32>, vector<2x32xf32> -> vector<2x64xf32>
    %c8_i32_269 = arith.constant 8 : i32
    return
  }
  func.func @transform_0(%arg0: i32) -> (i32, i32) {
    %c0_i32 = arith.constant 0 : i32
    %c0_i32_0 = arith.constant 0 : i32
    %c0_i32_1 = arith.constant 0 : i32
    return %c0_i32, %c0_i32_0 : i32, i32
  }
  func.func @transform_1(%arg0: i32) -> (i32, i32) {
    %c0_i32 = arith.constant 0 : i32
    %c0_i32_0 = arith.constant 0 : i32
    %c0_i32_1 = arith.constant 0 : i32
    return %c0_i32, %c0_i32_0 : i32, i32
  }
  func.func @transform_2(%arg0: i32) -> (i32, i32) {
    %c0_i32 = arith.constant 0 : i32
    %c0_i32_0 = arith.constant 0 : i32
    %c0_i32_1 = arith.constant 0 : i32
    return %c0_i32, %c0_i32_0 : i32, i32
  }
  func.func @transform_3(%arg0: i32) -> (i32, i32) {
    %c0_i32 = arith.constant 0 : i32
    %c0_i32_0 = arith.constant 0 : i32
    %c0_i32_1 = arith.constant 0 : i32
    return %c0_i32, %c0_i32_0 : i32, i32
  }
  func.func @transform_4(%arg0: i32) -> (i32, i32) {
    %c0_i32 = arith.constant 0 : i32
    %c0_i32_0 = arith.constant 0 : i32
    %c0_i32_1 = arith.constant 0 : i32
    return %c0_i32, %c0_i32_0 : i32, i32
  }
  func.func @transform_5(%arg0: i32) -> (i32, i32) {
    %c0_i32 = arith.constant 0 : i32
    %c0_i32_0 = arith.constant 0 : i32
    %c0_i32_1 = arith.constant 0 : i32
    return %c0_i32, %c0_i32_0 : i32, i32
  }
  func.func @transform_6(%arg0: i32) -> (i32, i32) {
    %c0_i32 = arith.constant 0 : i32
    %c0_i32_0 = arith.constant 0 : i32
    %c0_i32_1 = arith.constant 0 : i32
    return %c0_i32, %c0_i32_0 : i32, i32
  }
  func.func @transform_7(%arg0: i32) -> (i32, i32) {
    %c0_i32 = arith.constant 0 : i32
    %c0_i32_0 = arith.constant 0 : i32
    %c0_i32_1 = arith.constant 0 : i32
    return %c0_i32, %c0_i32_0 : i32, i32
  }
}

</mosaic_0001>

<llo_original>
// kernel: birnn_forward.1
$region0: #{birnn_forward.1}
  #allocation0 [shape = 'u32[]', space=smem, size = 0x4, offset = 0x4, fixed_abs, tag = 'smem constant byte address 0x4 - core index']
  #allocation1 [shape = 'u32[72,128]{1,0:T(1,128)}', space=vmem, size = 0x9000, scoped, tag = 'internal scratch']
  #allocation2 [shape = 'f32[16,256]{1,0:T(8,128)}', space=vmem, size = 0x4000, scoped, tag = 'scratch operand']
  #allocation3 [shape = 'f32[16,64]{1,0:T(8,128)}', space=vmem, size = 0x2000, scoped, tag = 'scratch operand']
  %s0 = inlined_call_operand.hbm [shape: f32[16,16], index: 0, kind: input, shape index: {}]
  %s1 = inlined_call_operand.hbm [shape: f32[16,256], index: 1, kind: input, shape index: {}]
  %s2 = inlined_call_operand.hbm [shape: f32[1,256], index: 2, kind: input, shape index: {}]
  %s3 = inlined_call_operand.hbm [shape: f32[64,256], index: 3, kind: input, shape index: {}]
  %s4 = inlined_call_operand.hbm [shape: f32[64,256], index: 4, kind: input, shape index: {}]
  %s5 = inlined_call_operand.vmem [shape: f32[1,256], index: 5, kind: input, shape index: {}]
  %s6 = inlined_call_operand.hbm [shape: f32[64,256], index: 6, kind: input, shape index: {}]
  %s7 = inlined_call_operand.hbm [shape: f32[16,64], index: 7, kind: output, shape index: {}]
  %s8 = sld [smem:[#allocation0]]
  $region62: #{birnn_forward.1} parent=0
    _
  %s10 = ssub.s32 1, %s8
  %s11 = scalar_select 0, %s10, %s8
  $region1: #{birnn_forward.1} parent=0
    #allocation4 [shape = 'u8[8192]{0}', space=vmem, size = 0x2000, scoped, tag = 'input window, operand 0, single buffered']
    #allocation5 [shape = 's32[1]{0}', space=sflag, size = 0x4, scoped, tag = 'scoped memory for birnn_forward.1']
    #allocation6 [shape = 's32[1]{0}', space=sflag, size = 0x4, scoped, tag = 'scoped memory for birnn_forward.1']
    #allocation7 [shape = 'u8[16384]{0}', space=vmem, size = 0x4000, scoped, tag = 'input window, operand 1, single buffered']
    #allocation8 [shape = 's32[1]{0}', space=sflag, size = 0x4, scoped, tag = 'scoped memory for birnn_forward.1']
    #allocation9 [shape = 'u8[1024]{0}', space=vmem, size = 0x400, scoped, tag = 'input window, operand 2, single buffered']
    #allocation10 [shape = 'u8[65536]{0}', space=vmem, size = 0x10000, scoped, tag = 'input window, operand 3, single buffered']
    #allocation11 [shape = 's32[1]{0}', space=sflag, size = 0x4, scoped, tag = 'scoped memory for birnn_forward.1']
    #allocation12 [shape = 'u8[65536]{0}', space=vmem, size = 0x10000, scoped, tag = 'input window, operand 4, single buffered']
    #allocation13 [shape = 'u8[65536]{0}', space=vmem, size = 0x10000, scoped, tag = 'input window, operand 6, single buffered']
    #allocation14 [shape = 's32[1]{0}', space=sflag, size = 0x4, scoped, tag = 'scoped memory for birnn_forward.1']
    #allocation15 [shape = 'u8[8192]{0}', space=vmem, size = 0x2000, scoped, tag = 'output window, operand 0, single buffered']
    %12 = vsyncpa [#allocation5], 0
    %13 = vsyncpa [#allocation8], 0
    %14 = vsyncpa [#allocation11], 0
    %15 = vsyncpa [#allocation14], 0
    %16 = vsyncpa [#allocation6], 0
    // Predicated region
    $region2: #{birnn_forward.1} parent=1 // pred_check
      _
    $region3: #{birnn_forward.1} parent=1 // pred_check_branch
      %18 = sbr.rel (0) target = $region5
    $region4: #{birnn_forward.1} parent=1 // pred_region
      %20 = vsyncadd [#allocation5], 0
      %s21 = sshll.u32 %s0, 4
      %s22 = int_to_ptr.hbm [resolvable:$true] %s21
      %s23 = sshll.u32 [#allocation4], 4
      %s24 = int_to_ptr.vmem [resolvable:$true] %s23
      %29 = dma.hbm_to_vmem [thread:$0]  %s22, 256, %s24, [#allocation5], 128, 128, 8
    $region5: #{birnn_forward.1} parent=1 // pred_fallthru
      _
    // Predicated region
    $region6: #{birnn_forward.1} parent=1 // pred_check
      _
    $region7: #{birnn_forward.1} parent=1 // pred_check_branch
      %31 = sbr.rel (0) target = $region9
    $region8: #{birnn_forward.1} parent=1 // pred_region
      %33 = vsyncadd [#allocation8], 0
      %s34 = sshll.u32 %s1, 4
      %s35 = int_to_ptr.hbm [resolvable:$true] %s34
      %s36 = sshll.u32 [#allocation7], 4
      %s37 = int_to_ptr.vmem [resolvable:$true] %s36
      %42 = dma.hbm_to_vmem [thread:$0]  %s35, 512, %s37, [#allocation8], 256, 256, 16
    $region9: #{birnn_forward.1} parent=1 // pred_fallthru
      _
    // Predicated region
    $region10: #{birnn_forward.1} parent=1 // pred_check
      _
    $region11: #{birnn_forward.1} parent=1 // pred_check_branch
      %44 = sbr.rel (0) target = $region13
    $region12: #{birnn_forward.1} parent=1 // pred_region
      %46 = vsyncadd [#allocation8], 0
      %s48 = sshll.u32 %s2, 4
      %s49 = int_to_ptr.hbm [resolvable:$true] %s48
      %s50 = sshll.u32 [#allocation9], 4
      %s51 = int_to_ptr.vmem [resolvable:$true] %s50
      %53 = dma.hbm_to_vmem [thread:$0]  %s49, 32, %s51, [#allocation8]
    $region13: #{birnn_forward.1} parent=1 // pred_fallthru
      _
    // Predicated region
    $region14: #{birnn_forward.1} parent=1 // pred_check
      _
    $region15: #{birnn_forward.1} parent=1 // pred_check_branch
      %55 = sbr.rel (0) target = $region17
    $region16: #{birnn_forward.1} parent=1 // pred_region
      %57 = vsyncadd [#allocation11], 0
      %s58 = sshll.u32 %s3, 4
      %s59 = int_to_ptr.hbm [resolvable:$true] %s58
      %s60 = sshll.u32 [#allocation10], 4
      %s61 = int_to_ptr.vmem [resolvable:$true] %s60
      %66 = dma.hbm_to_vmem [thread:$0]  %s59, 2048, %s61, [#allocation11], 256, 256, 16
    $region17: #{birnn_forward.1} parent=1 // pred_fallthru
      _
    // Predicated region
    $region18: #{birnn_forward.1} parent=1 // pred_check
      _
    $region19: #{birnn_forward.1} parent=1 // pred_check_branch
      %68 = sbr.rel (0) target = $region21
    $region20: #{birnn_forward.1} parent=1 // pred_region
      %70 = vsyncadd [#allocation11], 0
      %s71 = sshll.u32 %s4, 4
      %s72 = int_to_ptr.hbm [resolvable:$true] %s71
      %s73 = sshll.u32 [#allocation12], 4
      %s74 = int_to_ptr.vmem [resolvable:$true] %s73
      %79 = dma.hbm_to_vmem [thread:$0]  %s72, 2048, %s74, [#allocation11], 256, 256, 16
    $region21: #{birnn_forward.1} parent=1 // pred_fallthru
      _
    // Predicated region
    $region22: #{birnn_forward.1} parent=1 // pred_check
      _
    $region23: #{birnn_forward.1} parent=1 // pred_check_branch
      %81 = sbr.rel (0) target = $region25
    $region24: #{birnn_forward.1} parent=1 // pred_region
      _
    $region25: #{birnn_forward.1} parent=1 // pred_fallthru
      _
    // Predicated region
    $region26: #{birnn_forward.1} parent=1 // pred_check
      _
    $region27: #{birnn_forward.1} parent=1 // pred_check_branch
      %83 = sbr.rel (0) target = $region29
    $region28: #{birnn_forward.1} parent=1 // pred_region
      %85 = vsyncadd [#allocation14], 0
      %s86 = sshll.u32 %s6, 4
      %s87 = int_to_ptr.hbm [resolvable:$true] %s86
      %s88 = sshll.u32 [#allocation13], 4
      %s89 = int_to_ptr.vmem [resolvable:$true] %s88
      %94 = dma.hbm_to_vmem [thread:$0]  %s87, 2048, %s89, [#allocation14], 256, 256, 16
    $region29: #{birnn_forward.1} parent=1 // pred_fallthru
      _
    // Predicated region
    $region30: #{birnn_forward.1} parent=1 // pred_check
      _
    $region31: #{birnn_forward.1} parent=1 // pred_check_branch
      %96 = sbr.rel (0) target = $region33
    $region32: #{birnn_forward.1} parent=1 // pred_region
      %98 = dma.done [#allocation5], 256
    $region33: #{birnn_forward.1} parent=1 // pred_fallthru
      _
    // Predicated region
    $region34: #{birnn_forward.1} parent=1 // pred_check
      _
    $region35: #{birnn_forward.1} parent=1 // pred_check_branch
      %100 = sbr.rel (0) target = $region37
    $region36: #{birnn_forward.1} parent=1 // pred_region
      %102 = dma.done [#allocation8], 512
    $region37: #{birnn_forward.1} parent=1 // pred_fallthru
      _
    // Predicated region
    $region38: #{birnn_forward.1} parent=1 // pred_check
      _
    $region39: #{birnn_forward.1} parent=1 // pred_check_branch
      %104 = sbr.rel (0) target = $region41
    $region40: #{birnn_forward.1} parent=1 // pred_region
      %106 = dma.done [#allocation8], 32
    $region41: #{birnn_forward.1} parent=1 // pred_fallthru
      _
    // Predicated region
    $region42: #{birnn_forward.1} parent=1 // pred_check
      _
    $region43: #{birnn_forward.1} parent=1 // pred_check_branch
      %108 = sbr.rel (0) target = $region45
    $region44: #{birnn_forward.1} parent=1 // pred_region
      %110 = dma.done [#allocation11], 2048
    $region45: #{birnn_forward.1} parent=1 // pred_fallthru
      _
    // Predicated region
    $region46: #{birnn_forward.1} parent=1 // pred_check
      _
    $region47: #{birnn_forward.1} parent=1 // pred_check_branch
      %112 = sbr.rel (0) target = $region49
    $region48: #{birnn_forward.1} parent=1 // pred_region
      %114 = dma.done [#allocation11], 2048
    $region49: #{birnn_forward.1} parent=1 // pred_fallthru
      _
    // Predicated region
    $region50: #{birnn_forward.1} parent=1 // pred_check
      _
    $region51: #{birnn_forward.1} parent=1 // pred_check_branch
      %116 = sbr.rel (0) target = $region53
    $region52: #{birnn_forward.1} parent=1 // pred_region
      %118 = dma.done [#allocation14], 2048
    $region53: #{birnn_forward.1} parent=1 // pred_fallthru
      _
    %v119 = vld [vmem:[#allocation4] sm:$0xff]
    %v120 = vld [vmem:[#allocation4 + $0x8] sm:$0xff]
    %v121 = vld [vmem:[#allocation7] sm:$0xff]
    %v122 = vld [vmem:[#allocation7 + $0x8] sm:$0xff]
    %v123 = vld [vmem:[#allocation7 + $0x10] sm:$0xff]
    %v124 = vld [vmem:[#allocation7 + $0x18] sm:$0xff]
    %v125 = vld [vmem:[#allocation9] sm:$0x3]
    %v127 = vperm.slane %v125, 0
    %v128 = vperm.slane %v125, 1
    %vm131 = vcmask 130048
    %v133 = vsel %vm131, %v119, 0
    %v136 = vsel %vm131, %v120, 0
    %138 = vmatpush.msra.mxu0 0.0
    %139 = vmatpush.msra.mxu0 0.0
    %140 = vmatpush.msra.mxu0 0.0
    %141 = vmatpush.msra.mxu0 0.0
    %142 = vmatpush.msra.mxu0 0.0
    %143 = vmatpush.msra.mxu0 0.0
    %144 = vmatpush.msra.mxu0 0.0
    %145 = vmatpush.msra.mxu0 0.0
    %146 = vmatpush.msra.mxu0 0.0
    %147 = vmatpush.msra.mxu0 0.0
    %148 = vmatpush.msra.mxu0 0.0
    %149 = vmatpush.msra.mxu0 0.0
    %150 = vmatpush.msra.mxu0 0.0
    %151 = vmatpush.msra.mxu0 0.0
    %152 = vmatpush.msra.mxu0 %v123
    %153 = vmatpush.msra.mxu0 %v121
    %154 = vmatmul.f32.gmra.mxu0 %v133
    %v155 = vpop.f32.mrf.mxu0
    %v156 = vadd.f32 %v127, %v155
    %157 = vmatmul.f32.gmra.mxu0 %v136
    %v158 = vpop.f32.mrf.mxu0
    %v159 = vadd.f32 %v127, %v158
    %160 = vdwg.mxu0
    %161 = vmatpush.msra.mxu0 0.0
    %162 = vmatpush.msra.mxu0 0.0
    %163 = vmatpush.msra.mxu0 0.0
    %164 = vmatpush.msra.mxu0 0.0
    %165 = vmatpush.msra.mxu0 0.0
    %166 = vmatpush.msra.mxu0 0.0
    %167 = vmatpush.msra.mxu0 0.0
    %168 = vmatpush.msra.mxu0 0.0
    %169 = vmatpush.msra.mxu0 0.0
    %170 = vmatpush.msra.mxu0 0.0
    %171 = vmatpush.msra.mxu0 0.0
    %172 = vmatpush.msra.mxu0 0.0
    %173 = vmatpush.msra.mxu0 0.0
    %174 = vmatpush.msra.mxu0 0.0
    %175 = vmatpush.msra.mxu0 %v124
    %176 = vmatpush.msra.mxu0 %v122
    %177 = vmatmul.f32.gmra.mxu0 %v133
    %v178 = vpop.f32.mrf.mxu0
    %v179 = vadd.f32 %v128, %v178
    %180 = vmatmul.f32.gmra.mxu0 %v136
    %v181 = vpop.f32.mrf.mxu0
    %v182 = vadd.f32 %v128, %v181
    %183 = vdwg.mxu0
    %184 = vst [vmem:[#allocation2] sm:$0xff] %v156
    %185 = vst [vmem:[#allocation2 + $0x8] sm:$0xff] %v179
    %186 = vst [vmem:[#allocation2 + $0x10] sm:$0xff] %v159
    %187 = vst [vmem:[#allocation2 + $0x18] sm:$0xff] %v182
    %v188 = vld [vmem:[#allocation10] sm:$0xff]
    %v189 = vld [vmem:[#allocation10 + $0x8] sm:$0xff]
    %v190 = vld [vmem:[#allocation10 + $0x10] sm:$0xff]
    %v191 = vld [vmem:[#allocation10 + $0x18] sm:$0xff]
    %v192 = vld [vmem:[#allocation10 + $0x20] sm:$0xff]
    %v193 = vld [vmem:[#allocation10 + $0x28] sm:$0xff]
    %v194 = vld [vmem:[#allocation10 + $0x30] sm:$0xff]
    %v195 = vld [vmem:[#allocation10 + $0x38] sm:$0xff]
    %v196 = vld [vmem:[#allocation10 + $0x40] sm:$0xff]
    %v197 = vld [vmem:[#allocation10 + $0x48] sm:$0xff]
    %v198 = vld [vmem:[#allocation10 + $0x50] sm:$0xff]
    %v199 = vld [vmem:[#allocation10 + $0x58] sm:$0xff]
    %v200 = vld [vmem:[#allocation10 + $0x60] sm:$0xff]
    %v201 = vld [vmem:[#allocation10 + $0x68] sm:$0xff]
    %v202 = vld [vmem:[#allocation10 + $0x70] sm:$0xff]
    %v203 = vld [vmem:[#allocation10 + $0x78] sm:$0xff]
    %vm204 = vcmask 523264
    %v206 = vsel %vm204, 0.0, 0
    %208 = vmatpush.msra.mxu0 0.0
    %209 = vmatpush.msra.mxu0 0.0
    %210 = vmatpush.msra.mxu0 0.0
    %211 = vmatpush.msra.mxu0 0.0
    %212 = vmatpush.msra.mxu0 0.0
    %213 = vmatpush.msra.mxu0 0.0
    %214 = vmatpush.msra.mxu0 0.0
    %215 = vmatpush.msra.mxu0 0.0
    %216 = vmatpush.msra.mxu0 %v202
    %217 = vmatpush.msra.mxu0 %v200
    %218 = vmatpush.msra.mxu0 %v198
    %219 = vmatpush.msra.mxu0 %v196
    %220 = vmatpush.msra.mxu0 %v194
    %221 = vmatpush.msra.mxu0 %v192
    %222 = vmatpush.msra.mxu0 %v190
    %223 = vmatpush.msra.mxu0 %v188
    %224 = vmatmul.f32.gmra.mxu0 %v206
    %v225 = vpop.f32.mrf.mxu0
    %v226 = vadd.f32 0.0, %v225
    %227 = vdwg.mxu0
    %228 = vmatpush.msra.mxu0 0.0
    %229 = vmatpush.msra.mxu0 0.0
    %230 = vmatpush.msra.mxu0 0.0
    %231 = vmatpush.msra.mxu0 0.0
    %232 = vmatpush.msra.mxu0 0.0
    %233 = vmatpush.msra.mxu0 0.0
    %234 = vmatpush.msra.mxu0 0.0
    %235 = vmatpush.msra.mxu0 0.0
    %236 = vmatpush.msra.mxu0 %v203
    %237 = vmatpush.msra.mxu0 %v201
    %238 = vmatpush.msra.mxu0 %v199
    %239 = vmatpush.msra.mxu0 %v197
    %240 = vmatpush.msra.mxu0 %v195
    %241 = vmatpush.msra.mxu0 %v193
    %242 = vmatpush.msra.mxu0 %v191
    %243 = vmatpush.msra.mxu0 %v189
    %244 = vmatmul.f32.gmra.mxu0 %v206
    %v245 = vpop.f32.mrf.mxu0
    %v246 = vadd.f32 0.0, %v245
    %247 = vdwg.mxu0
    %v248 = vld [vmem:[#allocation2] sm:$0x3]
    %v249 = vld [vmem:[#allocation2 + $0x18] sm:$0xc0]
    %v250 = vadd.f32 %v226, %v248
    %v252 = vrot.slane %v249, 6
    %v254 = vadd.f32 %v246, %v252
    %v255 = vxor.u32 %v250, 2147483648
    %v256 = vmul.f32 %v255, 1.442695
    %v257 = vpow.pop %v256
    %v258 = vadd.f32 %v257, 1.0
    %v259 = vrcp.pop %v258
    %v260 = vmul.f32 %v258, %v259
    %v261 = vsub.f32 1.0, %v260
    %v262 = vmul.f32 %v259, %v261
    %v263 = vadd.f32 %v259, %v262
    %vm264 = vweird.f32 %v258
    %vm265 = vweird.f32 %v259
    %vm266 = vmor %vm264, %vm265
    %v267 = vsel %vm266, %v259, %v263
    %v268 = vand.u32 2147483647, %v258
    %vm269 = vcmp.eq.f32.partialorder %v268, 8.507059e+37
    %v270 = vand.u32 %v258, 2147483648
    %v271 = vor.u32 1.1754944e-38, %v270
    %v272 = vsel %vm269, %v271, %v267
    %v273 = vmul.f32 1.0, %v272
    %v274 = vtanh.pop %v250
    %v275 = vmul.f32 %v273, 0.0
    %277 = vrot.lane.b32.xlu0 %v274, 64
    %v278 = vpop.permute.xlu0 %277
    %v280 = vmul.f32 %v273, %v278
    %282 = vrot.lane.b32.xlu0 %v280, 32
    %v283 = vpop.permute.xlu0 %282
    %v285 = vadd.f32 %v275, %v283
    %v286 = vtanh.pop %v285
    %288 = vrot.lane.b32.xlu0 %v286, 64
    %v289 = vpop.permute.xlu0 %288
    %v291 = vmul.f32 %v273, %v289
    %v292 = vxor.u32 %v254, 2147483648
    %v293 = vmul.f32 %v292, 1.442695
    %v294 = vpow.pop %v293
    %v295 = vadd.f32 %v294, 1.0
    %v296 = vrcp.pop %v295
    %v297 = vmul.f32 %v295, %v296
    %v298 = vsub.f32 1.0, %v297
    %v299 = vmul.f32 %v296, %v298
    %v300 = vadd.f32 %v296, %v299
    %vm301 = vweird.f32 %v295
    %vm302 = vweird.f32 %v296
    %vm303 = vmor %vm301, %vm302
    %v304 = vsel %vm303, %v296, %v300
    %v305 = vand.u32 2147483647, %v295
    %vm306 = vcmp.eq.f32.partialorder %v305, 8.507059e+37
    %v307 = vand.u32 %v295, 2147483648
    %v308 = vor.u32 1.1754944e-38, %v307
    %v309 = vsel %vm306, %v308, %v304
    %v310 = vmul.f32 1.0, %v309
    %v311 = vtanh.pop %v254
    %v312 = vmul.f32 %v310, 0.0
    %314 = vrot.lane.b32.xlu0 %v311, 64
    %v315 = vpop.permute.xlu0 %314
    %v317 = vmul.f32 %v310, %v315
    %319 = vrot.lane.b32.xlu0 %v317, 32
    %v320 = vpop.permute.xlu0 %319
    %v322 = vadd.f32 %v312, %v320
    %v323 = vtanh.pop %v322
    %325 = vrot.lane.b32.xlu0 %v323, 64
    %v326 = vpop.permute.xlu0 %325
    %v328 = vmul.f32 %v310, %v326
    %330 = vrot.lane.b32.xlu0 %v291, 32
    %v331 = vpop.permute.xlu0 %330
    %vm333 = vcmask 254976
    %334 = vst.msk [vmem:[#allocation3] sm:$0x3] %vm333, %v331
    %336 = vrot.lane.b32.xlu0 %v328, 64
    %v337 = vpop.permute.xlu0 %336
    %vm339 = vcmask 517376
    %340 = vst.msk [vmem:[#allocation3 + $0xe] sm:$0x3] %vm339, %v337
    %vm341 = vcmask 261120
    %v342 = vsel %vm341, %v331, %v337
    %v343 = vld [vmem:[#allocation10] sm:$0xff]
    %v344 = vld [vmem:[#allocation10 + $0x8] sm:$0xff]
    %v345 = vld [vmem:[#allocation10 + $0x10] sm:$0xff]
    %v346 = vld [vmem:[#allocation10 + $0x18] sm:$0xff]
    %v347 = vld [vmem:[#allocation10 + $0x20] sm:$0xff]
    %v348 = vld [vmem:[#allocation10 + $0x28] sm:$0xff]
    %v349 = vld [vmem:[#allocation10 + $0x30] sm:$0xff]
    %v350 = vld [vmem:[#allocation10 + $0x38] sm:$0xff]
    %v351 = vld [vmem:[#allocation10 + $0x40] sm:$0xff]
    %v352 = vld [vmem:[#allocation10 + $0x48] sm:$0xff]
    %v353 = vld [vmem:[#allocation10 + $0x50] sm:$0xff]
    %v354 = vld [vmem:[#allocation10 + $0x58] sm:$0xff]
    %v355 = vld [vmem:[#allocation10 + $0x60] sm:$0xff]
    %v356 = vld [vmem:[#allocation10 + $0x68] sm:$0xff]
    %v357 = vld [vmem:[#allocation10 + $0x70] sm:$0xff]
    %v358 = vld [vmem:[#allocation10 + $0x78] sm:$0xff]
    %v360 = vsel %vm204, %v342, 0
    %362 = vmatpush.msra.mxu0 0.0
    %363 = vmatpush.msra.mxu0 0.0
    %364 = vmatpush.msra.mxu0 0.0
    %365 = vmatpush.msra.mxu0 0.0
    %366 = vmatpush.msra.mxu0 0.0
    %367 = vmatpush.msra.mxu0 0.0
    %368 = vmatpush.msra.mxu0 0.0
    %369 = vmatpush.msra.mxu0 0.0
    %370 = vmatpush.msra.mxu0 %v357
    %371 = vmatpush.msra.mxu0 %v355
    %372 = vmatpush.msra.mxu0 %v353
    %373 = vmatpush.msra.mxu0 %v351
    %374 = vmatpush.msra.mxu0 %v349
    %375 = vmatpush.msra.mxu0 %v347
    %376 = vmatpush.msra.mxu0 %v345
    %377 = vmatpush.msra.mxu0 %v343
    %378 = vmatmul.f32.gmra.mxu0 %v360
    %v379 = vpop.f32.mrf.mxu0
    %v380 = vadd.f32 0.0, %v379
    %381 = vdwg.mxu0
    %382 = vmatpush.msra.mxu0 0.0
    %383 = vmatpush.msra.mxu0 0.0
    %384 = vmatpush.msra.mxu0 0.0
    %385 = vmatpush.msra.mxu0 0.0
    %386 = vmatpush.msra.mxu0 0.0
    %387 = vmatpush.msra.mxu0 0.0
    %388 = vmatpush.msra.mxu0 0.0
    %389 = vmatpush.msra.mxu0 0.0
    %390 = vmatpush.msra.mxu0 %v358
    %391 = vmatpush.msra.mxu0 %v356
    %392 = vmatpush.msra.mxu0 %v354
    %393 = vmatpush.msra.mxu0 %v352
    %394 = vmatpush.msra.mxu0 %v350
    %395 = vmatpush.msra.mxu0 %v348
    %396 = vmatpush.msra.mxu0 %v346
    %397 = vmatpush.msra.mxu0 %v344
    %398 = vmatmul.f32.gmra.mxu0 %v360
    %v399 = vpop.f32.mrf.mxu0
    %v400 = vadd.f32 0.0, %v399
    %401 = vdwg.mxu0
    %v402 = vld [vmem:[#allocation2] sm:$0xc]
    %v403 = vld [vmem:[#allocation2 + $0x18] sm:$0x30]
    %v405 = vrot.slane %v402, 2
    %v407 = vadd.f32 %v380, %v405
    %v409 = vrot.slane %v403, 4
    %v411 = vadd.f32 %v400, %v409
    %v412 = vxor.u32 %v407, 2147483648
    %v413 = vmul.f32 %v412, 1.442695
    %v414 = vpow.pop %v413
    %v415 = vadd.f32 %v414, 1.0
    %v416 = vrcp.pop %v415
    %v417 = vmul.f32 %v415, %v416
    %v418 = vsub.f32 1.0, %v417
    %v419 = vmul.f32 %v416, %v418
    %v420 = vadd.f32 %v416, %v419
    %vm421 = vweird.f32 %v415
    %vm422 = vweird.f32 %v416
    %vm423 = vmor %vm421, %vm422
    %v424 = vsel %vm423, %v416, %v420
    %v425 = vand.u32 2147483647, %v415
    %vm426 = vcmp.eq.f32.partialorder %v425, 8.507059e+37
    %v427 = vand.u32 %v415, 2147483648
    %v428 = vor.u32 1.1754944e-38, %v427
    %v429 = vsel %vm426, %v428, %v424
    %v430 = vmul.f32 1.0, %v429
    %v431 = vtanh.pop %v407
    %v432 = vmul.f32 %v430, %v285
    %434 = vrot.lane.b32.xlu0 %v431, 64
    %v435 = vpop.permute.xlu0 %434
    %v437 = vmul.f32 %v430, %v435
    %439 = vrot.lane.b32.xlu0 %v437, 32
    %v440 = vpop.permute.xlu0 %439
    %v442 = vadd.f32 %v432, %v440
    %v443 = vtanh.pop %v442
    %445 = vrot.lane.b32.xlu0 %v443, 64
    %v446 = vpop.permute.xlu0 %445
    %v448 = vmul.f32 %v430, %v446
    %v449 = vxor.u32 %v411, 2147483648
    %v450 = vmul.f32 %v449, 1.442695
    %v451 = vpow.pop %v450
    %v452 = vadd.f32 %v451, 1.0
    %v453 = vrcp.pop %v452
    %v454 = vmul.f32 %v452, %v453
    %v455 = vsub.f32 1.0, %v454
    %v456 = vmul.f32 %v453, %v455
    %v457 = vadd.f32 %v453, %v456
    %vm458 = vweird.f32 %v452
    %vm459 = vweird.f32 %v453
    %vm460 = vmor %vm458, %vm459
    %v461 = vsel %vm460, %v453, %v457
    %v462 = vand.u32 2147483647, %v452
    %vm463 = vcmp.eq.f32.partialorder %v462, 8.507059e+37
    %v464 = vand.u32 %v452, 2147483648
    %v465 = vor.u32 1.1754944e-38, %v464
    %v466 = vsel %vm463, %v465, %v461
    %v467 = vmul.f32 1.0, %v466
    %v468 = vtanh.pop %v411
    %v469 = vmul.f32 %v467, %v322
    %471 = vrot.lane.b32.xlu0 %v468, 64
    %v472 = vpop.permute.xlu0 %471
    %v474 = vmul.f32 %v467, %v472
    %476 = vrot.lane.b32.xlu0 %v474, 32
    %v477 = vpop.permute.xlu0 %476
    %v479 = vadd.f32 %v469, %v477
    %v480 = vtanh.pop %v479
    %482 = vrot.lane.b32.xlu0 %v480, 64
    %v483 = vpop.permute.xlu0 %482
    %v485 = vmul.f32 %v467, %v483
    %487 = vrot.lane.b32.xlu0 %v448, 32
    %v488 = vpop.permute.xlu0 %487
    %490 = vst.msk [vmem:[#allocation3 + $0x2] sm:$0x3] %vm333, %v488
    %492 = vrot.lane.b32.xlu0 %v485, 64
    %v493 = vpop.permute.xlu0 %492
    %495 = vst.msk [vmem:[#allocation3 + $0xc] sm:$0x3] %vm339, %v493
    %v496 = vsel %vm341, %v488, %v493
    %v497 = vld [vmem:[#allocation10] sm:$0xff]
    %v498 = vld [vmem:[#allocation10 + $0x8] sm:$0xff]
    %v499 = vld [vmem:[#allocation10 + $0x10] sm:$0xff]
    %v500 = vld [vmem:[#allocation10 + $0x18] sm:$0xff]
    %v501 = vld [vmem:[#allocation10 + $0x20] sm:$0xff]
    %v502 = vld [vmem:[#allocation10 + $0x28] sm:$0xff]
    %v503 = vld [vmem:[#allocation10 + $0x30] sm:$0xff]
    %v504 = vld [vmem:[#allocation10 + $0x38] sm:$0xff]
    %v505 = vld [vmem:[#allocation10 + $0x40] sm:$0xff]
    %v506 = vld [vmem:[#allocation10 + $0x48] sm:$0xff]
    %v507 = vld [vmem:[#allocation10 + $0x50] sm:$0xff]
    %v508 = vld [vmem:[#allocation10 + $0x58] sm:$0xff]
    %v509 = vld [vmem:[#allocation10 + $0x60] sm:$0xff]
    %v510 = vld [vmem:[#allocation10 + $0x68] sm:$0xff]
    %v511 = vld [vmem:[#allocation10 + $0x70] sm:$0xff]
    %v512 = vld [vmem:[#allocation10 + $0x78] sm:$0xff]
    %v514 = vsel %vm204, %v496, 0
    %516 = vmatpush.msra.mxu0 0.0
    %517 = vmatpush.msra.mxu0 0.0
    %518 = vmatpush.msra.mxu0 0.0
    %519 = vmatpush.msra.mxu0 0.0
    %520 = vmatpush.msra.mxu0 0.0
    %521 = vmatpush.msra.mxu0 0.0
    %522 = vmatpush.msra.mxu0 0.0
    %523 = vmatpush.msra.mxu0 0.0
    %524 = vmatpush.msra.mxu0 %v511
    %525 = vmatpush.msra.mxu0 %v509
    %526 = vmatpush.msra.mxu0 %v507
    %527 = vmatpush.msra.mxu0 %v505
    %528 = vmatpush.msra.mxu0 %v503
    %529 = vmatpush.msra.mxu0 %v501
    %530 = vmatpush.msra.mxu0 %v499
    %531 = vmatpush.msra.mxu0 %v497
    %532 = vmatmul.f32.gmra.mxu0 %v514
    %v533 = vpop.f32.mrf.mxu0
    %v534 = vadd.f32 0.0, %v533
    %535 = vdwg.mxu0
    %536 = vmatpush.msra.mxu0 0.0
    %537 = vmatpush.msra.mxu0 0.0
    %538 = vmatpush.msra.mxu0 0.0
    %539 = vmatpush.msra.mxu0 0.0
    %540 = vmatpush.msra.mxu0 0.0
    %541 = vmatpush.msra.mxu0 0.0
    %542 = vmatpush.msra.mxu0 0.0
    %543 = vmatpush.msra.mxu0 0.0
    %544 = vmatpush.msra.mxu0 %v512
    %545 = vmatpush.msra.mxu0 %v510
    %546 = vmatpush.msra.mxu0 %v508
    %547 = vmatpush.msra.mxu0 %v506
    %548 = vmatpush.msra.mxu0 %v504
    %549 = vmatpush.msra.mxu0 %v502
    %550 = vmatpush.msra.mxu0 %v500
    %551 = vmatpush.msra.mxu0 %v498
    %552 = vmatmul.f32.gmra.mxu0 %v514
    %v553 = vpop.f32.mrf.mxu0
    %v554 = vadd.f32 0.0, %v553
    %555 = vdwg.mxu0
    %v556 = vld [vmem:[#allocation2] sm:$0x30]
    %v557 = vld [vmem:[#allocation2 + $0x18] sm:$0xc]
    %v559 = vrot.slane %v556, 4
    %v561 = vadd.f32 %v534, %v559
    %v563 = vrot.slane %v557, 2
    %v565 = vadd.f32 %v554, %v563
    %v566 = vxor.u32 %v561, 2147483648
    %v567 = vmul.f32 %v566, 1.442695
    %v568 = vpow.pop %v567
    %v569 = vadd.f32 %v568, 1.0
    %v570 = vrcp.pop %v569
    %v571 = vmul.f32 %v569, %v570
    %v572 = vsub.f32 1.0, %v571
    %v573 = vmul.f32 %v570, %v572
    %v574 = vadd.f32 %v570, %v573
    %vm575 = vweird.f32 %v569
    %vm576 = vweird.f32 %v570
    %vm577 = vmor %vm575, %vm576
    %v578 = vsel %vm577, %v570, %v574
    %v579 = vand.u32 2147483647, %v569
    %vm580 = vcmp.eq.f32.partialorder %v579, 8.507059e+37
    %v581 = vand.u32 %v569, 2147483648
    %v582 = vor.u32 1.1754944e-38, %v581
    %v583 = vsel %vm580, %v582, %v578
    %v584 = vmul.f32 1.0, %v583
    %v585 = vtanh.pop %v561
    %v586 = vmul.f32 %v584, %v442
    %588 = vrot.lane.b32.xlu0 %v585, 64
    %v589 = vpop.permute.xlu0 %588
    %v591 = vmul.f32 %v584, %v589
    %593 = vrot.lane.b32.xlu0 %v591, 32
    %v594 = vpop.permute.xlu0 %593
    %v596 = vadd.f32 %v586, %v594
    %v597 = vtanh.pop %v596
    %599 = vrot.lane.b32.xlu0 %v597, 64
    %v600 = vpop.permute.xlu0 %599
    %v602 = vmul.f32 %v584, %v600
    %v603 = vxor.u32 %v565, 2147483648
    %v604 = vmul.f32 %v603, 1.442695
    %v605 = vpow.pop %v604
    %v606 = vadd.f32 %v605, 1.0
    %v607 = vrcp.pop %v606
    %v608 = vmul.f32 %v606, %v607
    %v609 = vsub.f32 1.0, %v608
    %v610 = vmul.f32 %v607, %v609
    %v611 = vadd.f32 %v607, %v610
    %vm612 = vweird.f32 %v606
    %vm613 = vweird.f32 %v607
    %vm614 = vmor %vm612, %vm613
    %v615 = vsel %vm614, %v607, %v611
    %v616 = vand.u32 2147483647, %v606
    %vm617 = vcmp.eq.f32.partialorder %v616, 8.507059e+37
    %v618 = vand.u32 %v606, 2147483648
    %v619 = vor.u32 1.1754944e-38, %v618
    %v620 = vsel %vm617, %v619, %v615
    %v621 = vmul.f32 1.0, %v620
    %v622 = vtanh.pop %v565
    %v623 = vmul.f32 %v621, %v479
    %625 = vrot.lane.b32.xlu0 %v622, 64
    %v626 = vpop.permute.xlu0 %625
    %v628 = vmul.f32 %v621, %v626
    %630 = vrot.lane.b32.xlu0 %v628, 32
    %v631 = vpop.permute.xlu0 %630
    %v633 = vadd.f32 %v623, %v631
    %v634 = vtanh.pop %v633
    %636 = vrot.lane.b32.xlu0 %v634, 64
    %v637 = vpop.permute.xlu0 %636
    %v639 = vmul.f32 %v621, %v637
    %641 = vrot.lane.b32.xlu0 %v602, 32
    %v642 = vpop.permute.xlu0 %641
    %644 = vst.msk [vmem:[#allocation3 + $0x4] sm:$0x3] %vm333, %v642
    %646 = vrot.lane.b32.xlu0 %v639, 64
    %v647 = vpop.permute.xlu0 %646
    %649 = vst.msk [vmem:[#allocation3 + $0xa] sm:$0x3] %vm339, %v647
    %v650 = vsel %vm341, %v642, %v647
    %v651 = vld [vmem:[#allocation10] sm:$0xff]
    %v652 = vld [vmem:[#allocation10 + $0x8] sm:$0xff]
    %v653 = vld [vmem:[#allocation10 + $0x10] sm:$0xff]
    %v654 = vld [vmem:[#allocation10 + $0x18] sm:$0xff]
    %v655 = vld [vmem:[#allocation10 + $0x20] sm:$0xff]
    %v656 = vld [vmem:[#allocation10 + $0x28] sm:$0xff]
    %v657 = vld [vmem:[#allocation10 + $0x30] sm:$0xff]
    %v658 = vld [vmem:[#allocation10 + $0x38] sm:$0xff]
    %v659 = vld [vmem:[#allocation10 + $0x40] sm:$0xff]
    %v660 = vld [vmem:[#allocation10 + $0x48] sm:$0xff]
    %v661 = vld [vmem:[#allocation10 + $0x50] sm:$0xff]
    %v662 = vld [vmem:[#allocation10 + $0x58] sm:$0xff]
    %v663 = vld [vmem:[#allocation10 + $0x60] sm:$0xff]
    %v664 = vld [vmem:[#allocation10 + $0x68] sm:$0xff]
    %v665 = vld [vmem:[#allocation10 + $0x70] sm:$0xff]
    %v666 = vld [vmem:[#allocation10 + $0x78] sm:$0xff]
    %v668 = vsel %vm204, %v650, 0
    %670 = vmatpush.msra.mxu0 0.0
    %671 = vmatpush.msra.mxu0 0.0
    %672 = vmatpush.msra.mxu0 0.0
    %673 = vmatpush.msra.mxu0 0.0
    %674 = vmatpush.msra.mxu0 0.0
    %675 = vmatpush.msra.mxu0 0.0
    %676 = vmatpush.msra.mxu0 0.0
    %677 = vmatpush.msra.mxu0 0.0
    %678 = vmatpush.msra.mxu0 %v665
    %679 = vmatpush.msra.mxu0 %v663
    %680 = vmatpush.msra.mxu0 %v661
    %681 = vmatpush.msra.mxu0 %v659
    %682 = vmatpush.msra.mxu0 %v657
    %683 = vmatpush.msra.mxu0 %v655
    %684 = vmatpush.msra.mxu0 %v653
    %685 = vmatpush.msra.mxu0 %v651
    %686 = vmatmul.f32.gmra.mxu0 %v668
    %v687 = vpop.f32.mrf.mxu0
    %v688 = vadd.f32 0.0, %v687
    %689 = vdwg.mxu0
    %690 = vmatpush.msra.mxu0 0.0
    %691 = vmatpush.msra.mxu0 0.0
    %692 = vmatpush.msra.mxu0 0.0
    %693 = vmatpush.msra.mxu0 0.0
    %694 = vmatpush.msra.mxu0 0.0
    %695 = vmatpush.msra.mxu0 0.0
    %696 = vmatpush.msra.mxu0 0.0
    %697 = vmatpush.msra.mxu0 0.0
    %698 = vmatpush.msra.mxu0 %v666
    %699 = vmatpush.msra.mxu0 %v664
    %700 = vmatpush.msra.mxu0 %v662
    %701 = vmatpush.msra.mxu0 %v660
    %702 = vmatpush.msra.mxu0 %v658
    %703 = vmatpush.msra.mxu0 %v656
    %704 = vmatpush.msra.mxu0 %v654
    %705 = vmatpush.msra.mxu0 %v652
    %706 = vmatmul.f32.gmra.mxu0 %v668
    %v707 = vpop.f32.mrf.mxu0
    %v708 = vadd.f32 0.0, %v707
    %709 = vdwg.mxu0
    %v710 = vld [vmem:[#allocation2] sm:$0xc0]
    %v711 = vld [vmem:[#allocation2 + $0x18] sm:$0x3]
    %v713 = vrot.slane %v710, 6
    %v715 = vadd.f32 %v688, %v713
    %v716 = vadd.f32 %v708, %v711
    %v717 = vxor.u32 %v715, 2147483648
    %v718 = vmul.f32 %v717, 1.442695
    %v719 = vpow.pop %v718
    %v720 = vadd.f32 %v719, 1.0
    %v721 = vrcp.pop %v720
    %v722 = vmul.f32 %v720, %v721
    %v723 = vsub.f32 1.0, %v722
    %v724 = vmul.f32 %v721, %v723
    %v725 = vadd.f32 %v721, %v724
    %vm726 = vweird.f32 %v720
    %vm727 = vweird.f32 %v721
    %vm728 = vmor %vm726, %vm727
    %v729 = vsel %vm728, %v721, %v725
    %v730 = vand.u32 2147483647, %v720
    %vm731 = vcmp.eq.f32.partialorder %v730, 8.507059e+37
    %v732 = vand.u32 %v720, 2147483648
    %v733 = vor.u32 1.1754944e-38, %v732
    %v734 = vsel %vm731, %v733, %v729
    %v735 = vmul.f32 1.0, %v734
    %v736 = vtanh.pop %v715
    %v737 = vmul.f32 %v735, %v596
    %739 = vrot.lane.b32.xlu0 %v736, 64
    %v740 = vpop.permute.xlu0 %739
    %v742 = vmul.f32 %v735, %v740
    %744 = vrot.lane.b32.xlu0 %v742, 32
    %v745 = vpop.permute.xlu0 %744
    %v747 = vadd.f32 %v737, %v745
    %v748 = vtanh.pop %v747
    %750 = vrot.lane.b32.xlu0 %v748, 64
    %v751 = vpop.permute.xlu0 %750
    %v753 = vmul.f32 %v735, %v751
    %v754 = vxor.u32 %v716, 2147483648
    %v755 = vmul.f32 %v754, 1.442695
    %v756 = vpow.pop %v755
    %v757 = vadd.f32 %v756, 1.0
    %v758 = vrcp.pop %v757
    %v759 = vmul.f32 %v757, %v758
    %v760 = vsub.f32 1.0, %v759
    %v761 = vmul.f32 %v758, %v760
    %v762 = vadd.f32 %v758, %v761
    %vm763 = vweird.f32 %v757
    %vm764 = vweird.f32 %v758
    %vm765 = vmor %vm763, %vm764
    %v766 = vsel %vm765, %v758, %v762
    %v767 = vand.u32 2147483647, %v757
    %vm768 = vcmp.eq.f32.partialorder %v767, 8.507059e+37
    %v769 = vand.u32 %v757, 2147483648
    %v770 = vor.u32 1.1754944e-38, %v769
    %v771 = vsel %vm768, %v770, %v766
    %v772 = vmul.f32 1.0, %v771
    %v773 = vtanh.pop %v716
    %v774 = vmul.f32 %v772, %v633
    %776 = vrot.lane.b32.xlu0 %v773, 64
    %v777 = vpop.permute.xlu0 %776
    %v779 = vmul.f32 %v772, %v777
    %781 = vrot.lane.b32.xlu0 %v779, 32
    %v782 = vpop.permute.xlu0 %781
    %v784 = vadd.f32 %v774, %v782
    %v785 = vtanh.pop %v784
    %787 = vrot.lane.b32.xlu0 %v785, 64
    %v788 = vpop.permute.xlu0 %787
    %v790 = vmul.f32 %v772, %v788
    %792 = vrot.lane.b32.xlu0 %v753, 32
    %v793 = vpop.permute.xlu0 %792
    %795 = vst.msk [vmem:[#allocation3 + $0x6] sm:$0x3] %vm333, %v793
    %797 = vrot.lane.b32.xlu0 %v790, 64
    %v798 = vpop.permute.xlu0 %797
    %800 = vst.msk [vmem:[#allocation3 + $0x8] sm:$0x3] %vm339, %v798
    %v801 = vsel %vm341, %v793, %v798
    %v802 = vld [vmem:[#allocation10] sm:$0xff]
    %v803 = vld [vmem:[#allocation10 + $0x8] sm:$0xff]
    %v804 = vld [vmem:[#allocation10 + $0x10] sm:$0xff]
    %v805 = vld [vmem:[#allocation10 + $0x18] sm:$0xff]
    %v806 = vld [vmem:[#allocation10 + $0x20] sm:$0xff]
    %v807 = vld [vmem:[#allocation10 + $0x28] sm:$0xff]
    %v808 = vld [vmem:[#allocation10 + $0x30] sm:$0xff]
    %v809 = vld [vmem:[#allocation10 + $0x38] sm:$0xff]
    %v810 = vld [vmem:[#allocation10 + $0x40] sm:$0xff]
    %v811 = vld [vmem:[#allocation10 + $0x48] sm:$0xff]
    %v812 = vld [vmem:[#allocation10 + $0x50] sm:$0xff]
    %v813 = vld [vmem:[#allocation10 + $0x58] sm:$0xff]
    %v814 = vld [vmem:[#allocation10 + $0x60] sm:$0xff]
    %v815 = vld [vmem:[#allocation10 + $0x68] sm:$0xff]
    %v816 = vld [vmem:[#allocation10 + $0x70] sm:$0xff]
    %v817 = vld [vmem:[#allocation10 + $0x78] sm:$0xff]
    %v819 = vsel %vm204, %v801, 0
    %821 = vmatpush.msra.mxu0 0.0
    %822 = vmatpush.msra.mxu0 0.0
    %823 = vmatpush.msra.mxu0 0.0
    %824 = vmatpush.msra.mxu0 0.0
    %825 = vmatpush.msra.mxu0 0.0
    %826 = vmatpush.msra.mxu0 0.0
    %827 = vmatpush.msra.mxu0 0.0
    %828 = vmatpush.msra.mxu0 0.0
    %829 = vmatpush.msra.mxu0 %v816
    %830 = vmatpush.msra.mxu0 %v814
    %831 = vmatpush.msra.mxu0 %v812
    %832 = vmatpush.msra.mxu0 %v810
    %833 = vmatpush.msra.mxu0 %v808
    %834 = vmatpush.msra.mxu0 %v806
    %835 = vmatpush.msra.mxu0 %v804
    %836 = vmatpush.msra.mxu0 %v802
    %837 = vmatmul.f32.gmra.mxu0 %v819
    %v838 = vpop.f32.mrf.mxu0
    %v839 = vadd.f32 0.0, %v838
    %840 = vdwg.mxu0
    %841 = vmatpush.msra.mxu0 0.0
    %842 = vmatpush.msra.mxu0 0.0
    %843 = vmatpush.msra.mxu0 0.0
    %844 = vmatpush.msra.mxu0 0.0
    %845 = vmatpush.msra.mxu0 0.0
    %846 = vmatpush.msra.mxu0 0.0
    %847 = vmatpush.msra.mxu0 0.0
    %848 = vmatpush.msra.mxu0 0.0
    %849 = vmatpush.msra.mxu0 %v817
    %850 = vmatpush.msra.mxu0 %v815
    %851 = vmatpush.msra.mxu0 %v813
    %852 = vmatpush.msra.mxu0 %v811
    %853 = vmatpush.msra.mxu0 %v809
    %854 = vmatpush.msra.mxu0 %v807
    %855 = vmatpush.msra.mxu0 %v805
    %856 = vmatpush.msra.mxu0 %v803
    %857 = vmatmul.f32.gmra.mxu0 %v819
    %v858 = vpop.f32.mrf.mxu0
    %v859 = vadd.f32 0.0, %v858
    %860 = vdwg.mxu0
    %v861 = vld [vmem:[#allocation2 + $0x10] sm:$0x3]
    %v862 = vld [vmem:[#allocation2 + $0x8] sm:$0xc0]
    %v863 = vadd.f32 %v839, %v861
    %v865 = vrot.slane %v862, 6
    %v867 = vadd.f32 %v859, %v865
    %v868 = vxor.u32 %v863, 2147483648
    %v869 = vmul.f32 %v868, 1.442695
    %v870 = vpow.pop %v869
    %v871 = vadd.f32 %v870, 1.0
    %v872 = vrcp.pop %v871
    %v873 = vmul.f32 %v871, %v872
    %v874 = vsub.f32 1.0, %v873
    %v875 = vmul.f32 %v872, %v874
    %v876 = vadd.f32 %v872, %v875
    %vm877 = vweird.f32 %v871
    %vm878 = vweird.f32 %v872
    %vm879 = vmor %vm877, %vm878
    %v880 = vsel %vm879, %v872, %v876
    %v881 = vand.u32 2147483647, %v871
    %vm882 = vcmp.eq.f32.partialorder %v881, 8.507059e+37
    %v883 = vand.u32 %v871, 2147483648
    %v884 = vor.u32 1.1754944e-38, %v883
    %v885 = vsel %vm882, %v884, %v880
    %v886 = vmul.f32 1.0, %v885
    %v887 = vtanh.pop %v863
    %v888 = vmul.f32 %v886, %v747
    %890 = vrot.lane.b32.xlu0 %v887, 64
    %v891 = vpop.permute.xlu0 %890
    %v893 = vmul.f32 %v886, %v891
    %895 = vrot.lane.b32.xlu0 %v893, 32
    %v896 = vpop.permute.xlu0 %895
    %v898 = vadd.f32 %v888, %v896
    %v899 = vtanh.pop %v898
    %901 = vrot.lane.b32.xlu0 %v899, 64
    %v902 = vpop.permute.xlu0 %901
    %v904 = vmul.f32 %v886, %v902
    %v905 = vxor.u32 %v867, 2147483648
    %v906 = vmul.f32 %v905, 1.442695
    %v907 = vpow.pop %v906
    %v908 = vadd.f32 %v907, 1.0
    %v909 = vrcp.pop %v908
    %v910 = vmul.f32 %v908, %v909
    %v911 = vsub.f32 1.0, %v910
    %v912 = vmul.f32 %v909, %v911
    %v913 = vadd.f32 %v909, %v912
    %vm914 = vweird.f32 %v908
    %vm915 = vweird.f32 %v909
    %vm916 = vmor %vm914, %vm915
    %v917 = vsel %vm916, %v909, %v913
    %v918 = vand.u32 2147483647, %v908
    %vm919 = vcmp.eq.f32.partialorder %v918, 8.507059e+37
    %v920 = vand.u32 %v908, 2147483648
    %v921 = vor.u32 1.1754944e-38, %v920
    %v922 = vsel %vm919, %v921, %v917
    %v923 = vmul.f32 1.0, %v922
    %v924 = vtanh.pop %v867
    %v925 = vmul.f32 %v923, %v784
    %927 = vrot.lane.b32.xlu0 %v924, 64
    %v928 = vpop.permute.xlu0 %927
    %v930 = vmul.f32 %v923, %v928
    %932 = vrot.lane.b32.xlu0 %v930, 32
    %v933 = vpop.permute.xlu0 %932
    %v935 = vadd.f32 %v925, %v933
    %v936 = vtanh.pop %v935
    %938 = vrot.lane.b32.xlu0 %v936, 64
    %v939 = vpop.permute.xlu0 %938
    %v941 = vmul.f32 %v923, %v939
    %943 = vrot.lane.b32.xlu0 %v904, 32
    %v944 = vpop.permute.xlu0 %943
    %946 = vst.msk [vmem:[#allocation3 + $0x8] sm:$0x3] %vm333, %v944
    %948 = vrot.lane.b32.xlu0 %v941, 64
    %v949 = vpop.permute.xlu0 %948
    %951 = vst.msk [vmem:[#allocation3 + $0x6] sm:$0x3] %vm339, %v949
    %v952 = vsel %vm341, %v944, %v949
    %v953 = vld [vmem:[#allocation10] sm:$0xff]
    %v954 = vld [vmem:[#allocation10 + $0x8] sm:$0xff]
    %v955 = vld [vmem:[#allocation10 + $0x10] sm:$0xff]
    %v956 = vld [vmem:[#allocation10 + $0x18] sm:$0xff]
    %v957 = vld [vmem:[#allocation10 + $0x20] sm:$0xff]
    %v958 = vld [vmem:[#allocation10 + $0x28] sm:$0xff]
    %v959 = vld [vmem:[#allocation10 + $0x30] sm:$0xff]
    %v960 = vld [vmem:[#allocation10 + $0x38] sm:$0xff]
    %v961 = vld [vmem:[#allocation10 + $0x40] sm:$0xff]
    %v962 = vld [vmem:[#allocation10 + $0x48] sm:$0xff]
    %v963 = vld [vmem:[#allocation10 + $0x50] sm:$0xff]
    %v964 = vld [vmem:[#allocation10 + $0x58] sm:$0xff]
    %v965 = vld [vmem:[#allocation10 + $0x60] sm:$0xff]
    %v966 = vld [vmem:[#allocation10 + $0x68] sm:$0xff]
    %v967 = vld [vmem:[#allocation10 + $0x70] sm:$0xff]
    %v968 = vld [vmem:[#allocation10 + $0x78] sm:$0xff]
    %v970 = vsel %vm204, %v952, 0
    %972 = vmatpush.msra.mxu0 0.0
    %973 = vmatpush.msra.mxu0 0.0
    %974 = vmatpush.msra.mxu0 0.0
    %975 = vmatpush.msra.mxu0 0.0
    %976 = vmatpush.msra.mxu0 0.0
    %977 = vmatpush.msra.mxu0 0.0
    %978 = vmatpush.msra.mxu0 0.0
    %979 = vmatpush.msra.mxu0 0.0
    %980 = vmatpush.msra.mxu0 %v967
    %981 = vmatpush.msra.mxu0 %v965
    %982 = vmatpush.msra.mxu0 %v963
    %983 = vmatpush.msra.mxu0 %v961
    %984 = vmatpush.msra.mxu0 %v959
    %985 = vmatpush.msra.mxu0 %v957
    %986 = vmatpush.msra.mxu0 %v955
    %987 = vmatpush.msra.mxu0 %v953
    %988 = vmatmul.f32.gmra.mxu0 %v970
    %v989 = vpop.f32.mrf.mxu0
    %v990 = vadd.f32 0.0, %v989
    %991 = vdwg.mxu0
    %992 = vmatpush.msra.mxu0 0.0
    %993 = vmatpush.msra.mxu0 0.0
    %994 = vmatpush.msra.mxu0 0.0
    %995 = vmatpush.msra.mxu0 0.0
    %996 = vmatpush.msra.mxu0 0.0
    %997 = vmatpush.msra.mxu0 0.0
    %998 = vmatpush.msra.mxu0 0.0
    %999 = vmatpush.msra.mxu0 0.0
    %1000 = vmatpush.msra.mxu0 %v968
    %1001 = vmatpush.msra.mxu0 %v966
    %1002 = vmatpush.msra.mxu0 %v964
    %1003 = vmatpush.msra.mxu0 %v962
    %1004 = vmatpush.msra.mxu0 %v960
    %1005 = vmatpush.msra.mxu0 %v958
    %1006 = vmatpush.msra.mxu0 %v956
    %1007 = vmatpush.msra.mxu0 %v954
    %1008 = vmatmul.f32.gmra.mxu0 %v970
    %v1009 = vpop.f32.mrf.mxu0
    %v1010 = vadd.f32 0.0, %v1009
    %1011 = vdwg.mxu0
    %v1012 = vld [vmem:[#allocation2 + $0x10] sm:$0xc]
    %v1013 = vld [vmem:[#allocation2 + $0x8] sm:$0x30]
    %v1015 = vrot.slane %v1012, 2
    %v1017 = vadd.f32 %v990, %v1015
    %v1019 = vrot.slane %v1013, 4
    %v1021 = vadd.f32 %v1010, %v1019
    %v1022 = vxor.u32 %v1017, 2147483648
    %v1023 = vmul.f32 %v1022, 1.442695
    %v1024 = vpow.pop %v1023
    %v1025 = vadd.f32 %v1024, 1.0
    %v1026 = vrcp.pop %v1025
    %v1027 = vmul.f32 %v1025, %v1026
    %v1028 = vsub.f32 1.0, %v1027
    %v1029 = vmul.f32 %v1026, %v1028
    %v1030 = vadd.f32 %v1026, %v1029
    %vm1031 = vweird.f32 %v1025
    %vm1032 = vweird.f32 %v1026
    %vm1033 = vmor %vm1031, %vm1032
    %v1034 = vsel %vm1033, %v1026, %v1030
    %v1035 = vand.u32 2147483647, %v1025
    %vm1036 = vcmp.eq.f32.partialorder %v1035, 8.507059e+37
    %v1037 = vand.u32 %v1025, 2147483648
    %v1038 = vor.u32 1.1754944e-38, %v1037
    %v1039 = vsel %vm1036, %v1038, %v1034
    %v1040 = vmul.f32 1.0, %v1039
    %v1041 = vtanh.pop %v1017
    %v1042 = vmul.f32 %v1040, %v898
    %1044 = vrot.lane.b32.xlu0 %v1041, 64
    %v1045 = vpop.permute.xlu0 %1044
    %v1047 = vmul.f32 %v1040, %v1045
    %1049 = vrot.lane.b32.xlu0 %v1047, 32
    %v1050 = vpop.permute.xlu0 %1049
    %v1052 = vadd.f32 %v1042, %v1050
    %v1053 = vtanh.pop %v1052
    %1055 = vrot.lane.b32.xlu0 %v1053, 64
    %v1056 = vpop.permute.xlu0 %1055
    %v1058 = vmul.f32 %v1040, %v1056
    %v1059 = vxor.u32 %v1021, 2147483648
    %v1060 = vmul.f32 %v1059, 1.442695
    %v1061 = vpow.pop %v1060
    %v1062 = vadd.f32 %v1061, 1.0
    %v1063 = vrcp.pop %v1062
    %v1064 = vmul.f32 %v1062, %v1063
    %v1065 = vsub.f32 1.0, %v1064
    %v1066 = vmul.f32 %v1063, %v1065
    %v1067 = vadd.f32 %v1063, %v1066
    %vm1068 = vweird.f32 %v1062
    %vm1069 = vweird.f32 %v1063
    %vm1070 = vmor %vm1068, %vm1069
    %v1071 = vsel %vm1070, %v1063, %v1067
    %v1072 = vand.u32 2147483647, %v1062
    %vm1073 = vcmp.eq.f32.partialorder %v1072, 8.507059e+37
    %v1074 = vand.u32 %v1062, 2147483648
    %v1075 = vor.u32 1.1754944e-38, %v1074
    %v1076 = vsel %vm1073, %v1075, %v1071
    %v1077 = vmul.f32 1.0, %v1076
    %v1078 = vtanh.pop %v1021
    %v1079 = vmul.f32 %v1077, %v935
    %1081 = vrot.lane.b32.xlu0 %v1078, 64
    %v1082 = vpop.permute.xlu0 %1081
    %v1084 = vmul.f32 %v1077, %v1082
    %1086 = vrot.lane.b32.xlu0 %v1084, 32
    %v1087 = vpop.permute.xlu0 %1086
    %v1089 = vadd.f32 %v1079, %v1087
    %v1090 = vtanh.pop %v1089
    %1092 = vrot.lane.b32.xlu0 %v1090, 64
    %v1093 = vpop.permute.xlu0 %1092
    %v1095 = vmul.f32 %v1077, %v1093
    %1097 = vrot.lane.b32.xlu0 %v1058, 32
    %v1098 = vpop.permute.xlu0 %1097
    %1100 = vst.msk [vmem:[#allocation3 + $0xa] sm:$0x3] %vm333, %v1098
    %1102 = vrot.lane.b32.xlu0 %v1095, 64
    %v1103 = vpop.permute.xlu0 %1102
    %1105 = vst.msk [vmem:[#allocation3 + $0x4] sm:$0x3] %vm339, %v1103
    %v1106 = vsel %vm341, %v1098, %v1103
    %v1107 = vld [vmem:[#allocation10] sm:$0xff]
    %v1108 = vld [vmem:[#allocation10 + $0x8] sm:$0xff]
    %v1109 = vld [vmem:[#allocation10 + $0x10] sm:$0xff]
    %v1110 = vld [vmem:[#allocation10 + $0x18] sm:$0xff]
    %v1111 = vld [vmem:[#allocation10 + $0x20] sm:$0xff]
    %v1112 = vld [vmem:[#allocation10 + $0x28] sm:$0xff]
    %v1113 = vld [vmem:[#allocation10 + $0x30] sm:$0xff]
    %v1114 = vld [vmem:[#allocation10 + $0x38] sm:$0xff]
    %v1115 = vld [vmem:[#allocation10 + $0x40] sm:$0xff]
    %v1116 = vld [vmem:[#allocation10 + $0x48] sm:$0xff]
    %v1117 = vld [vmem:[#allocation10 + $0x50] sm:$0xff]
    %v1118 = vld [vmem:[#allocation10 + $0x58] sm:$0xff]
    %v1119 = vld [vmem:[#allocation10 + $0x60] sm:$0xff]
    %v1120 = vld [vmem:[#allocation10 + $0x68] sm:$0xff]
    %v1121 = vld [vmem:[#allocation10 + $0x70] sm:$0xff]
    %v1122 = vld [vmem:[#allocation10 + $0x78] sm:$0xff]
    %v1124 = vsel %vm204, %v1106, 0
    %1126 = vmatpush.msra.mxu0 0.0
    %1127 = vmatpush.msra.mxu0 0.0
    %1128 = vmatpush.msra.mxu0 0.0
    %1129 = vmatpush.msra.mxu0 0.0
    %1130 = vmatpush.msra.mxu0 0.0
    %1131 = vmatpush.msra.mxu0 0.0
    %1132 = vmatpush.msra.mxu0 0.0
    %1133 = vmatpush.msra.mxu0 0.0
    %1134 = vmatpush.msra.mxu0 %v1121
    %1135 = vmatpush.msra.mxu0 %v1119
    %1136 = vmatpush.msra.mxu0 %v1117
    %1137 = vmatpush.msra.mxu0 %v1115
    %1138 = vmatpush.msra.mxu0 %v1113
    %1139 = vmatpush.msra.mxu0 %v1111
    %1140 = vmatpush.msra.mxu0 %v1109
    %1141 = vmatpush.msra.mxu0 %v1107
    %1142 = vmatmul.f32.gmra.mxu0 %v1124
    %v1143 = vpop.f32.mrf.mxu0
    %v1144 = vadd.f32 0.0, %v1143
    %1145 = vdwg.mxu0
    %1146 = vmatpush.msra.mxu0 0.0
    %1147 = vmatpush.msra.mxu0 0.0
    %1148 = vmatpush.msra.mxu0 0.0
    %1149 = vmatpush.msra.mxu0 0.0
    %1150 = vmatpush.msra.mxu0 0.0
    %1151 = vmatpush.msra.mxu0 0.0
    %1152 = vmatpush.msra.mxu0 0.0
    %1153 = vmatpush.msra.mxu0 0.0
    %1154 = vmatpush.msra.mxu0 %v1122
    %1155 = vmatpush.msra.mxu0 %v1120
    %1156 = vmatpush.msra.mxu0 %v1118
    %1157 = vmatpush.msra.mxu0 %v1116
    %1158 = vmatpush.msra.mxu0 %v1114
    %1159 = vmatpush.msra.mxu0 %v1112
    %1160 = vmatpush.msra.mxu0 %v1110
    %1161 = vmatpush.msra.mxu0 %v1108
    %1162 = vmatmul.f32.gmra.mxu0 %v1124
    %v1163 = vpop.f32.mrf.mxu0
    %v1164 = vadd.f32 0.0, %v1163
    %1165 = vdwg.mxu0
    %v1166 = vld [vmem:[#allocation2 + $0x10] sm:$0x30]
    %v1167 = vld [vmem:[#allocation2 + $0x8] sm:$0xc]
    %v1169 = vrot.slane %v1166, 4
    %v1171 = vadd.f32 %v1144, %v1169
    %v1173 = vrot.slane %v1167, 2
    %v1175 = vadd.f32 %v1164, %v1173
    %v1176 = vxor.u32 %v1171, 2147483648
    %v1177 = vmul.f32 %v1176, 1.442695
    %v1178 = vpow.pop %v1177
    %v1179 = vadd.f32 %v1178, 1.0
    %v1180 = vrcp.pop %v1179
    %v1181 = vmul.f32 %v1179, %v1180
    %v1182 = vsub.f32 1.0, %v1181
    %v1183 = vmul.f32 %v1180, %v1182
    %v1184 = vadd.f32 %v1180, %v1183
    %vm1185 = vweird.f32 %v1179
    %vm1186 = vweird.f32 %v1180
    %vm1187 = vmor %vm1185, %vm1186
    %v1188 = vsel %vm1187, %v1180, %v1184
    %v1189 = vand.u32 2147483647, %v1179
    %vm1190 = vcmp.eq.f32.partialorder %v1189, 8.507059e+37
    %v1191 = vand.u32 %v1179, 2147483648
    %v1192 = vor.u32 1.1754944e-38, %v1191
    %v1193 = vsel %vm1190, %v1192, %v1188
    %v1194 = vmul.f32 1.0, %v1193
    %v1195 = vtanh.pop %v1171
    %v1196 = vmul.f32 %v1194, %v1052
    %1198 = vrot.lane.b32.xlu0 %v1195, 64
    %v1199 = vpop.permute.xlu0 %1198
    %v1201 = vmul.f32 %v1194, %v1199
    %1203 = vrot.lane.b32.xlu0 %v1201, 32
    %v1204 = vpop.permute.xlu0 %1203
    %v1206 = vadd.f32 %v1196, %v1204
    %v1207 = vtanh.pop %v1206
    %1209 = vrot.lane.b32.xlu0 %v1207, 64
    %v1210 = vpop.permute.xlu0 %1209
    %v1212 = vmul.f32 %v1194, %v1210
    %v1213 = vxor.u32 %v1175, 2147483648
    %v1214 = vmul.f32 %v1213, 1.442695
    %v1215 = vpow.pop %v1214
    %v1216 = vadd.f32 %v1215, 1.0
    %v1217 = vrcp.pop %v1216
    %v1218 = vmul.f32 %v1216, %v1217
    %v1219 = vsub.f32 1.0, %v1218
    %v1220 = vmul.f32 %v1217, %v1219
    %v1221 = vadd.f32 %v1217, %v1220
    %vm1222 = vweird.f32 %v1216
    %vm1223 = vweird.f32 %v1217
    %vm1224 = vmor %vm1222, %vm1223
    %v1225 = vsel %vm1224, %v1217, %v1221
    %v1226 = vand.u32 2147483647, %v1216
    %vm1227 = vcmp.eq.f32.partialorder %v1226, 8.507059e+37
    %v1228 = vand.u32 %v1216, 2147483648
    %v1229 = vor.u32 1.1754944e-38, %v1228
    %v1230 = vsel %vm1227, %v1229, %v1225
    %v1231 = vmul.f32 1.0, %v1230
    %v1232 = vtanh.pop %v1175
    %v1233 = vmul.f32 %v1231, %v1089
    %1235 = vrot.lane.b32.xlu0 %v1232, 64
    %v1236 = vpop.permute.xlu0 %1235
    %v1238 = vmul.f32 %v1231, %v1236
    %1240 = vrot.lane.b32.xlu0 %v1238, 32
    %v1241 = vpop.permute.xlu0 %1240
    %v1243 = vadd.f32 %v1233, %v1241
    %v1244 = vtanh.pop %v1243
    %1246 = vrot.lane.b32.xlu0 %v1244, 64
    %v1247 = vpop.permute.xlu0 %1246
    %v1249 = vmul.f32 %v1231, %v1247
    %1251 = vrot.lane.b32.xlu0 %v1212, 32
    %v1252 = vpop.permute.xlu0 %1251
    %1254 = vst.msk [vmem:[#allocation3 + $0xc] sm:$0x3] %vm333, %v1252
    %1256 = vrot.lane.b32.xlu0 %v1249, 64
    %v1257 = vpop.permute.xlu0 %1256
    %1259 = vst.msk [vmem:[#allocation3 + $0x2] sm:$0x3] %vm339, %v1257
    %v1260 = vsel %vm341, %v1252, %v1257
    %v1261 = vld [vmem:[#allocation10] sm:$0xff]
    %v1262 = vld [vmem:[#allocation10 + $0x8] sm:$0xff]
    %v1263 = vld [vmem:[#allocation10 + $0x10] sm:$0xff]
    %v1264 = vld [vmem:[#allocation10 + $0x18] sm:$0xff]
    %v1265 = vld [vmem:[#allocation10 + $0x20] sm:$0xff]
    %v1266 = vld [vmem:[#allocation10 + $0x28] sm:$0xff]
    %v1267 = vld [vmem:[#allocation10 + $0x30] sm:$0xff]
    %v1268 = vld [vmem:[#allocation10 + $0x38] sm:$0xff]
    %v1269 = vld [vmem:[#allocation10 + $0x40] sm:$0xff]
    %v1270 = vld [vmem:[#allocation10 + $0x48] sm:$0xff]
    %v1271 = vld [vmem:[#allocation10 + $0x50] sm:$0xff]
    %v1272 = vld [vmem:[#allocation10 + $0x58] sm:$0xff]
    %v1273 = vld [vmem:[#allocation10 + $0x60] sm:$0xff]
    %v1274 = vld [vmem:[#allocation10 + $0x68] sm:$0xff]
    %v1275 = vld [vmem:[#allocation10 + $0x70] sm:$0xff]
    %v1276 = vld [vmem:[#allocation10 + $0x78] sm:$0xff]
    %v1278 = vsel %vm204, %v1260, 0
    %1280 = vmatpush.msra.mxu0 0.0
    %1281 = vmatpush.msra.mxu0 0.0
    %1282 = vmatpush.msra.mxu0 0.0
    %1283 = vmatpush.msra.mxu0 0.0
    %1284 = vmatpush.msra.mxu0 0.0
    %1285 = vmatpush.msra.mxu0 0.0
    %1286 = vmatpush.msra.mxu0 0.0
    %1287 = vmatpush.msra.mxu0 0.0
    %1288 = vmatpush.msra.mxu0 %v1275
    %1289 = vmatpush.msra.mxu0 %v1273
    %1290 = vmatpush.msra.mxu0 %v1271
    %1291 = vmatpush.msra.mxu0 %v1269
    %1292 = vmatpush.msra.mxu0 %v1267
    %1293 = vmatpush.msra.mxu0 %v1265
    %1294 = vmatpush.msra.mxu0 %v1263
    %1295 = vmatpush.msra.mxu0 %v1261
    %1296 = vmatmul.f32.gmra.mxu0 %v1278
    %v1297 = vpop.f32.mrf.mxu0
    %v1298 = vadd.f32 0.0, %v1297
    %1299 = vdwg.mxu0
    %1300 = vmatpush.msra.mxu0 0.0
    %1301 = vmatpush.msra.mxu0 0.0
    %1302 = vmatpush.msra.mxu0 0.0
    %1303 = vmatpush.msra.mxu0 0.0
    %1304 = vmatpush.msra.mxu0 0.0
    %1305 = vmatpush.msra.mxu0 0.0
    %1306 = vmatpush.msra.mxu0 0.0
    %1307 = vmatpush.msra.mxu0 0.0
    %1308 = vmatpush.msra.mxu0 %v1276
    %1309 = vmatpush.msra.mxu0 %v1274
    %1310 = vmatpush.msra.mxu0 %v1272
    %1311 = vmatpush.msra.mxu0 %v1270
    %1312 = vmatpush.msra.mxu0 %v1268
    %1313 = vmatpush.msra.mxu0 %v1266
    %1314 = vmatpush.msra.mxu0 %v1264
    %1315 = vmatpush.msra.mxu0 %v1262
    %1316 = vmatmul.f32.gmra.mxu0 %v1278
    %v1317 = vpop.f32.mrf.mxu0
    %v1318 = vadd.f32 0.0, %v1317
    %1319 = vdwg.mxu0
    %v1320 = vld [vmem:[#allocation2 + $0x10] sm:$0xc0]
    %v1321 = vld [vmem:[#allocation2 + $0x8] sm:$0x3]
    %v1323 = vrot.slane %v1320, 6
    %v1325 = vadd.f32 %v1298, %v1323
    %v1326 = vadd.f32 %v1318, %v1321
    %v1327 = vxor.u32 %v1325, 2147483648
    %v1328 = vmul.f32 %v1327, 1.442695
    %v1329 = vpow.pop %v1328
    %v1330 = vadd.f32 %v1329, 1.0
    %v1331 = vrcp.pop %v1330
    %v1332 = vmul.f32 %v1330, %v1331
    %v1333 = vsub.f32 1.0, %v1332
    %v1334 = vmul.f32 %v1331, %v1333
    %v1335 = vadd.f32 %v1331, %v1334
    %vm1336 = vweird.f32 %v1330
    %vm1337 = vweird.f32 %v1331
    %vm1338 = vmor %vm1336, %vm1337
    %v1339 = vsel %vm1338, %v1331, %v1335
    %v1340 = vand.u32 2147483647, %v1330
    %vm1341 = vcmp.eq.f32.partialorder %v1340, 8.507059e+37
    %v1342 = vand.u32 %v1330, 2147483648
    %v1343 = vor.u32 1.1754944e-38, %v1342
    %v1344 = vsel %vm1341, %v1343, %v1339
    %v1345 = vmul.f32 1.0, %v1344
    %v1346 = vtanh.pop %v1325
    %v1347 = vmul.f32 %v1345, %v1206
    %1349 = vrot.lane.b32.xlu0 %v1346, 64
    %v1350 = vpop.permute.xlu0 %1349
    %v1352 = vmul.f32 %v1345, %v1350
    %1354 = vrot.lane.b32.xlu0 %v1352, 32
    %v1355 = vpop.permute.xlu0 %1354
    %v1357 = vadd.f32 %v1347, %v1355
    %v1358 = vtanh.pop %v1357
    %1360 = vrot.lane.b32.xlu0 %v1358, 64
    %v1361 = vpop.permute.xlu0 %1360
    %v1363 = vmul.f32 %v1345, %v1361
    %v1364 = vxor.u32 %v1326, 2147483648
    %v1365 = vmul.f32 %v1364, 1.442695
    %v1366 = vpow.pop %v1365
    %v1367 = vadd.f32 %v1366, 1.0
    %v1368 = vrcp.pop %v1367
    %v1369 = vmul.f32 %v1367, %v1368
    %v1370 = vsub.f32 1.0, %v1369
    %v1371 = vmul.f32 %v1368, %v1370
    %v1372 = vadd.f32 %v1368, %v1371
    %vm1373 = vweird.f32 %v1367
    %vm1374 = vweird.f32 %v1368
    %vm1375 = vmor %vm1373, %vm1374
    %v1376 = vsel %vm1375, %v1368, %v1372
    %v1377 = vand.u32 2147483647, %v1367
    %vm1378 = vcmp.eq.f32.partialorder %v1377, 8.507059e+37
    %v1379 = vand.u32 %v1367, 2147483648
    %v1380 = vor.u32 1.1754944e-38, %v1379
    %v1381 = vsel %vm1378, %v1380, %v1376
    %v1382 = vmul.f32 1.0, %v1381
    %v1383 = vtanh.pop %v1326
    %v1384 = vmul.f32 %v1382, %v1243
    %1386 = vrot.lane.b32.xlu0 %v1383, 64
    %v1387 = vpop.permute.xlu0 %1386
    %v1389 = vmul.f32 %v1382, %v1387
    %1391 = vrot.lane.b32.xlu0 %v1389, 32
    %v1392 = vpop.permute.xlu0 %1391
    %v1394 = vadd.f32 %v1384, %v1392
    %v1395 = vtanh.pop %v1394
    %1397 = vrot.lane.b32.xlu0 %v1395, 64
    %v1398 = vpop.permute.xlu0 %1397
    %v1400 = vmul.f32 %v1382, %v1398
    %1402 = vrot.lane.b32.xlu0 %v1363, 32
    %v1403 = vpop.permute.xlu0 %1402
    %1405 = vst.msk [vmem:[#allocation3 + $0xe] sm:$0x3] %vm333, %v1403
    %1407 = vrot.lane.b32.xlu0 %v1400, 64
    %v1408 = vpop.permute.xlu0 %1407
    %1410 = vst.msk [vmem:[#allocation3] sm:$0x3] %vm339, %v1408
    %v1411 = vld [vmem:[#allocation3] sm:$0xff]
    %v1412 = vld [vmem:[#allocation3 + $0x8] sm:$0xff]
    %v1413 = vld [vmem:[#allocation12] sm:$0xff]
    %v1414 = vld [vmem:[#allocation12 + $0x8] sm:$0xff]
    %v1415 = vld [vmem:[#allocation12 + $0x10] sm:$0xff]
    %v1416 = vld [vmem:[#allocation12 + $0x18] sm:$0xff]
    %v1417 = vld [vmem:[#allocation12 + $0x20] sm:$0xff]
    %v1418 = vld [vmem:[#allocation12 + $0x28] sm:$0xff]
    %v1419 = vld [vmem:[#allocation12 + $0x30] sm:$0xff]
    %v1420 = vld [vmem:[#allocation12 + $0x38] sm:$0xff]
    %v1421 = vld [vmem:[#allocation12 + $0x40] sm:$0xff]
    %v1422 = vld [vmem:[#allocation12 + $0x48] sm:$0xff]
    %v1423 = vld [vmem:[#allocation12 + $0x50] sm:$0xff]
    %v1424 = vld [vmem:[#allocation12 + $0x58] sm:$0xff]
    %v1425 = vld [vmem:[#allocation12 + $0x60] sm:$0xff]
    %v1426 = vld [vmem:[#allocation12 + $0x68] sm:$0xff]
    %v1427 = vld [vmem:[#allocation12 + $0x70] sm:$0xff]
    %v1428 = vld [vmem:[#allocation12 + $0x78] sm:$0xff]
    %v1429 = vld [vmem:[%s5] sm:$0x3]
    %v1431 = vperm.slane %v1429, 0
    %v1432 = vperm.slane %v1429, 1
    %v1436 = vsel %vm204, %v1411, 0
    %v1439 = vsel %vm204, %v1412, 0
    %1441 = vmatpush.msra.mxu0 0.0
    %1442 = vmatpush.msra.mxu0 0.0
    %1443 = vmatpush.msra.mxu0 0.0
    %1444 = vmatpush.msra.mxu0 0.0
    %1445 = vmatpush.msra.mxu0 0.0
    %1446 = vmatpush.msra.mxu0 0.0
    %1447 = vmatpush.msra.mxu0 0.0
    %1448 = vmatpush.msra.mxu0 0.0
    %1449 = vmatpush.msra.mxu0 %v1427
    %1450 = vmatpush.msra.mxu0 %v1425
    %1451 = vmatpush.msra.mxu0 %v1423
    %1452 = vmatpush.msra.mxu0 %v1421
    %1453 = vmatpush.msra.mxu0 %v1419
    %1454 = vmatpush.msra.mxu0 %v1417
    %1455 = vmatpush.msra.mxu0 %v1415
    %1456 = vmatpush.msra.mxu0 %v1413
    %1457 = vmatmul.f32.gmra.mxu0 %v1436
    %v1458 = vpop.f32.mrf.mxu0
    %v1459 = vadd.f32 %v1431, %v1458
    %1460 = vmatmul.f32.gmra.mxu0 %v1439
    %v1461 = vpop.f32.mrf.mxu0
    %v1462 = vadd.f32 %v1431, %v1461
    %1463 = vdwg.mxu0
    %1464 = vmatpush.msra.mxu0 0.0
    %1465 = vmatpush.msra.mxu0 0.0
    %1466 = vmatpush.msra.mxu0 0.0
    %1467 = vmatpush.msra.mxu0 0.0
    %1468 = vmatpush.msra.mxu0 0.0
    %1469 = vmatpush.msra.mxu0 0.0
    %1470 = vmatpush.msra.mxu0 0.0
    %1471 = vmatpush.msra.mxu0 0.0
    %1472 = vmatpush.msra.mxu0 %v1428
    %1473 = vmatpush.msra.mxu0 %v1426
    %1474 = vmatpush.msra.mxu0 %v1424
    %1475 = vmatpush.msra.mxu0 %v1422
    %1476 = vmatpush.msra.mxu0 %v1420
    %1477 = vmatpush.msra.mxu0 %v1418
    %1478 = vmatpush.msra.mxu0 %v1416
    %1479 = vmatpush.msra.mxu0 %v1414
    %1480 = vmatmul.f32.gmra.mxu0 %v1436
    %v1481 = vpop.f32.mrf.mxu0
    %v1482 = vadd.f32 %v1432, %v1481
    %1483 = vmatmul.f32.gmra.mxu0 %v1439
    %v1484 = vpop.f32.mrf.mxu0
    %v1485 = vadd.f32 %v1432, %v1484
    %1486 = vdwg.mxu0
    %1487 = vst [vmem:[#allocation2] sm:$0xff] %v1459
    %1488 = vst [vmem:[#allocation2 + $0x8] sm:$0xff] %v1482
    %1489 = vst [vmem:[#allocation2 + $0x10] sm:$0xff] %v1462
    %1490 = vst [vmem:[#allocation2 + $0x18] sm:$0xff] %v1485
    %v1491 = vld [vmem:[#allocation13] sm:$0xff]
    %v1492 = vld [vmem:[#allocation13 + $0x8] sm:$0xff]
    %v1493 = vld [vmem:[#allocation13 + $0x10] sm:$0xff]
    %v1494 = vld [vmem:[#allocation13 + $0x18] sm:$0xff]
    %v1495 = vld [vmem:[#allocation13 + $0x20] sm:$0xff]
    %v1496 = vld [vmem:[#allocation13 + $0x28] sm:$0xff]
    %v1497 = vld [vmem:[#allocation13 + $0x30] sm:$0xff]
    %v1498 = vld [vmem:[#allocation13 + $0x38] sm:$0xff]
    %v1499 = vld [vmem:[#allocation13 + $0x40] sm:$0xff]
    %v1500 = vld [vmem:[#allocation13 + $0x48] sm:$0xff]
    %v1501 = vld [vmem:[#allocation13 + $0x50] sm:$0xff]
    %v1502 = vld [vmem:[#allocation13 + $0x58] sm:$0xff]
    %v1503 = vld [vmem:[#allocation13 + $0x60] sm:$0xff]
    %v1504 = vld [vmem:[#allocation13 + $0x68] sm:$0xff]
    %v1505 = vld [vmem:[#allocation13 + $0x70] sm:$0xff]
    %v1506 = vld [vmem:[#allocation13 + $0x78] sm:$0xff]
    %1507 = vmatpush.msra.mxu0 0.0
    %1508 = vmatpush.msra.mxu0 0.0
    %1509 = vmatpush.msra.mxu0 0.0
    %1510 = vmatpush.msra.mxu0 0.0
    %1511 = vmatpush.msra.mxu0 0.0
    %1512 = vmatpush.msra.mxu0 0.0
    %1513 = vmatpush.msra.mxu0 0.0
    %1514 = vmatpush.msra.mxu0 0.0
    %1515 = vmatpush.msra.mxu0 %v1505
    %1516 = vmatpush.msra.mxu0 %v1503
    %1517 = vmatpush.msra.mxu0 %v1501
    %1518 = vmatpush.msra.mxu0 %v1499
    %1519 = vmatpush.msra.mxu0 %v1497
    %1520 = vmatpush.msra.mxu0 %v1495
    %1521 = vmatpush.msra.mxu0 %v1493
    %1522 = vmatpush.msra.mxu0 %v1491
    %1523 = vmatmul.f32.gmra.mxu0 %v206
    %v1524 = vpop.f32.mrf.mxu0
    %v1525 = vadd.f32 0.0, %v1524
    %1526 = vdwg.mxu0
    %1527 = vmatpush.msra.mxu0 0.0
    %1528 = vmatpush.msra.mxu0 0.0
    %1529 = vmatpush.msra.mxu0 0.0
    %1530 = vmatpush.msra.mxu0 0.0
    %1531 = vmatpush.msra.mxu0 0.0
    %1532 = vmatpush.msra.mxu0 0.0
    %1533 = vmatpush.msra.mxu0 0.0
    %1534 = vmatpush.msra.mxu0 0.0
    %1535 = vmatpush.msra.mxu0 %v1506
    %1536 = vmatpush.msra.mxu0 %v1504
    %1537 = vmatpush.msra.mxu0 %v1502
    %1538 = vmatpush.msra.mxu0 %v1500
    %1539 = vmatpush.msra.mxu0 %v1498
    %1540 = vmatpush.msra.mxu0 %v1496
    %1541 = vmatpush.msra.mxu0 %v1494
    %1542 = vmatpush.msra.mxu0 %v1492
    %1543 = vmatmul.f32.gmra.mxu0 %v206
    %v1544 = vpop.f32.mrf.mxu0
    %v1545 = vadd.f32 0.0, %v1544
    %1546 = vdwg.mxu0
    %v1547 = vld [vmem:[#allocation2] sm:$0x3]
    %v1548 = vld [vmem:[#allocation2 + $0x18] sm:$0xc0]
    %v1549 = vadd.f32 %v1525, %v1547
    %v1551 = vrot.slane %v1548, 6
    %v1553 = vadd.f32 %v1545, %v1551
    %v1554 = vxor.u32 %v1549, 2147483648
    %v1555 = vmul.f32 %v1554, 1.442695
    %v1556 = vpow.pop %v1555
    %v1557 = vadd.f32 %v1556, 1.0
    %v1558 = vrcp.pop %v1557
    %v1559 = vmul.f32 %v1557, %v1558
    %v1560 = vsub.f32 1.0, %v1559
    %v1561 = vmul.f32 %v1558, %v1560
    %v1562 = vadd.f32 %v1558, %v1561
    %vm1563 = vweird.f32 %v1557
    %vm1564 = vweird.f32 %v1558
    %vm1565 = vmor %vm1563, %vm1564
    %v1566 = vsel %vm1565, %v1558, %v1562
    %v1567 = vand.u32 2147483647, %v1557
    %vm1568 = vcmp.eq.f32.partialorder %v1567, 8.507059e+37
    %v1569 = vand.u32 %v1557, 2147483648
    %v1570 = vor.u32 1.1754944e-38, %v1569
    %v1571 = vsel %vm1568, %v1570, %v1566
    %v1572 = vmul.f32 1.0, %v1571
    %v1573 = vtanh.pop %v1549
    %v1574 = vmul.f32 %v1572, 0.0
    %1576 = vrot.lane.b32.xlu0 %v1573, 64
    %v1577 = vpop.permute.xlu0 %1576
    %v1579 = vmul.f32 %v1572, %v1577
    %1581 = vrot.lane.b32.xlu0 %v1579, 32
    %v1582 = vpop.permute.xlu0 %1581
    %v1584 = vadd.f32 %v1574, %v1582
    %v1585 = vtanh.pop %v1584
    %1587 = vrot.lane.b32.xlu0 %v1585, 64
    %v1588 = vpop.permute.xlu0 %1587
    %v1590 = vmul.f32 %v1572, %v1588
    %v1591 = vxor.u32 %v1553, 2147483648
    %v1592 = vmul.f32 %v1591, 1.442695
    %v1593 = vpow.pop %v1592
    %v1594 = vadd.f32 %v1593, 1.0
    %v1595 = vrcp.pop %v1594
    %v1596 = vmul.f32 %v1594, %v1595
    %v1597 = vsub.f32 1.0, %v1596
    %v1598 = vmul.f32 %v1595, %v1597
    %v1599 = vadd.f32 %v1595, %v1598
    %vm1600 = vweird.f32 %v1594
    %vm1601 = vweird.f32 %v1595
    %vm1602 = vmor %vm1600, %vm1601
    %v1603 = vsel %vm1602, %v1595, %v1599
    %v1604 = vand.u32 2147483647, %v1594
    %vm1605 = vcmp.eq.f32.partialorder %v1604, 8.507059e+37
    %v1606 = vand.u32 %v1594, 2147483648
    %v1607 = vor.u32 1.1754944e-38, %v1606
    %v1608 = vsel %vm1605, %v1607, %v1603
    %v1609 = vmul.f32 1.0, %v1608
    %v1610 = vtanh.pop %v1553
    %v1611 = vmul.f32 %v1609, 0.0
    %1613 = vrot.lane.b32.xlu0 %v1610, 64
    %v1614 = vpop.permute.xlu0 %1613
    %v1616 = vmul.f32 %v1609, %v1614
    %1618 = vrot.lane.b32.xlu0 %v1616, 32
    %v1619 = vpop.permute.xlu0 %1618
    %v1621 = vadd.f32 %v1611, %v1619
    %v1622 = vtanh.pop %v1621
    %1624 = vrot.lane.b32.xlu0 %v1622, 64
    %v1625 = vpop.permute.xlu0 %1624
    %v1627 = vmul.f32 %v1609, %v1625
    %1629 = vrot.lane.b32.xlu0 %v1590, 32
    %v1630 = vpop.permute.xlu0 %1629
    %1632 = vst.msk [vmem:[#allocation15] sm:$0x3] %vm333, %v1630
    %1634 = vrot.lane.b32.xlu0 %v1627, 64
    %v1635 = vpop.permute.xlu0 %1634
    %1637 = vst.msk [vmem:[#allocation15 + $0xe] sm:$0x3] %vm339, %v1635
    %v1638 = vsel %vm341, %v1630, %v1635
    %v1639 = vld [vmem:[#allocation13] sm:$0xff]
    %v1640 = vld [vmem:[#allocation13 + $0x8] sm:$0xff]
    %v1641 = vld [vmem:[#allocation13 + $0x10] sm:$0xff]
    %v1642 = vld [vmem:[#allocation13 + $0x18] sm:$0xff]
    %v1643 = vld [vmem:[#allocation13 + $0x20] sm:$0xff]
    %v1644 = vld [vmem:[#allocation13 + $0x28] sm:$0xff]
    %v1645 = vld [vmem:[#allocation13 + $0x30] sm:$0xff]
    %v1646 = vld [vmem:[#allocation13 + $0x38] sm:$0xff]
    %v1647 = vld [vmem:[#allocation13 + $0x40] sm:$0xff]
    %v1648 = vld [vmem:[#allocation13 + $0x48] sm:$0xff]
    %v1649 = vld [vmem:[#allocation13 + $0x50] sm:$0xff]
    %v1650 = vld [vmem:[#allocation13 + $0x58] sm:$0xff]
    %v1651 = vld [vmem:[#allocation13 + $0x60] sm:$0xff]
    %v1652 = vld [vmem:[#allocation13 + $0x68] sm:$0xff]
    %v1653 = vld [vmem:[#allocation13 + $0x70] sm:$0xff]
    %v1654 = vld [vmem:[#allocation13 + $0x78] sm:$0xff]
    %v1656 = vsel %vm204, %v1638, 0
    %1658 = vmatpush.msra.mxu0 0.0
    %1659 = vmatpush.msra.mxu0 0.0
    %1660 = vmatpush.msra.mxu0 0.0
    %1661 = vmatpush.msra.mxu0 0.0
    %1662 = vmatpush.msra.mxu0 0.0
    %1663 = vmatpush.msra.mxu0 0.0
    %1664 = vmatpush.msra.mxu0 0.0
    %1665 = vmatpush.msra.mxu0 0.0
    %1666 = vmatpush.msra.mxu0 %v1653
    %1667 = vmatpush.msra.mxu0 %v1651
    %1668 = vmatpush.msra.mxu0 %v1649
    %1669 = vmatpush.msra.mxu0 %v1647
    %1670 = vmatpush.msra.mxu0 %v1645
    %1671 = vmatpush.msra.mxu0 %v1643
    %1672 = vmatpush.msra.mxu0 %v1641
    %1673 = vmatpush.msra.mxu0 %v1639
    %1674 = vmatmul.f32.gmra.mxu0 %v1656
    %v1675 = vpop.f32.mrf.mxu0
    %v1676 = vadd.f32 0.0, %v1675
    %1677 = vdwg.mxu0
    %1678 = vmatpush.msra.mxu0 0.0
    %1679 = vmatpush.msra.mxu0 0.0
    %1680 = vmatpush.msra.mxu0 0.0
    %1681 = vmatpush.msra.mxu0 0.0
    %1682 = vmatpush.msra.mxu0 0.0
    %1683 = vmatpush.msra.mxu0 0.0
    %1684 = vmatpush.msra.mxu0 0.0
    %1685 = vmatpush.msra.mxu0 0.0
    %1686 = vmatpush.msra.mxu0 %v1654
    %1687 = vmatpush.msra.mxu0 %v1652
    %1688 = vmatpush.msra.mxu0 %v1650
    %1689 = vmatpush.msra.mxu0 %v1648
    %1690 = vmatpush.msra.mxu0 %v1646
    %1691 = vmatpush.msra.mxu0 %v1644
    %1692 = vmatpush.msra.mxu0 %v1642
    %1693 = vmatpush.msra.mxu0 %v1640
    %1694 = vmatmul.f32.gmra.mxu0 %v1656
    %v1695 = vpop.f32.mrf.mxu0
    %v1696 = vadd.f32 0.0, %v1695
    %1697 = vdwg.mxu0
    %v1698 = vld [vmem:[#allocation2] sm:$0xc]
    %v1699 = vld [vmem:[#allocation2 + $0x18] sm:$0x30]
    %v1701 = vrot.slane %v1698, 2
    %v1703 = vadd.f32 %v1676, %v1701
    %v1705 = vrot.slane %v1699, 4
    %v1707 = vadd.f32 %v1696, %v1705
    %v1708 = vxor.u32 %v1703, 2147483648
    %v1709 = vmul.f32 %v1708, 1.442695
    %v1710 = vpow.pop %v1709
    %v1711 = vadd.f32 %v1710, 1.0
    %v1712 = vrcp.pop %v1711
    %v1713 = vmul.f32 %v1711, %v1712
    %v1714 = vsub.f32 1.0, %v1713
    %v1715 = vmul.f32 %v1712, %v1714
    %v1716 = vadd.f32 %v1712, %v1715
    %vm1717 = vweird.f32 %v1711
    %vm1718 = vweird.f32 %v1712
    %vm1719 = vmor %vm1717, %vm1718
    %v1720 = vsel %vm1719, %v1712, %v1716
    %v1721 = vand.u32 2147483647, %v1711
    %vm1722 = vcmp.eq.f32.partialorder %v1721, 8.507059e+37
    %v1723 = vand.u32 %v1711, 2147483648
    %v1724 = vor.u32 1.1754944e-38, %v1723
    %v1725 = vsel %vm1722, %v1724, %v1720
    %v1726 = vmul.f32 1.0, %v1725
    %v1727 = vtanh.pop %v1703
    %v1728 = vmul.f32 %v1726, %v1584
    %1730 = vrot.lane.b32.xlu0 %v1727, 64
    %v1731 = vpop.permute.xlu0 %1730
    %v1733 = vmul.f32 %v1726, %v1731
    %1735 = vrot.lane.b32.xlu0 %v1733, 32
    %v1736 = vpop.permute.xlu0 %1735
    %v1738 = vadd.f32 %v1728, %v1736
    %v1739 = vtanh.pop %v1738
    %1741 = vrot.lane.b32.xlu0 %v1739, 64
    %v1742 = vpop.permute.xlu0 %1741
    %v1744 = vmul.f32 %v1726, %v1742
    %v1745 = vxor.u32 %v1707, 2147483648
    %v1746 = vmul.f32 %v1745, 1.442695
    %v1747 = vpow.pop %v1746
    %v1748 = vadd.f32 %v1747, 1.0
    %v1749 = vrcp.pop %v1748
    %v1750 = vmul.f32 %v1748, %v1749
    %v1751 = vsub.f32 1.0, %v1750
    %v1752 = vmul.f32 %v1749, %v1751
    %v1753 = vadd.f32 %v1749, %v1752
    %vm1754 = vweird.f32 %v1748
    %vm1755 = vweird.f32 %v1749
    %vm1756 = vmor %vm1754, %vm1755
    %v1757 = vsel %vm1756, %v1749, %v1753
    %v1758 = vand.u32 2147483647, %v1748
    %vm1759 = vcmp.eq.f32.partialorder %v1758, 8.507059e+37
    %v1760 = vand.u32 %v1748, 2147483648
    %v1761 = vor.u32 1.1754944e-38, %v1760
    %v1762 = vsel %vm1759, %v1761, %v1757
    %v1763 = vmul.f32 1.0, %v1762
    %v1764 = vtanh.pop %v1707
    %v1765 = vmul.f32 %v1763, %v1621
    %1767 = vrot.lane.b32.xlu0 %v1764, 64
    %v1768 = vpop.permute.xlu0 %1767
    %v1770 = vmul.f32 %v1763, %v1768
    %1772 = vrot.lane.b32.xlu0 %v1770, 32
    %v1773 = vpop.permute.xlu0 %1772
    %v1775 = vadd.f32 %v1765, %v1773
    %v1776 = vtanh.pop %v1775
    %1778 = vrot.lane.b32.xlu0 %v1776, 64
    %v1779 = vpop.permute.xlu0 %1778
    %v1781 = vmul.f32 %v1763, %v1779
    %1783 = vrot.lane.b32.xlu0 %v1744, 32
    %v1784 = vpop.permute.xlu0 %1783
    %1786 = vst.msk [vmem:[#allocation15 + $0x2] sm:$0x3] %vm333, %v1784
    %1788 = vrot.lane.b32.xlu0 %v1781, 64
    %v1789 = vpop.permute.xlu0 %1788
    %1791 = vst.msk [vmem:[#allocation15 + $0xc] sm:$0x3] %vm339, %v1789
    %v1792 = vsel %vm341, %v1784, %v1789
    %v1793 = vld [vmem:[#allocation13] sm:$0xff]
    %v1794 = vld [vmem:[#allocation13 + $0x8] sm:$0xff]
    %v1795 = vld [vmem:[#allocation13 + $0x10] sm:$0xff]
    %v1796 = vld [vmem:[#allocation13 + $0x18] sm:$0xff]
    %v1797 = vld [vmem:[#allocation13 + $0x20] sm:$0xff]
    %v1798 = vld [vmem:[#allocation13 + $0x28] sm:$0xff]
    %v1799 = vld [vmem:[#allocation13 + $0x30] sm:$0xff]
    %v1800 = vld [vmem:[#allocation13 + $0x38] sm:$0xff]
    %v1801 = vld [vmem:[#allocation13 + $0x40] sm:$0xff]
    %v1802 = vld [vmem:[#allocation13 + $0x48] sm:$0xff]
    %v1803 = vld [vmem:[#allocation13 + $0x50] sm:$0xff]
    %v1804 = vld [vmem:[#allocation13 + $0x58] sm:$0xff]
    %v1805 = vld [vmem:[#allocation13 + $0x60] sm:$0xff]
    %v1806 = vld [vmem:[#allocation13 + $0x68] sm:$0xff]
    %v1807 = vld [vmem:[#allocation13 + $0x70] sm:$0xff]
    %v1808 = vld [vmem:[#allocation13 + $0x78] sm:$0xff]
    %v1810 = vsel %vm204, %v1792, 0
    %1812 = vmatpush.msra.mxu0 0.0
    %1813 = vmatpush.msra.mxu0 0.0
    %1814 = vmatpush.msra.mxu0 0.0
    %1815 = vmatpush.msra.mxu0 0.0
    %1816 = vmatpush.msra.mxu0 0.0
    %1817 = vmatpush.msra.mxu0 0.0
    %1818 = vmatpush.msra.mxu0 0.0
    %1819 = vmatpush.msra.mxu0 0.0
    %1820 = vmatpush.msra.mxu0 %v1807
    %1821 = vmatpush.msra.mxu0 %v1805
    %1822 = vmatpush.msra.mxu0 %v1803
    %1823 = vmatpush.msra.mxu0 %v1801
    %1824 = vmatpush.msra.mxu0 %v1799
    %1825 = vmatpush.msra.mxu0 %v1797
    %1826 = vmatpush.msra.mxu0 %v1795
    %1827 = vmatpush.msra.mxu0 %v1793
    %1828 = vmatmul.f32.gmra.mxu0 %v1810
    %v1829 = vpop.f32.mrf.mxu0
    %v1830 = vadd.f32 0.0, %v1829
    %1831 = vdwg.mxu0
    %1832 = vmatpush.msra.mxu0 0.0
    %1833 = vmatpush.msra.mxu0 0.0
    %1834 = vmatpush.msra.mxu0 0.0
    %1835 = vmatpush.msra.mxu0 0.0
    %1836 = vmatpush.msra.mxu0 0.0
    %1837 = vmatpush.msra.mxu0 0.0
    %1838 = vmatpush.msra.mxu0 0.0
    %1839 = vmatpush.msra.mxu0 0.0
    %1840 = vmatpush.msra.mxu0 %v1808
    %1841 = vmatpush.msra.mxu0 %v1806
    %1842 = vmatpush.msra.mxu0 %v1804
    %1843 = vmatpush.msra.mxu0 %v1802
    %1844 = vmatpush.msra.mxu0 %v1800
    %1845 = vmatpush.msra.mxu0 %v1798
    %1846 = vmatpush.msra.mxu0 %v1796
    %1847 = vmatpush.msra.mxu0 %v1794
    %1848 = vmatmul.f32.gmra.mxu0 %v1810
    %v1849 = vpop.f32.mrf.mxu0
    %v1850 = vadd.f32 0.0, %v1849
    %1851 = vdwg.mxu0
    %v1852 = vld [vmem:[#allocation2] sm:$0x30]
    %v1853 = vld [vmem:[#allocation2 + $0x18] sm:$0xc]
    %v1855 = vrot.slane %v1852, 4
    %v1857 = vadd.f32 %v1830, %v1855
    %v1859 = vrot.slane %v1853, 2
    %v1861 = vadd.f32 %v1850, %v1859
    %v1862 = vxor.u32 %v1857, 2147483648
    %v1863 = vmul.f32 %v1862, 1.442695
    %v1864 = vpow.pop %v1863
    %v1865 = vadd.f32 %v1864, 1.0
    %v1866 = vrcp.pop %v1865
    %v1867 = vmul.f32 %v1865, %v1866
    %v1868 = vsub.f32 1.0, %v1867
    %v1869 = vmul.f32 %v1866, %v1868
    %v1870 = vadd.f32 %v1866, %v1869
    %vm1871 = vweird.f32 %v1865
    %vm1872 = vweird.f32 %v1866
    %vm1873 = vmor %vm1871, %vm1872
    %v1874 = vsel %vm1873, %v1866, %v1870
    %v1875 = vand.u32 2147483647, %v1865
    %vm1876 = vcmp.eq.f32.partialorder %v1875, 8.507059e+37
    %v1877 = vand.u32 %v1865, 2147483648
    %v1878 = vor.u32 1.1754944e-38, %v1877
    %v1879 = vsel %vm1876, %v1878, %v1874
    %v1880 = vmul.f32 1.0, %v1879
    %v1881 = vtanh.pop %v1857
    %v1882 = vmul.f32 %v1880, %v1738
    %1884 = vrot.lane.b32.xlu0 %v1881, 64
    %v1885 = vpop.permute.xlu0 %1884
    %v1887 = vmul.f32 %v1880, %v1885
    %1889 = vrot.lane.b32.xlu0 %v1887, 32
    %v1890 = vpop.permute.xlu0 %1889
    %v1892 = vadd.f32 %v1882, %v1890
    %v1893 = vtanh.pop %v1892
    %1895 = vrot.lane.b32.xlu0 %v1893, 64
    %v1896 = vpop.permute.xlu0 %1895
    %v1898 = vmul.f32 %v1880, %v1896
    %v1899 = vxor.u32 %v1861, 2147483648
    %v1900 = vmul.f32 %v1899, 1.442695
    %v1901 = vpow.pop %v1900
    %v1902 = vadd.f32 %v1901, 1.0
    %v1903 = vrcp.pop %v1902
    %v1904 = vmul.f32 %v1902, %v1903
    %v1905 = vsub.f32 1.0, %v1904
    %v1906 = vmul.f32 %v1903, %v1905
    %v1907 = vadd.f32 %v1903, %v1906
    %vm1908 = vweird.f32 %v1902
    %vm1909 = vweird.f32 %v1903
    %vm1910 = vmor %vm1908, %vm1909
    %v1911 = vsel %vm1910, %v1903, %v1907
    %v1912 = vand.u32 2147483647, %v1902
    %vm1913 = vcmp.eq.f32.partialorder %v1912, 8.507059e+37
    %v1914 = vand.u32 %v1902, 2147483648
    %v1915 = vor.u32 1.1754944e-38, %v1914
    %v1916 = vsel %vm1913, %v1915, %v1911
    %v1917 = vmul.f32 1.0, %v1916
    %v1918 = vtanh.pop %v1861
    %v1919 = vmul.f32 %v1917, %v1775
    %1921 = vrot.lane.b32.xlu0 %v1918, 64
    %v1922 = vpop.permute.xlu0 %1921
    %v1924 = vmul.f32 %v1917, %v1922
    %1926 = vrot.lane.b32.xlu0 %v1924, 32
    %v1927 = vpop.permute.xlu0 %1926
    %v1929 = vadd.f32 %v1919, %v1927
    %v1930 = vtanh.pop %v1929
    %1932 = vrot.lane.b32.xlu0 %v1930, 64
    %v1933 = vpop.permute.xlu0 %1932
    %v1935 = vmul.f32 %v1917, %v1933
    %1937 = vrot.lane.b32.xlu0 %v1898, 32
    %v1938 = vpop.permute.xlu0 %1937
    %1940 = vst.msk [vmem:[#allocation15 + $0x4] sm:$0x3] %vm333, %v1938
    %1942 = vrot.lane.b32.xlu0 %v1935, 64
    %v1943 = vpop.permute.xlu0 %1942
    %1945 = vst.msk [vmem:[#allocation15 + $0xa] sm:$0x3] %vm339, %v1943
    %v1946 = vsel %vm341, %v1938, %v1943
    %v1947 = vld [vmem:[#allocation13] sm:$0xff]
    %v1948 = vld [vmem:[#allocation13 + $0x8] sm:$0xff]
    %v1949 = vld [vmem:[#allocation13 + $0x10] sm:$0xff]
    %v1950 = vld [vmem:[#allocation13 + $0x18] sm:$0xff]
    %v1951 = vld [vmem:[#allocation13 + $0x20] sm:$0xff]
    %v1952 = vld [vmem:[#allocation13 + $0x28] sm:$0xff]
    %v1953 = vld [vmem:[#allocation13 + $0x30] sm:$0xff]
    %v1954 = vld [vmem:[#allocation13 + $0x38] sm:$0xff]
    %v1955 = vld [vmem:[#allocation13 + $0x40] sm:$0xff]
    %v1956 = vld [vmem:[#allocation13 + $0x48] sm:$0xff]
    %v1957 = vld [vmem:[#allocation13 + $0x50] sm:$0xff]
    %v1958 = vld [vmem:[#allocation13 + $0x58] sm:$0xff]
    %v1959 = vld [vmem:[#allocation13 + $0x60] sm:$0xff]
    %v1960 = vld [vmem:[#allocation13 + $0x68] sm:$0xff]
    %v1961 = vld [vmem:[#allocation13 + $0x70] sm:$0xff]
    %v1962 = vld [vmem:[#allocation13 + $0x78] sm:$0xff]
    %v1964 = vsel %vm204, %v1946, 0
    %1966 = vmatpush.msra.mxu0 0.0
    %1967 = vmatpush.msra.mxu0 0.0
    %1968 = vmatpush.msra.mxu0 0.0
    %1969 = vmatpush.msra.mxu0 0.0
    %1970 = vmatpush.msra.mxu0 0.0
    %1971 = vmatpush.msra.mxu0 0.0
    %1972 = vmatpush.msra.mxu0 0.0
    %1973 = vmatpush.msra.mxu0 0.0
    %1974 = vmatpush.msra.mxu0 %v1961
    %1975 = vmatpush.msra.mxu0 %v1959
    %1976 = vmatpush.msra.mxu0 %v1957
    %1977 = vmatpush.msra.mxu0 %v1955
    %1978 = vmatpush.msra.mxu0 %v1953
    %1979 = vmatpush.msra.mxu0 %v1951
    %1980 = vmatpush.msra.mxu0 %v1949
    %1981 = vmatpush.msra.mxu0 %v1947
    %1982 = vmatmul.f32.gmra.mxu0 %v1964
    %v1983 = vpop.f32.mrf.mxu0
    %v1984 = vadd.f32 0.0, %v1983
    %1985 = vdwg.mxu0
    %1986 = vmatpush.msra.mxu0 0.0
    %1987 = vmatpush.msra.mxu0 0.0
    %1988 = vmatpush.msra.mxu0 0.0
    %1989 = vmatpush.msra.mxu0 0.0
    %1990 = vmatpush.msra.mxu0 0.0
    %1991 = vmatpush.msra.mxu0 0.0
    %1992 = vmatpush.msra.mxu0 0.0
    %1993 = vmatpush.msra.mxu0 0.0
    %1994 = vmatpush.msra.mxu0 %v1962
    %1995 = vmatpush.msra.mxu0 %v1960
    %1996 = vmatpush.msra.mxu0 %v1958
    %1997 = vmatpush.msra.mxu0 %v1956
    %1998 = vmatpush.msra.mxu0 %v1954
    %1999 = vmatpush.msra.mxu0 %v1952
    %2000 = vmatpush.msra.mxu0 %v1950
    %2001 = vmatpush.msra.mxu0 %v1948
    %2002 = vmatmul.f32.gmra.mxu0 %v1964
    %v2003 = vpop.f32.mrf.mxu0
    %v2004 = vadd.f32 0.0, %v2003
    %2005 = vdwg.mxu0
    %v2006 = vld [vmem:[#allocation2] sm:$0xc0]
    %v2007 = vld [vmem:[#allocation2 + $0x18] sm:$0x3]
    %v2009 = vrot.slane %v2006, 6
    %v2011 = vadd.f32 %v1984, %v2009
    %v2012 = vadd.f32 %v2004, %v2007
    %v2013 = vxor.u32 %v2011, 2147483648
    %v2014 = vmul.f32 %v2013, 1.442695
    %v2015 = vpow.pop %v2014
    %v2016 = vadd.f32 %v2015, 1.0
    %v2017 = vrcp.pop %v2016
    %v2018 = vmul.f32 %v2016, %v2017
    %v2019 = vsub.f32 1.0, %v2018
    %v2020 = vmul.f32 %v2017, %v2019
    %v2021 = vadd.f32 %v2017, %v2020
    %vm2022 = vweird.f32 %v2016
    %vm2023 = vweird.f32 %v2017
    %vm2024 = vmor %vm2022, %vm2023
    %v2025 = vsel %vm2024, %v2017, %v2021
    %v2026 = vand.u32 2147483647, %v2016
    %vm2027 = vcmp.eq.f32.partialorder %v2026, 8.507059e+37
    %v2028 = vand.u32 %v2016, 2147483648
    %v2029 = vor.u32 1.1754944e-38, %v2028
    %v2030 = vsel %vm2027, %v2029, %v2025
    %v2031 = vmul.f32 1.0, %v2030
    %v2032 = vtanh.pop %v2011
    %v2033 = vmul.f32 %v2031, %v1892
    %2035 = vrot.lane.b32.xlu0 %v2032, 64
    %v2036 = vpop.permute.xlu0 %2035
    %v2038 = vmul.f32 %v2031, %v2036
    %2040 = vrot.lane.b32.xlu0 %v2038, 32
    %v2041 = vpop.permute.xlu0 %2040
    %v2043 = vadd.f32 %v2033, %v2041
    %v2044 = vtanh.pop %v2043
    %2046 = vrot.lane.b32.xlu0 %v2044, 64
    %v2047 = vpop.permute.xlu0 %2046
    %v2049 = vmul.f32 %v2031, %v2047
    %v2050 = vxor.u32 %v2012, 2147483648
    %v2051 = vmul.f32 %v2050, 1.442695
    %v2052 = vpow.pop %v2051
    %v2053 = vadd.f32 %v2052, 1.0
    %v2054 = vrcp.pop %v2053
    %v2055 = vmul.f32 %v2053, %v2054
    %v2056 = vsub.f32 1.0, %v2055
    %v2057 = vmul.f32 %v2054, %v2056
    %v2058 = vadd.f32 %v2054, %v2057
    %vm2059 = vweird.f32 %v2053
    %vm2060 = vweird.f32 %v2054
    %vm2061 = vmor %vm2059, %vm2060
    %v2062 = vsel %vm2061, %v2054, %v2058
    %v2063 = vand.u32 2147483647, %v2053
    %vm2064 = vcmp.eq.f32.partialorder %v2063, 8.507059e+37
    %v2065 = vand.u32 %v2053, 2147483648
    %v2066 = vor.u32 1.1754944e-38, %v2065
    %v2067 = vsel %vm2064, %v2066, %v2062
    %v2068 = vmul.f32 1.0, %v2067
    %v2069 = vtanh.pop %v2012
    %v2070 = vmul.f32 %v2068, %v1929
    %2072 = vrot.lane.b32.xlu0 %v2069, 64
    %v2073 = vpop.permute.xlu0 %2072
    %v2075 = vmul.f32 %v2068, %v2073
    %2077 = vrot.lane.b32.xlu0 %v2075, 32
    %v2078 = vpop.permute.xlu0 %2077
    %v2080 = vadd.f32 %v2070, %v2078
    %v2081 = vtanh.pop %v2080
    %2083 = vrot.lane.b32.xlu0 %v2081, 64
    %v2084 = vpop.permute.xlu0 %2083
    %v2086 = vmul.f32 %v2068, %v2084
    %2088 = vrot.lane.b32.xlu0 %v2049, 32
    %v2089 = vpop.permute.xlu0 %2088
    %2091 = vst.msk [vmem:[#allocation15 + $0x6] sm:$0x3] %vm333, %v2089
    %2093 = vrot.lane.b32.xlu0 %v2086, 64
    %v2094 = vpop.permute.xlu0 %2093
    %2096 = vst.msk [vmem:[#allocation15 + $0x8] sm:$0x3] %vm339, %v2094
    %v2097 = vsel %vm341, %v2089, %v2094
    %v2098 = vld [vmem:[#allocation13] sm:$0xff]
    %v2099 = vld [vmem:[#allocation13 + $0x8] sm:$0xff]
    %v2100 = vld [vmem:[#allocation13 + $0x10] sm:$0xff]
    %v2101 = vld [vmem:[#allocation13 + $0x18] sm:$0xff]
    %v2102 = vld [vmem:[#allocation13 + $0x20] sm:$0xff]
    %v2103 = vld [vmem:[#allocation13 + $0x28] sm:$0xff]
    %v2104 = vld [vmem:[#allocation13 + $0x30] sm:$0xff]
    %v2105 = vld [vmem:[#allocation13 + $0x38] sm:$0xff]
    %v2106 = vld [vmem:[#allocation13 + $0x40] sm:$0xff]
    %v2107 = vld [vmem:[#allocation13 + $0x48] sm:$0xff]
    %v2108 = vld [vmem:[#allocation13 + $0x50] sm:$0xff]
    %v2109 = vld [vmem:[#allocation13 + $0x58] sm:$0xff]
    %v2110 = vld [vmem:[#allocation13 + $0x60] sm:$0xff]
    %v2111 = vld [vmem:[#allocation13 + $0x68] sm:$0xff]
    %v2112 = vld [vmem:[#allocation13 + $0x70] sm:$0xff]
    %v2113 = vld [vmem:[#allocation13 + $0x78] sm:$0xff]
    %v2115 = vsel %vm204, %v2097, 0
    %2117 = vmatpush.msra.mxu0 0.0
    %2118 = vmatpush.msra.mxu0 0.0
    %2119 = vmatpush.msra.mxu0 0.0
    %2120 = vmatpush.msra.mxu0 0.0
    %2121 = vmatpush.msra.mxu0 0.0
    %2122 = vmatpush.msra.mxu0 0.0
    %2123 = vmatpush.msra.mxu0 0.0
    %2124 = vmatpush.msra.mxu0 0.0
    %2125 = vmatpush.msra.mxu0 %v2112
    %2126 = vmatpush.msra.mxu0 %v2110
    %2127 = vmatpush.msra.mxu0 %v2108
    %2128 = vmatpush.msra.mxu0 %v2106
    %2129 = vmatpush.msra.mxu0 %v2104
    %2130 = vmatpush.msra.mxu0 %v2102
    %2131 = vmatpush.msra.mxu0 %v2100
    %2132 = vmatpush.msra.mxu0 %v2098
    %2133 = vmatmul.f32.gmra.mxu0 %v2115
    %v2134 = vpop.f32.mrf.mxu0
    %v2135 = vadd.f32 0.0, %v2134
    %2136 = vdwg.mxu0
    %2137 = vmatpush.msra.mxu0 0.0
    %2138 = vmatpush.msra.mxu0 0.0
    %2139 = vmatpush.msra.mxu0 0.0
    %2140 = vmatpush.msra.mxu0 0.0
    %2141 = vmatpush.msra.mxu0 0.0
    %2142 = vmatpush.msra.mxu0 0.0
    %2143 = vmatpush.msra.mxu0 0.0
    %2144 = vmatpush.msra.mxu0 0.0
    %2145 = vmatpush.msra.mxu0 %v2113
    %2146 = vmatpush.msra.mxu0 %v2111
    %2147 = vmatpush.msra.mxu0 %v2109
    %2148 = vmatpush.msra.mxu0 %v2107
    %2149 = vmatpush.msra.mxu0 %v2105
    %2150 = vmatpush.msra.mxu0 %v2103
    %2151 = vmatpush.msra.mxu0 %v2101
    %2152 = vmatpush.msra.mxu0 %v2099
    %2153 = vmatmul.f32.gmra.mxu0 %v2115
    %v2154 = vpop.f32.mrf.mxu0
    %v2155 = vadd.f32 0.0, %v2154
    %2156 = vdwg.mxu0
    %v2157 = vld [vmem:[#allocation2 + $0x10] sm:$0x3]
    %v2158 = vld [vmem:[#allocation2 + $0x8] sm:$0xc0]
    %v2159 = vadd.f32 %v2135, %v2157
    %v2161 = vrot.slane %v2158, 6
    %v2163 = vadd.f32 %v2155, %v2161
    %v2164 = vxor.u32 %v2159, 2147483648
    %v2165 = vmul.f32 %v2164, 1.442695
    %v2166 = vpow.pop %v2165
    %v2167 = vadd.f32 %v2166, 1.0
    %v2168 = vrcp.pop %v2167
    %v2169 = vmul.f32 %v2167, %v2168
    %v2170 = vsub.f32 1.0, %v2169
    %v2171 = vmul.f32 %v2168, %v2170
    %v2172 = vadd.f32 %v2168, %v2171
    %vm2173 = vweird.f32 %v2167
    %vm2174 = vweird.f32 %v2168
    %vm2175 = vmor %vm2173, %vm2174
    %v2176 = vsel %vm2175, %v2168, %v2172
    %v2177 = vand.u32 2147483647, %v2167
    %vm2178 = vcmp.eq.f32.partialorder %v2177, 8.507059e+37
    %v2179 = vand.u32 %v2167, 2147483648
    %v2180 = vor.u32 1.1754944e-38, %v2179
    %v2181 = vsel %vm2178, %v2180, %v2176
    %v2182 = vmul.f32 1.0, %v2181
    %v2183 = vtanh.pop %v2159
    %v2184 = vmul.f32 %v2182, %v2043
    %2186 = vrot.lane.b32.xlu0 %v2183, 64
    %v2187 = vpop.permute.xlu0 %2186
    %v2189 = vmul.f32 %v2182, %v2187
    %2191 = vrot.lane.b32.xlu0 %v2189, 32
    %v2192 = vpop.permute.xlu0 %2191
    %v2194 = vadd.f32 %v2184, %v2192
    %v2195 = vtanh.pop %v2194
    %2197 = vrot.lane.b32.xlu0 %v2195, 64
    %v2198 = vpop.permute.xlu0 %2197
    %v2200 = vmul.f32 %v2182, %v2198
    %v2201 = vxor.u32 %v2163, 2147483648
    %v2202 = vmul.f32 %v2201, 1.442695
    %v2203 = vpow.pop %v2202
    %v2204 = vadd.f32 %v2203, 1.0
    %v2205 = vrcp.pop %v2204
    %v2206 = vmul.f32 %v2204, %v2205
    %v2207 = vsub.f32 1.0, %v2206
    %v2208 = vmul.f32 %v2205, %v2207
    %v2209 = vadd.f32 %v2205, %v2208
    %vm2210 = vweird.f32 %v2204
    %vm2211 = vweird.f32 %v2205
    %vm2212 = vmor %vm2210, %vm2211
    %v2213 = vsel %vm2212, %v2205, %v2209
    %v2214 = vand.u32 2147483647, %v2204
    %vm2215 = vcmp.eq.f32.partialorder %v2214, 8.507059e+37
    %v2216 = vand.u32 %v2204, 2147483648
    %v2217 = vor.u32 1.1754944e-38, %v2216
    %v2218 = vsel %vm2215, %v2217, %v2213
    %v2219 = vmul.f32 1.0, %v2218
    %v2220 = vtanh.pop %v2163
    %v2221 = vmul.f32 %v2219, %v2080
    %2223 = vrot.lane.b32.xlu0 %v2220, 64
    %v2224 = vpop.permute.xlu0 %2223
    %v2226 = vmul.f32 %v2219, %v2224
    %2228 = vrot.lane.b32.xlu0 %v2226, 32
    %v2229 = vpop.permute.xlu0 %2228
    %v2231 = vadd.f32 %v2221, %v2229
    %v2232 = vtanh.pop %v2231
    %2234 = vrot.lane.b32.xlu0 %v2232, 64
    %v2235 = vpop.permute.xlu0 %2234
    %v2237 = vmul.f32 %v2219, %v2235
    %2239 = vrot.lane.b32.xlu0 %v2200, 32
    %v2240 = vpop.permute.xlu0 %2239
    %2242 = vst.msk [vmem:[#allocation15 + $0x8] sm:$0x3] %vm333, %v2240
    %2244 = vrot.lane.b32.xlu0 %v2237, 64
    %v2245 = vpop.permute.xlu0 %2244
    %2247 = vst.msk [vmem:[#allocation15 + $0x6] sm:$0x3] %vm339, %v2245
    %v2248 = vsel %vm341, %v2240, %v2245
    %v2249 = vld [vmem:[#allocation13] sm:$0xff]
    %v2250 = vld [vmem:[#allocation13 + $0x8] sm:$0xff]
    %v2251 = vld [vmem:[#allocation13 + $0x10] sm:$0xff]
    %v2252 = vld [vmem:[#allocation13 + $0x18] sm:$0xff]
    %v2253 = vld [vmem:[#allocation13 + $0x20] sm:$0xff]
    %v2254 = vld [vmem:[#allocation13 + $0x28] sm:$0xff]
    %v2255 = vld [vmem:[#allocation13 + $0x30] sm:$0xff]
    %v2256 = vld [vmem:[#allocation13 + $0x38] sm:$0xff]
    %v2257 = vld [vmem:[#allocation13 + $0x40] sm:$0xff]
    %v2258 = vld [vmem:[#allocation13 + $0x48] sm:$0xff]
    %v2259 = vld [vmem:[#allocation13 + $0x50] sm:$0xff]
    %v2260 = vld [vmem:[#allocation13 + $0x58] sm:$0xff]
    %v2261 = vld [vmem:[#allocation13 + $0x60] sm:$0xff]
    %v2262 = vld [vmem:[#allocation13 + $0x68] sm:$0xff]
    %v2263 = vld [vmem:[#allocation13 + $0x70] sm:$0xff]
    %v2264 = vld [vmem:[#allocation13 + $0x78] sm:$0xff]
    %v2266 = vsel %vm204, %v2248, 0
    %2268 = vmatpush.msra.mxu0 0.0
    %2269 = vmatpush.msra.mxu0 0.0
    %2270 = vmatpush.msra.mxu0 0.0
    %2271 = vmatpush.msra.mxu0 0.0
    %2272 = vmatpush.msra.mxu0 0.0
    %2273 = vmatpush.msra.mxu0 0.0
    %2274 = vmatpush.msra.mxu0 0.0
    %2275 = vmatpush.msra.mxu0 0.0
    %2276 = vmatpush.msra.mxu0 %v2263
    %2277 = vmatpush.msra.mxu0 %v2261
    %2278 = vmatpush.msra.mxu0 %v2259
    %2279 = vmatpush.msra.mxu0 %v2257
    %2280 = vmatpush.msra.mxu0 %v2255
    %2281 = vmatpush.msra.mxu0 %v2253
    %2282 = vmatpush.msra.mxu0 %v2251
    %2283 = vmatpush.msra.mxu0 %v2249
    %2284 = vmatmul.f32.gmra.mxu0 %v2266
    %v2285 = vpop.f32.mrf.mxu0
    %v2286 = vadd.f32 0.0, %v2285
    %2287 = vdwg.mxu0
    %2288 = vmatpush.msra.mxu0 0.0
    %2289 = vmatpush.msra.mxu0 0.0
    %2290 = vmatpush.msra.mxu0 0.0
    %2291 = vmatpush.msra.mxu0 0.0
    %2292 = vmatpush.msra.mxu0 0.0
    %2293 = vmatpush.msra.mxu0 0.0
    %2294 = vmatpush.msra.mxu0 0.0
    %2295 = vmatpush.msra.mxu0 0.0
    %2296 = vmatpush.msra.mxu0 %v2264
    %2297 = vmatpush.msra.mxu0 %v2262
    %2298 = vmatpush.msra.mxu0 %v2260
    %2299 = vmatpush.msra.mxu0 %v2258
    %2300 = vmatpush.msra.mxu0 %v2256
    %2301 = vmatpush.msra.mxu0 %v2254
    %2302 = vmatpush.msra.mxu0 %v2252
    %2303 = vmatpush.msra.mxu0 %v2250
    %2304 = vmatmul.f32.gmra.mxu0 %v2266
    %v2305 = vpop.f32.mrf.mxu0
    %v2306 = vadd.f32 0.0, %v2305
    %2307 = vdwg.mxu0
    %v2308 = vld [vmem:[#allocation2 + $0x10] sm:$0xc]
    %v2309 = vld [vmem:[#allocation2 + $0x8] sm:$0x30]
    %v2311 = vrot.slane %v2308, 2
    %v2313 = vadd.f32 %v2286, %v2311
    %v2315 = vrot.slane %v2309, 4
    %v2317 = vadd.f32 %v2306, %v2315
    %v2318 = vxor.u32 %v2313, 2147483648
    %v2319 = vmul.f32 %v2318, 1.442695
    %v2320 = vpow.pop %v2319
    %v2321 = vadd.f32 %v2320, 1.0
    %v2322 = vrcp.pop %v2321
    %v2323 = vmul.f32 %v2321, %v2322
    %v2324 = vsub.f32 1.0, %v2323
    %v2325 = vmul.f32 %v2322, %v2324
    %v2326 = vadd.f32 %v2322, %v2325
    %vm2327 = vweird.f32 %v2321
    %vm2328 = vweird.f32 %v2322
    %vm2329 = vmor %vm2327, %vm2328
    %v2330 = vsel %vm2329, %v2322, %v2326
    %v2331 = vand.u32 2147483647, %v2321
    %vm2332 = vcmp.eq.f32.partialorder %v2331, 8.507059e+37
    %v2333 = vand.u32 %v2321, 2147483648
    %v2334 = vor.u32 1.1754944e-38, %v2333
    %v2335 = vsel %vm2332, %v2334, %v2330
    %v2336 = vmul.f32 1.0, %v2335
    %v2337 = vtanh.pop %v2313
    %v2338 = vmul.f32 %v2336, %v2194
    %2340 = vrot.lane.b32.xlu0 %v2337, 64
    %v2341 = vpop.permute.xlu0 %2340
    %v2343 = vmul.f32 %v2336, %v2341
    %2345 = vrot.lane.b32.xlu0 %v2343, 32
    %v2346 = vpop.permute.xlu0 %2345
    %v2348 = vadd.f32 %v2338, %v2346
    %v2349 = vtanh.pop %v2348
    %2351 = vrot.lane.b32.xlu0 %v2349, 64
    %v2352 = vpop.permute.xlu0 %2351
    %v2354 = vmul.f32 %v2336, %v2352
    %v2355 = vxor.u32 %v2317, 2147483648
    %v2356 = vmul.f32 %v2355, 1.442695
    %v2357 = vpow.pop %v2356
    %v2358 = vadd.f32 %v2357, 1.0
    %v2359 = vrcp.pop %v2358
    %v2360 = vmul.f32 %v2358, %v2359
    %v2361 = vsub.f32 1.0, %v2360
    %v2362 = vmul.f32 %v2359, %v2361
    %v2363 = vadd.f32 %v2359, %v2362
    %vm2364 = vweird.f32 %v2358
    %vm2365 = vweird.f32 %v2359
    %vm2366 = vmor %vm2364, %vm2365
    %v2367 = vsel %vm2366, %v2359, %v2363
    %v2368 = vand.u32 2147483647, %v2358
    %vm2369 = vcmp.eq.f32.partialorder %v2368, 8.507059e+37
    %v2370 = vand.u32 %v2358, 2147483648
    %v2371 = vor.u32 1.1754944e-38, %v2370
    %v2372 = vsel %vm2369, %v2371, %v2367
    %v2373 = vmul.f32 1.0, %v2372
    %v2374 = vtanh.pop %v2317
    %v2375 = vmul.f32 %v2373, %v2231
    %2377 = vrot.lane.b32.xlu0 %v2374, 64
    %v2378 = vpop.permute.xlu0 %2377
    %v2380 = vmul.f32 %v2373, %v2378
    %2382 = vrot.lane.b32.xlu0 %v2380, 32
    %v2383 = vpop.permute.xlu0 %2382
    %v2385 = vadd.f32 %v2375, %v2383
    %v2386 = vtanh.pop %v2385
    %2388 = vrot.lane.b32.xlu0 %v2386, 64
    %v2389 = vpop.permute.xlu0 %2388
    %v2391 = vmul.f32 %v2373, %v2389
    %2393 = vrot.lane.b32.xlu0 %v2354, 32
    %v2394 = vpop.permute.xlu0 %2393
    %2396 = vst.msk [vmem:[#allocation15 + $0xa] sm:$0x3] %vm333, %v2394
    %2398 = vrot.lane.b32.xlu0 %v2391, 64
    %v2399 = vpop.permute.xlu0 %2398
    %2401 = vst.msk [vmem:[#allocation15 + $0x4] sm:$0x3] %vm339, %v2399
    %v2402 = vsel %vm341, %v2394, %v2399
    %v2403 = vld [vmem:[#allocation13] sm:$0xff]
    %v2404 = vld [vmem:[#allocation13 + $0x8] sm:$0xff]
    %v2405 = vld [vmem:[#allocation13 + $0x10] sm:$0xff]
    %v2406 = vld [vmem:[#allocation13 + $0x18] sm:$0xff]
    %v2407 = vld [vmem:[#allocation13 + $0x20] sm:$0xff]
    %v2408 = vld [vmem:[#allocation13 + $0x28] sm:$0xff]
    %v2409 = vld [vmem:[#allocation13 + $0x30] sm:$0xff]
    %v2410 = vld [vmem:[#allocation13 + $0x38] sm:$0xff]
    %v2411 = vld [vmem:[#allocation13 + $0x40] sm:$0xff]
    %v2412 = vld [vmem:[#allocation13 + $0x48] sm:$0xff]
    %v2413 = vld [vmem:[#allocation13 + $0x50] sm:$0xff]
    %v2414 = vld [vmem:[#allocation13 + $0x58] sm:$0xff]
    %v2415 = vld [vmem:[#allocation13 + $0x60] sm:$0xff]
    %v2416 = vld [vmem:[#allocation13 + $0x68] sm:$0xff]
    %v2417 = vld [vmem:[#allocation13 + $0x70] sm:$0xff]
    %v2418 = vld [vmem:[#allocation13 + $0x78] sm:$0xff]
    %v2420 = vsel %vm204, %v2402, 0
    %2422 = vmatpush.msra.mxu0 0.0
    %2423 = vmatpush.msra.mxu0 0.0
    %2424 = vmatpush.msra.mxu0 0.0
    %2425 = vmatpush.msra.mxu0 0.0
    %2426 = vmatpush.msra.mxu0 0.0
    %2427 = vmatpush.msra.mxu0 0.0
    %2428 = vmatpush.msra.mxu0 0.0
    %2429 = vmatpush.msra.mxu0 0.0
    %2430 = vmatpush.msra.mxu0 %v2417
    %2431 = vmatpush.msra.mxu0 %v2415
    %2432 = vmatpush.msra.mxu0 %v2413
    %2433 = vmatpush.msra.mxu0 %v2411
    %2434 = vmatpush.msra.mxu0 %v2409
    %2435 = vmatpush.msra.mxu0 %v2407
    %2436 = vmatpush.msra.mxu0 %v2405
    %2437 = vmatpush.msra.mxu0 %v2403
    %2438 = vmatmul.f32.gmra.mxu0 %v2420
    %v2439 = vpop.f32.mrf.mxu0
    %v2440 = vadd.f32 0.0, %v2439
    %2441 = vdwg.mxu0
    %2442 = vmatpush.msra.mxu0 0.0
    %2443 = vmatpush.msra.mxu0 0.0
    %2444 = vmatpush.msra.mxu0 0.0
    %2445 = vmatpush.msra.mxu0 0.0
    %2446 = vmatpush.msra.mxu0 0.0
    %2447 = vmatpush.msra.mxu0 0.0
    %2448 = vmatpush.msra.mxu0 0.0
    %2449 = vmatpush.msra.mxu0 0.0
    %2450 = vmatpush.msra.mxu0 %v2418
    %2451 = vmatpush.msra.mxu0 %v2416
    %2452 = vmatpush.msra.mxu0 %v2414
    %2453 = vmatpush.msra.mxu0 %v2412
    %2454 = vmatpush.msra.mxu0 %v2410
    %2455 = vmatpush.msra.mxu0 %v2408
    %2456 = vmatpush.msra.mxu0 %v2406
    %2457 = vmatpush.msra.mxu0 %v2404
    %2458 = vmatmul.f32.gmra.mxu0 %v2420
    %v2459 = vpop.f32.mrf.mxu0
    %v2460 = vadd.f32 0.0, %v2459
    %2461 = vdwg.mxu0
    %v2462 = vld [vmem:[#allocation2 + $0x10] sm:$0x30]
    %v2463 = vld [vmem:[#allocation2 + $0x8] sm:$0xc]
    %v2465 = vrot.slane %v2462, 4
    %v2467 = vadd.f32 %v2440, %v2465
    %v2469 = vrot.slane %v2463, 2
    %v2471 = vadd.f32 %v2460, %v2469
    %v2472 = vxor.u32 %v2467, 2147483648
    %v2473 = vmul.f32 %v2472, 1.442695
    %v2474 = vpow.pop %v2473
    %v2475 = vadd.f32 %v2474, 1.0
    %v2476 = vrcp.pop %v2475
    %v2477 = vmul.f32 %v2475, %v2476
    %v2478 = vsub.f32 1.0, %v2477
    %v2479 = vmul.f32 %v2476, %v2478
    %v2480 = vadd.f32 %v2476, %v2479
    %vm2481 = vweird.f32 %v2475
    %vm2482 = vweird.f32 %v2476
    %vm2483 = vmor %vm2481, %vm2482
    %v2484 = vsel %vm2483, %v2476, %v2480
    %v2485 = vand.u32 2147483647, %v2475
    %vm2486 = vcmp.eq.f32.partialorder %v2485, 8.507059e+37
    %v2487 = vand.u32 %v2475, 2147483648
    %v2488 = vor.u32 1.1754944e-38, %v2487
    %v2489 = vsel %vm2486, %v2488, %v2484
    %v2490 = vmul.f32 1.0, %v2489
    %v2491 = vtanh.pop %v2467
    %v2492 = vmul.f32 %v2490, %v2348
    %2494 = vrot.lane.b32.xlu0 %v2491, 64
    %v2495 = vpop.permute.xlu0 %2494
    %v2497 = vmul.f32 %v2490, %v2495
    %2499 = vrot.lane.b32.xlu0 %v2497, 32
    %v2500 = vpop.permute.xlu0 %2499
    %v2502 = vadd.f32 %v2492, %v2500
    %v2503 = vtanh.pop %v2502
    %2505 = vrot.lane.b32.xlu0 %v2503, 64
    %v2506 = vpop.permute.xlu0 %2505
    %v2508 = vmul.f32 %v2490, %v2506
    %v2509 = vxor.u32 %v2471, 2147483648
    %v2510 = vmul.f32 %v2509, 1.442695
    %v2511 = vpow.pop %v2510
    %v2512 = vadd.f32 %v2511, 1.0
    %v2513 = vrcp.pop %v2512
    %v2514 = vmul.f32 %v2512, %v2513
    %v2515 = vsub.f32 1.0, %v2514
    %v2516 = vmul.f32 %v2513, %v2515
    %v2517 = vadd.f32 %v2513, %v2516
    %vm2518 = vweird.f32 %v2512
    %vm2519 = vweird.f32 %v2513
    %vm2520 = vmor %vm2518, %vm2519
    %v2521 = vsel %vm2520, %v2513, %v2517
    %v2522 = vand.u32 2147483647, %v2512
    %vm2523 = vcmp.eq.f32.partialorder %v2522, 8.507059e+37
    %v2524 = vand.u32 %v2512, 2147483648
    %v2525 = vor.u32 1.1754944e-38, %v2524
    %v2526 = vsel %vm2523, %v2525, %v2521
    %v2527 = vmul.f32 1.0, %v2526
    %v2528 = vtanh.pop %v2471
    %v2529 = vmul.f32 %v2527, %v2385
    %2531 = vrot.lane.b32.xlu0 %v2528, 64
    %v2532 = vpop.permute.xlu0 %2531
    %v2534 = vmul.f32 %v2527, %v2532
    %2536 = vrot.lane.b32.xlu0 %v2534, 32
    %v2537 = vpop.permute.xlu0 %2536
    %v2539 = vadd.f32 %v2529, %v2537
    %v2540 = vtanh.pop %v2539
    %2542 = vrot.lane.b32.xlu0 %v2540, 64
    %v2543 = vpop.permute.xlu0 %2542
    %v2545 = vmul.f32 %v2527, %v2543
    %2547 = vrot.lane.b32.xlu0 %v2508, 32
    %v2548 = vpop.permute.xlu0 %2547
    %2550 = vst.msk [vmem:[#allocation15 + $0xc] sm:$0x3] %vm333, %v2548
    %2552 = vrot.lane.b32.xlu0 %v2545, 64
    %v2553 = vpop.permute.xlu0 %2552
    %2555 = vst.msk [vmem:[#allocation15 + $0x2] sm:$0x3] %vm339, %v2553
    %v2556 = vsel %vm341, %v2548, %v2553
    %v2557 = vld [vmem:[#allocation13] sm:$0xff]
    %v2558 = vld [vmem:[#allocation13 + $0x8] sm:$0xff]
    %v2559 = vld [vmem:[#allocation13 + $0x10] sm:$0xff]
    %v2560 = vld [vmem:[#allocation13 + $0x18] sm:$0xff]
    %v2561 = vld [vmem:[#allocation13 + $0x20] sm:$0xff]
    %v2562 = vld [vmem:[#allocation13 + $0x28] sm:$0xff]
    %v2563 = vld [vmem:[#allocation13 + $0x30] sm:$0xff]
    %v2564 = vld [vmem:[#allocation13 + $0x38] sm:$0xff]
    %v2565 = vld [vmem:[#allocation13 + $0x40] sm:$0xff]
    %v2566 = vld [vmem:[#allocation13 + $0x48] sm:$0xff]
    %v2567 = vld [vmem:[#allocation13 + $0x50] sm:$0xff]
    %v2568 = vld [vmem:[#allocation13 + $0x58] sm:$0xff]
    %v2569 = vld [vmem:[#allocation13 + $0x60] sm:$0xff]
    %v2570 = vld [vmem:[#allocation13 + $0x68] sm:$0xff]
    %v2571 = vld [vmem:[#allocation13 + $0x70] sm:$0xff]
    %v2572 = vld [vmem:[#allocation13 + $0x78] sm:$0xff]
    %v2574 = vsel %vm204, %v2556, 0
    %2576 = vmatpush.msra.mxu0 0.0
    %2577 = vmatpush.msra.mxu0 0.0
    %2578 = vmatpush.msra.mxu0 0.0
    %2579 = vmatpush.msra.mxu0 0.0
    %2580 = vmatpush.msra.mxu0 0.0
    %2581 = vmatpush.msra.mxu0 0.0
    %2582 = vmatpush.msra.mxu0 0.0
    %2583 = vmatpush.msra.mxu0 0.0
    %2584 = vmatpush.msra.mxu0 %v2571
    %2585 = vmatpush.msra.mxu0 %v2569
    %2586 = vmatpush.msra.mxu0 %v2567
    %2587 = vmatpush.msra.mxu0 %v2565
    %2588 = vmatpush.msra.mxu0 %v2563
    %2589 = vmatpush.msra.mxu0 %v2561
    %2590 = vmatpush.msra.mxu0 %v2559
    %2591 = vmatpush.msra.mxu0 %v2557
    %2592 = vmatmul.f32.gmra.mxu0 %v2574
    %v2593 = vpop.f32.mrf.mxu0
    %v2594 = vadd.f32 0.0, %v2593
    %2595 = vdwg.mxu0
    %2596 = vmatpush.msra.mxu0 0.0
    %2597 = vmatpush.msra.mxu0 0.0
    %2598 = vmatpush.msra.mxu0 0.0
    %2599 = vmatpush.msra.mxu0 0.0
    %2600 = vmatpush.msra.mxu0 0.0
    %2601 = vmatpush.msra.mxu0 0.0
    %2602 = vmatpush.msra.mxu0 0.0
    %2603 = vmatpush.msra.mxu0 0.0
    %2604 = vmatpush.msra.mxu0 %v2572
    %2605 = vmatpush.msra.mxu0 %v2570
    %2606 = vmatpush.msra.mxu0 %v2568
    %2607 = vmatpush.msra.mxu0 %v2566
    %2608 = vmatpush.msra.mxu0 %v2564
    %2609 = vmatpush.msra.mxu0 %v2562
    %2610 = vmatpush.msra.mxu0 %v2560
    %2611 = vmatpush.msra.mxu0 %v2558
    %2612 = vmatmul.f32.gmra.mxu0 %v2574
    %v2613 = vpop.f32.mrf.mxu0
    %v2614 = vadd.f32 0.0, %v2613
    %2615 = vdwg.mxu0
    %v2616 = vld [vmem:[#allocation2 + $0x10] sm:$0xc0]
    %v2617 = vld [vmem:[#allocation2 + $0x8] sm:$0x3]
    %v2619 = vrot.slane %v2616, 6
    %v2621 = vadd.f32 %v2594, %v2619
    %v2622 = vadd.f32 %v2614, %v2617
    %v2623 = vxor.u32 %v2621, 2147483648
    %v2624 = vmul.f32 %v2623, 1.442695
    %v2625 = vpow.pop %v2624
    %v2626 = vadd.f32 %v2625, 1.0
    %v2627 = vrcp.pop %v2626
    %v2628 = vmul.f32 %v2626, %v2627
    %v2629 = vsub.f32 1.0, %v2628
    %v2630 = vmul.f32 %v2627, %v2629
    %v2631 = vadd.f32 %v2627, %v2630
    %vm2632 = vweird.f32 %v2626
    %vm2633 = vweird.f32 %v2627
    %vm2634 = vmor %vm2632, %vm2633
    %v2635 = vsel %vm2634, %v2627, %v2631
    %v2636 = vand.u32 2147483647, %v2626
    %vm2637 = vcmp.eq.f32.partialorder %v2636, 8.507059e+37
    %v2638 = vand.u32 %v2626, 2147483648
    %v2639 = vor.u32 1.1754944e-38, %v2638
    %v2640 = vsel %vm2637, %v2639, %v2635
    %v2641 = vmul.f32 1.0, %v2640
    %v2642 = vtanh.pop %v2621
    %v2643 = vmul.f32 %v2641, %v2502
    %2645 = vrot.lane.b32.xlu0 %v2642, 64
    %v2646 = vpop.permute.xlu0 %2645
    %v2648 = vmul.f32 %v2641, %v2646
    %2650 = vrot.lane.b32.xlu0 %v2648, 32
    %v2651 = vpop.permute.xlu0 %2650
    %v2653 = vadd.f32 %v2643, %v2651
    %v2654 = vtanh.pop %v2653
    %2656 = vrot.lane.b32.xlu0 %v2654, 64
    %v2657 = vpop.permute.xlu0 %2656
    %v2659 = vmul.f32 %v2641, %v2657
    %v2660 = vxor.u32 %v2622, 2147483648
    %v2661 = vmul.f32 %v2660, 1.442695
    %v2662 = vpow.pop %v2661
    %v2663 = vadd.f32 %v2662, 1.0
    %v2664 = vrcp.pop %v2663
    %v2665 = vmul.f32 %v2663, %v2664
    %v2666 = vsub.f32 1.0, %v2665
    %v2667 = vmul.f32 %v2664, %v2666
    %v2668 = vadd.f32 %v2664, %v2667
    %vm2669 = vweird.f32 %v2663
    %vm2670 = vweird.f32 %v2664
    %vm2671 = vmor %vm2669, %vm2670
    %v2672 = vsel %vm2671, %v2664, %v2668
    %v2673 = vand.u32 2147483647, %v2663
    %vm2674 = vcmp.eq.f32.partialorder %v2673, 8.507059e+37
    %v2675 = vand.u32 %v2663, 2147483648
    %v2676 = vor.u32 1.1754944e-38, %v2675
    %v2677 = vsel %vm2674, %v2676, %v2672
    %v2678 = vmul.f32 1.0, %v2677
    %v2679 = vtanh.pop %v2622
    %v2680 = vmul.f32 %v2678, %v2539
    %2682 = vrot.lane.b32.xlu0 %v2679, 64
    %v2683 = vpop.permute.xlu0 %2682
    %v2685 = vmul.f32 %v2678, %v2683
    %2687 = vrot.lane.b32.xlu0 %v2685, 32
    %v2688 = vpop.permute.xlu0 %2687
    %v2690 = vadd.f32 %v2680, %v2688
    %v2691 = vtanh.pop %v2690
    %2693 = vrot.lane.b32.xlu0 %v2691, 64
    %v2694 = vpop.permute.xlu0 %2693
    %v2696 = vmul.f32 %v2678, %v2694
    %2698 = vrot.lane.b32.xlu0 %v2659, 32
    %v2699 = vpop.permute.xlu0 %2698
    %2701 = vst.msk [vmem:[#allocation15 + $0xe] sm:$0x3] %vm333, %v2699
    %2703 = vrot.lane.b32.xlu0 %v2696, 64
    %v2704 = vpop.permute.xlu0 %2703
    %2706 = vst.msk [vmem:[#allocation15] sm:$0x3] %vm339, %v2704
    // Predicated region
    $region54: #{birnn_forward.1} parent=1 // pred_check
      _
    $region55: #{birnn_forward.1} parent=1 // pred_check_branch
      %2708 = sbr.rel (0) target = $region57
    $region56: #{birnn_forward.1} parent=1 // pred_region
      %2710 = vsyncadd [#allocation6], 0
      %s2711 = sshll.u32 [#allocation15], 4
      %s2712 = int_to_ptr.vmem [resolvable:$true] %s2711
      %s2713 = sshll.u32 %s7, 4
      %s2714 = int_to_ptr.hbm [resolvable:$true] %s2713
      %2719 = dma.vmem_to_hbm [thread:$0]  %s2712, 256, %s2714, [#allocation6], 128, 128, 8
    $region57: #{birnn_forward.1} parent=1 // pred_fallthru
      _
    // Predicated region
    $region58: #{birnn_forward.1} parent=1 // pred_check
      _
    $region59: #{birnn_forward.1} parent=1 // pred_check_branch
      %2721 = sbr.rel (0) target = $region61
    $region60: #{birnn_forward.1} parent=1 // pred_region
      %2723 = dma.done [#allocation6], 256
    $region61: #{birnn_forward.1} parent=1 // pred_fallthru
      _
    %2724 = vsyncpa [#allocation5], 1
    %2725 = vsyncpa [#allocation8], 1
    %2726 = vsyncpa [#allocation11], 1
    %2727 = vsyncpa [#allocation14], 1
    %2728 = vsyncpa [#allocation6], 1

</llo_original>
